<compile_context>
chip_gen: v5e
topology: v5e:2x2
jax: 0.10.0
libtpu: 0.0.40
codegen_flags: <defaults>
</compile_context>

<pallas_src>
import jax
import jax.numpy as jnp
from jax import lax
from jax.experimental import pallas as pl
from jax.experimental.pallas import tpu as pltpu

HIDDEN = 128
STATE_DIM = 3 * HIDDEN
ACT_DIM = 4
N_LAYER = 3                 # DecisionTransformerConfig defaults
N_INNER = 4 * HIDDEN
MAX_EP_LEN = 2000
LN_EPS = 1e-5
BN_EPS = 1e-5
IMG_H, IMG_W = 96, 128

MM_DTYPE = jnp.bfloat16     # MXU operand dtype (v6e/v7x fast path); accumulation stays f32


def _round_up(x, m):
    return (x + m - 1) // m * m


def _ln(x, g, b):
    mu = jnp.mean(x, axis=-1, keepdims=True)
    var = jnp.mean(jnp.square(x - mu), axis=-1, keepdims=True)
    return (x - mu) * lax.rsqrt(var + LN_EPS) * g + b


def _dotf(a, b):
    # bf16 MXU operands, f32 accumulation.
    return jnp.dot(a.astype(MM_DTYPE), b.astype(MM_DTYPE), preferred_element_type=jnp.float32)


def _bcast(arr):
    nd = arr.ndim
    return pl.BlockSpec(arr.shape, lambda i, _nd=nd: (0,) * _nd)


def _row_spec(rb, width):
    return pl.BlockSpec((rb, width), lambda i: (i, 0))


# ----------------------------- Kernel 1: fused token embedding -----------------------------

def _embed_kernel(img_ref, small_ref, temb_ref,
                  img_w_ref, img_b_ref, w_small_ref, b_small_ref,
                  vel_s_ref, vel_t_ref, rot_s_ref, rot_t_ref,
                  stw_img_ref, stw_vel_ref, stw_rot_ref, st_b_ref,
                  ret_ref, st_ref, act_ref):
    d = HIDDEN
    temb = temb_ref[...]

    # image path: Resize(96,128) + encoder Linear + BatchNorm(eval) all folded into img_w/img_b.
    img_emb = _dotf(img_ref[...], img_w_ref[...]) + img_b_ref[...]

    # rtg / vel / rot / action projections: one block-diagonal matmul (each K padded to 8 lanes).
    sm = _dotf(small_ref[...], w_small_ref[...]) + b_small_ref[...]        # (rows, 4*128)
    ret_emb = sm[:, 0:d]
    vel_emb = jnp.maximum(sm[:, d:2 * d], 0.0) * vel_s_ref[...] + vel_t_ref[...]
    rot_emb = jnp.maximum(sm[:, 2 * d:3 * d], 0.0) * rot_s_ref[...] + rot_t_ref[...]
    act_emb = sm[:, 3 * d:4 * d]

    # state projection Linear(384,128), split per modality (avoids a lane concat in-kernel).
    st_emb = (_dotf(img_emb, stw_img_ref[...]) + _dotf(vel_emb, stw_vel_ref[...])
              + _dotf(rot_emb, stw_rot_ref[...]) + st_b_ref[...])

    ret_ref[...] = (ret_emb + temb).astype(ret_ref.dtype)
    st_ref[...] = (st_emb + temb).astype(st_ref.dtype)
    act_ref[...] = (act_emb + temb).astype(act_ref.dtype)


_EMBED_WEIGHT_KEYS = ('img_w', 'img_b', 'w_small', 'b_small',
                      'vel_bn_scale', 'vel_bn_shift', 'rot_bn_scale', 'rot_bn_shift',
                      'stw_img', 'stw_vel', 'stw_rot', 'st_b')


def embed_tokens(params, img_flat, small_in, t_emb):
    n, raw_feat = img_flat.shape
    rb = min(_round_up(n, 8), 256)
    n_pad = _round_up(n, rb)
    if n_pad != n:
        pad = ((0, n_pad - n), (0, 0))
        img_flat = jnp.pad(img_flat, pad)
        small_in = jnp.pad(small_in, pad)
        t_emb = jnp.pad(t_emb, pad)

    weights = [params[k] for k in _EMBED_WEIGHT_KEYS]
    out_sds = jax.ShapeDtypeStruct((n_pad, HIDDEN), jnp.float32)
    ret_tok, st_tok, act_tok = pl.pallas_call(
        _embed_kernel,
        grid=(n_pad // rb,),
        in_specs=[_row_spec(rb, raw_feat), _row_spec(rb, small_in.shape[1]),
                  _row_spec(rb, HIDDEN)] + [_bcast(w) for w in weights],
        out_specs=[_row_spec(rb, HIDDEN)] * 3,
        out_shape=[out_sds] * 3,
        compiler_params=pltpu.CompilerParams(dimension_semantics=("parallel",)),
    )(img_flat, small_in, t_emb, *weights)
    return ret_tok[:n], st_tok[:n], act_tok[:n]


# --------------------- Kernel 2: fused embed_ln + 3 GPT2 blocks + ln_f + head ---------------------

def _transformer_kernel(tok_ref, eln_g_ref, eln_b_ref,
                        ln1_g_ref, ln1_b_ref, w_qkv_ref, b_qkv_ref,
                        w_proj_ref, b_proj_ref, ln2_g_ref, ln2_b_ref,
                        w_fc_ref, b_fc_ref, w_out_ref, b_out_ref,
                        lnf_g_ref, lnf_b_ref, head_w_ref, head_b_ref,
                        o_ref):
    bb, lp, d = tok_ref.shape                     # lp is a multiple of 8 (padded by the wrapper)
    scale = 1.0 / (d ** 0.5)                      # GPT2 scale_attn_weights, head_dim = 128

    # embed_ln on the interleaved (return, state, action) tokens; wpe(position_ids=0) is already
    # folded into eln_b by the wrapper.
    x = tok_ref[...].reshape(bb * lp, d)
    x = _ln(x, eln_g_ref[...], eln_b_ref[...])

    # causal mask (attention_mask is all ones -> only causal matters; padded cols are never
    # attended by real rows because col <= row keeps real rows within the real prefix).
    row = lax.broadcasted_iota(jnp.int32, (bb, lp, lp), 1)
    col = lax.broadcasted_iota(jnp.int32, (bb, lp, lp), 2)
    causal = col <= row
    neg = jnp.finfo(jnp.float32).min

    for li in range(N_LAYER):                     # static unroll, weights stay VMEM-resident
        # --- single-head causal self-attention (pre-LN) ---
        h = _ln(x, ln1_g_ref[li], ln1_b_ref[li])
        qkv = _dotf(h, w_qkv_ref[li]) + b_qkv_ref[li]          # (bb*lp, 3d), M = bb*lp
        qkv = qkv.reshape(bb, lp, 3 * d)
        q, k, v = qkv[:, :, :d], qkv[:, :, d:2 * d], qkv[:, :, 2 * d:]
        s = jnp.einsum('bqd,bkd->bqk', q.astype(MM_DTYPE), k.astype(MM_DTYPE),
                       preferred_element_type=jnp.float32) * scale
        s = jnp.where(causal, s, neg)
        s = s - jnp.max(s, axis=-1, keepdims=True)
        p = jnp.exp(s)
        # EUP approximate reciprocal for the softmax normalizer (frees VALU; numerics ~bf16-level)
        p = p * pl.reciprocal(jnp.sum(p, axis=-1, keepdims=True), approx=True)
        attn = jnp.einsum('bqk,bkd->bqd', p.astype(MM_DTYPE), v.astype(MM_DTYPE),
                          preferred_element_type=jnp.float32)
        attn = attn.reshape(bb * lp, d)
        x = x + _dotf(attn, w_proj_ref[li]) + b_proj_ref[li]

        # --- MLP (activation_function = "relu") ---
        h = _ln(x, ln2_g_ref[li], ln2_b_ref[li])
        h = jnp.maximum(_dotf(h, w_fc_ref[li]) + b_fc_ref[li], 0.0)
        x = x + _dotf(h, w_out_ref[li]) + b_out_ref[li]

    # ln_f -> zero-padded action head (lanes 0..3 valid) -> per-channel tanh/sigmoid/id/id.
    h = _ln(x, lnf_g_ref[...], lnf_b_ref[...])
    a = _dotf(h, head_w_ref[...]) + head_b_ref[...]
    ch = lax.broadcasted_iota(jnp.int32, a.shape, 1)
    # exact sigmoid for ch1 so the [0, 1] range is guaranteed (approx recip could overshoot 1.0)
    a = jnp.where(ch == 0, jnp.tanh(a),
                  jnp.where(ch == 1, 1.0 / (1.0 + jnp.exp(-a)), a))
    o_ref[...] = a.reshape(bb, lp, d).astype(o_ref.dtype)


_TRANSFORMER_LAYER_KEYS = ('ln1_g', 'ln1_b', 'w_qkv', 'b_qkv', 'w_proj', 'b_proj',
                           'ln2_g', 'ln2_b', 'w_fc', 'b_fc', 'w_out', 'b_out',
                           'lnf_g', 'lnf_b', 'head_w', 'head_b')


def transformer_head(params, tokens):
    b, lp, d = tokens.shape
    bb = max(1, min(b, max(1, 256 // lp)))        # fold batch into matmul M (target >= 256 rows)
    b_pad = _round_up(b, bb)
    if b_pad != b:
        tokens = jnp.pad(tokens, ((0, b_pad - b), (0, 0), (0, 0)))

    # fold wpe(position_ids=0) into the embed_ln bias (saves one broadcast add per row in-kernel)
    eln_b_eff = params['eln_b'] + params['wpe0']
    weights = [params['eln_g'], eln_b_eff] + [params[k] for k in _TRANSFORMER_LAYER_KEYS]

    tok_spec = pl.BlockSpec((bb, lp, d), lambda i: (i, 0, 0))
    out = pl.pallas_call(
        _transformer_kernel,
        grid=(b_pad // bb,),
        in_specs=[tok_spec] + [_bcast(w) for w in weights],
        out_specs=tok_spec,
        out_shape=jax.ShapeDtypeStruct((b_pad, lp, d), jnp.float32),
        compiler_params=pltpu.CompilerParams(dimension_semantics=("parallel",)),
    )(tokens, *weights)
    return out[:b]


# ----------------------------- parameters -----------------------------

def init_params(key, raw_img_shape=(1, 24, 32)):
    ks = iter(jax.random.split(key, 64))

    def dense(fan_in, fan_out, std=0.02):
        return std * jax.random.normal(next(ks), (fan_in, fan_out), jnp.float32)

    def bn_fold():
        # BatchNorm1d eval-mode at init: gamma=1, beta=0, running_mean=0, running_var=1
        gamma = jnp.ones((HIDDEN,), jnp.float32)
        beta = jnp.zeros((HIDDEN,), jnp.float32)
        mean = jnp.zeros((HIDDEN,), jnp.float32)
        var = jnp.ones((HIDDEN,), jnp.float32)
        scale = gamma * lax.rsqrt(var + BN_EPS)
        shift = beta - mean * scale
        return scale, shift

    p = {}
    C, rH, rW = raw_img_shape
    raw_feat = C * rH * rW
    enc_in = C * IMG_H * IMG_W

    # ---- image path: fold bilinear Resize((96,128)) and BatchNorm(eval) into the encoder weight ----
    img_w = dense(enc_in, HIDDEN)                       # synthetic encoder (see TODO at top)
    img_b = jnp.zeros((HIDDEN,), jnp.float32)
    img_scale, img_shift = bn_fold()
    eye = jnp.eye(raw_feat, dtype=jnp.float32).reshape(raw_feat, C, rH, rW)
    resize_mat = jax.image.resize(eye, (raw_feat, C, IMG_H, IMG_W),
                                  method='bilinear').reshape(raw_feat, enc_in)
    w_eff = resize_mat @ img_w                          # exact: resize and linear are both linear
    p['img_w'] = (w_eff * img_scale[None, :]).astype(MM_DTYPE)   # BN folded (no activation between)
    p['img_b'] = (img_b * img_scale + img_shift).reshape(1, HIDDEN)

    # ---- rtg / vel / rot / action projections -> one block-diagonal (32, 512) matmul ----
    ret_w, ret_b = dense(1, HIDDEN), jnp.zeros((HIDDEN,), jnp.float32)
    vel_w, vel_b = dense(3, HIDDEN), jnp.zeros((HIDDEN,), jnp.float32)
    rot_w, rot_b = dense(4, HIDDEN), jnp.zeros((HIDDEN,), jnp.float32)
    act_w, act_b = dense(ACT_DIM, HIDDEN), jnp.zeros((HIDDEN,), jnp.float32)
    w_small = jnp.zeros((32, 4 * HIDDEN), jnp.float32)
    w_small = w_small.at[0:1, 0:HIDDEN].set(ret_w)
    w_small = w_small.at[8:8 + 3, HIDDEN:2 * HIDDEN].set(vel_w)
    w_small = w_small.at[16:16 + 4, 2 * HIDDEN:3 * HIDDEN].set(rot_w)
    w_small = w_small.at[24:24 + ACT_DIM, 3 * HIDDEN:4 * HIDDEN].set(act_w)
    p['w_small'] = w_small.astype(MM_DTYPE)
    p['b_small'] = jnp.concatenate([ret_b, vel_b, rot_b, act_b]).reshape(1, 4 * HIDDEN)
    p['vel_bn_scale'], p['vel_bn_shift'] = (a.reshape(1, HIDDEN) for a in bn_fold())
    p['rot_bn_scale'], p['rot_bn_shift'] = (a.reshape(1, HIDDEN) for a in bn_fold())

    # ---- state projection Linear(384,128), split by modality ----
    st_w = dense(STATE_DIM, HIDDEN)
    p['stw_img'] = st_w[:HIDDEN].astype(MM_DTYPE)
    p['stw_vel'] = st_w[HIDDEN:2 * HIDDEN].astype(MM_DTYPE)
    p['stw_rot'] = st_w[2 * HIDDEN:].astype(MM_DTYPE)
    p['st_b'] = jnp.zeros((1, HIDDEN), jnp.float32)

    p['time_table'] = 0.02 * jax.random.normal(next(ks), (MAX_EP_LEN, HIDDEN), jnp.float32)
    p['wpe0'] = 0.02 * jax.random.normal(next(ks), (1, HIDDEN), jnp.float32)
    p['eln_g'] = jnp.ones((1, HIDDEN), jnp.float32)
    p['eln_b'] = jnp.zeros((1, HIDDEN), jnp.float32)

    # ---- GPT2 layers, stacked on a leading layer axis (VMEM-resident across the in-kernel loop) ----
    def stackf(make):
        return jnp.stack([make() for _ in range(N_LAYER)])
    p['ln1_g'] = jnp.ones((N_LAYER, 1, HIDDEN), jnp.float32)
    p['ln1_b'] = jnp.zeros((N_LAYER, 1, HIDDEN), jnp.float32)
    p['w_qkv'] = stackf(lambda: dense(HIDDEN, 3 * HIDDEN)).astype(MM_DTYPE)
    p['b_qkv'] = jnp.zeros((N_LAYER, 1, 3 * HIDDEN), jnp.float32)
    p['w_proj'] = stackf(lambda: dense(HIDDEN, HIDDEN)).astype(MM_DTYPE)
    p['b_proj'] = jnp.zeros((N_LAYER, 1, HIDDEN), jnp.float32)
    p['ln2_g'] = jnp.ones((N_LAYER, 1, HIDDEN), jnp.float32)
    p['ln2_b'] = jnp.zeros((N_LAYER, 1, HIDDEN), jnp.float32)
    p['w_fc'] = stackf(lambda: dense(HIDDEN, N_INNER)).astype(MM_DTYPE)
    p['b_fc'] = jnp.zeros((N_LAYER, 1, N_INNER), jnp.float32)
    p['w_out'] = stackf(lambda: dense(N_INNER, HIDDEN)).astype(MM_DTYPE)
    p['b_out'] = jnp.zeros((N_LAYER, 1, HIDDEN), jnp.float32)

    p['lnf_g'] = jnp.ones((1, HIDDEN), jnp.float32)
    p['lnf_b'] = jnp.zeros((1, HIDDEN), jnp.float32)
    head_w = dense(HIDDEN, ACT_DIM)
    p['head_w'] = jnp.zeros((HIDDEN, HIDDEN), jnp.float32).at[:, :ACT_DIM].set(head_w).astype(MM_DTYPE)
    p['head_b'] = jnp.zeros((1, HIDDEN), jnp.float32)     # lanes 4..127 are padding
    return p


# ----------------------------- forward -----------------------------

def agent_transformer_forward(params, timestep, image, velocity, rotation,
                              actions, reward, reward_to_go):
    del reward   # DecisionTransformerModel does not consume the rewards input
    B, T = timestep.shape
    N = B * T
    L = 3 * T
    Lp = _round_up(L, 8)

    # flatten (B, T, ...) -> (B*T, ...) exactly as in the PyTorch module (row-major NCHW flatten;
    # the Resize((96,128)) is already folded into params['img_w']).
    img_flat = image.reshape(N, -1).astype(jnp.float32)
    assert img_flat.shape[1] == params['img_w'].shape[0], "image shape does not match folded encoder"
    vel = velocity.reshape(N, -1).astype(jnp.float32)
    rot = rotation.reshape(N, -1).astype(jnp.float32)
    act = actions.reshape(N, -1).astype(jnp.float32)
    rtg = reward_to_go.reshape(N, -1).astype(jnp.float32)

    def pad8(a):
        return jnp.pad(a, ((0, 0), (0, 8 - a.shape[1])))
    small_in = jnp.concatenate([pad8(rtg), pad8(vel), pad8(rot), pad8(act)], axis=1)  # (N, 32)

    # timestep embedding lookup (plain-JAX gather of the (2000,128) table)
    t_emb = jnp.take(params['time_table'], timestep.astype(jnp.int32).reshape(-1), axis=0)

    # fused embedding kernel -> lane-dense (N, 128) return / state / action tokens
    ret_tok, st_tok, act_tok = embed_tokens(params, img_flat, small_in, t_emb)

    # interleave (return, state, action) along the sequence axis and pad to a multiple of 8
    tokens = jnp.stack([ret_tok.reshape(B, T, HIDDEN),
                        st_tok.reshape(B, T, HIDDEN),
                        act_tok.reshape(B, T, HIDDEN)], axis=2).reshape(B, L, HIDDEN)
    if Lp != L:
        tokens = jnp.pad(tokens, ((0, 0), (0, Lp - L), (0, 0)))

    # fused embed_ln(+wpe) + 3 GPT2 blocks + ln_f + action head
    out = transformer_head(params, tokens)                 # (B, Lp, 128) lane-dense head slab

    preds = out[:, 1:L:3, :ACT_DIM]                        # state-token positions, 4 action lanes
    steer = preds[..., 0]   # tanh applied in-kernel
    acc = preds[..., 1]     # sigmoid applied in-kernel
    drift = preds[..., 2]
    brake = preds[..., 3]
    return steer, acc, drift, brake


# ----------------------------- demo -----------------------------

if __name__ == "__main__":
    key = jax.random.PRNGKey(0)
    kp, k0, k1, k2, k3, k4, k5 = jax.random.split(key, 7)

    B, T = 2, 4
    raw_img_shape = (1, 24, 32)
    params = init_params(kp, raw_img_shape=raw_img_shape)

    timestep = (jnp.arange(B * T, dtype=jnp.int32).reshape(B, T)) % MAX_EP_LEN
    image = jax.random.uniform(k0, (B, T) + raw_img_shape, jnp.float32)
    velocity = jax.random.normal(k1, (B, T, 3), jnp.float32)
    rotation = jax.random.normal(k2, (B, T, 4), jnp.float32)
    actions = jax.random.normal(k3, (B, T, ACT_DIM), jnp.float32)
    reward = jax.random.normal(k4, (B, T, 1), jnp.float32)
    reward_to_go = jax.random.normal(k5, (B, T, 1), jnp.float32)

    fwd = jax.jit(agent_transformer_forward)
    steer, acc, drift, brake = fwd(params, timestep, image, velocity, rotation,
                                   actions, reward, reward_to_go)
    jax.block_until_ready((steer, acc, drift, brake))

    assert steer.shape == (B, T) and acc.shape == (B, T)
    assert drift.shape == (B, T) and brake.shape == (B, T)
    assert bool(jnp.all(jnp.isfinite(jnp.stack([steer, acc, drift, brake]))))
    assert bool(jnp.all(jnp.abs(steer) <= 1.0)) and bool(jnp.all((acc >= 0.0) & (acc <= 1.0)))
    print("KERNEL_OK")
</pallas_src>

<mosaic_0001>
module attributes {stable_mosaic.version = 11 : i64} {
  func.func @_embed_kernel(%arg0: i32, %arg1: memref<8x768xf32, #tpu.memory_space<vmem>>, %arg2: memref<8x32xf32, #tpu.memory_space<vmem>>, %arg3: memref<8x128xf32, #tpu.memory_space<vmem>>, %arg4: memref<768x128xbf16, #tpu.memory_space<vmem>>, %arg5: memref<1x128xf32, #tpu.memory_space<vmem>>, %arg6: memref<32x512xbf16, #tpu.memory_space<vmem>>, %arg7: memref<1x512xf32, #tpu.memory_space<vmem>>, %arg8: memref<1x128xf32, #tpu.memory_space<vmem>>, %arg9: memref<1x128xf32, #tpu.memory_space<vmem>>, %arg10: memref<1x128xf32, #tpu.memory_space<vmem>>, %arg11: memref<1x128xf32, #tpu.memory_space<vmem>>, %arg12: memref<128x128xbf16, #tpu.memory_space<vmem>>, %arg13: memref<128x128xbf16, #tpu.memory_space<vmem>>, %arg14: memref<128x128xbf16, #tpu.memory_space<vmem>>, %arg15: memref<1x128xf32, #tpu.memory_space<vmem>>, %arg16: memref<8x128xf32, #tpu.memory_space<vmem>>, %arg17: memref<8x128xf32, #tpu.memory_space<vmem>>, %arg18: memref<8x128xf32, #tpu.memory_space<vmem>>) attributes {dimension_semantics = [#tpu.dimension_semantics<parallel>], iteration_bounds = array<i64: 1>, scalar_prefetch = 0 : i64, scratch_operands = 0 : i64, tpu.core_type = #tpu.core_type<tc>, window_params = [{transform_indices = @transform_0, window_bounds = array<i64: 8, 768>}, {transform_indices = @transform_1, window_bounds = array<i64: 8, 32>}, {transform_indices = @transform_2, window_bounds = array<i64: 8, 128>}, {pipeline_mode = #tpu.pipeline_mode<synchronous>, transform_indices = @transform_3, window_bounds = array<i64: 768, 128>}, {pipeline_mode = #tpu.pipeline_mode<synchronous>, transform_indices = @transform_4, window_bounds = array<i64: 1, 128>}, {pipeline_mode = #tpu.pipeline_mode<synchronous>, transform_indices = @transform_5, window_bounds = array<i64: 32, 512>}, {pipeline_mode = #tpu.pipeline_mode<synchronous>, transform_indices = @transform_6, window_bounds = array<i64: 1, 512>}, {pipeline_mode = #tpu.pipeline_mode<synchronous>, transform_indices = @transform_7, window_bounds = array<i64: 1, 128>}, {pipeline_mode = #tpu.pipeline_mode<synchronous>, transform_indices = @transform_8, window_bounds = array<i64: 1, 128>}, {pipeline_mode = #tpu.pipeline_mode<synchronous>, transform_indices = @transform_9, window_bounds = array<i64: 1, 128>}, {pipeline_mode = #tpu.pipeline_mode<synchronous>, transform_indices = @transform_10, window_bounds = array<i64: 1, 128>}, {pipeline_mode = #tpu.pipeline_mode<synchronous>, transform_indices = @transform_11, window_bounds = array<i64: 128, 128>}, {pipeline_mode = #tpu.pipeline_mode<synchronous>, transform_indices = @transform_12, window_bounds = array<i64: 128, 128>}, {pipeline_mode = #tpu.pipeline_mode<synchronous>, transform_indices = @transform_13, window_bounds = array<i64: 128, 128>}, {pipeline_mode = #tpu.pipeline_mode<synchronous>, transform_indices = @transform_14, window_bounds = array<i64: 1, 128>}, {transform_indices = @transform_15, window_bounds = array<i64: 8, 128>}, {transform_indices = @transform_16, window_bounds = array<i64: 8, 128>}, {transform_indices = @transform_17, window_bounds = array<i64: 8, 128>}]} {
    %c0 = arith.constant 0 : index
    %c0_0 = arith.constant 0 : index
    %0 = vector.load %arg3[%c0, %c0_0] : memref<8x128xf32, #tpu.memory_space<vmem>>, vector<8x128xf32>
    %c0_1 = arith.constant 0 : index
    %c0_2 = arith.constant 0 : index
    %1 = vector.load %arg1[%c0_1, %c0_2] : memref<8x768xf32, #tpu.memory_space<vmem>>, vector<8x768xf32>
    %c0_3 = arith.constant 0 : index
    %c0_4 = arith.constant 0 : index
    %2 = vector.load %arg4[%c0_3, %c0_4] : memref<768x128xbf16, #tpu.memory_space<vmem>>, vector<768x128xbf16>
    %3 = arith.truncf %1 : vector<8x768xf32> to vector<8x768xbf16>
    %cst = arith.constant dense<0.000000e+00> : vector<8x128xf32>
    %4 = tpu.matmul %3, %2, %cst {dimension_numbers = #tpu.dot_dimension_numbers<[1], [0], [0], [1], [0, 0, 1, 1], [], []>} : vector<8x768xbf16>, vector<768x128xbf16>, vector<8x128xf32> -> vector<8x128xf32>
    %c0_5 = arith.constant 0 : index
    %c0_6 = arith.constant 0 : index
    %5 = vector.load %arg5[%c0_5, %c0_6] : memref<1x128xf32, #tpu.memory_space<vmem>>, vector<1x128xf32>
    %6 = vector.broadcast %5 : vector<1x128xf32> to vector<8x128xf32>
    %7 = arith.addf %4, %6 : vector<8x128xf32>
    %c0_7 = arith.constant 0 : index
    %c0_8 = arith.constant 0 : index
    %8 = vector.load %arg2[%c0_7, %c0_8] : memref<8x32xf32, #tpu.memory_space<vmem>>, vector<8x32xf32>
    %c0_9 = arith.constant 0 : index
    %c0_10 = arith.constant 0 : index
    %9 = vector.load %arg6[%c0_9, %c0_10] : memref<32x512xbf16, #tpu.memory_space<vmem>>, vector<32x512xbf16>
    %10 = arith.truncf %8 : vector<8x32xf32> to vector<8x32xbf16>
    %cst_11 = arith.constant dense<0.000000e+00> : vector<8x512xf32>
    %11 = tpu.matmul %10, %9, %cst_11 {dimension_numbers = #tpu.dot_dimension_numbers<[1], [0], [0], [1], [0, 0, 1, 1], [], []>} : vector<8x32xbf16>, vector<32x512xbf16>, vector<8x512xf32> -> vector<8x512xf32>
    %c0_12 = arith.constant 0 : index
    %c0_13 = arith.constant 0 : index
    %12 = vector.load %arg7[%c0_12, %c0_13] : memref<1x512xf32, #tpu.memory_space<vmem>>, vector<1x512xf32>
    %13 = vector.broadcast %12 : vector<1x512xf32> to vector<8x512xf32>
    %14 = arith.addf %11, %13 : vector<8x512xf32>
    %15 = vector.extract_strided_slice %14 {offsets = [0, 0], sizes = [8, 128], strides = [1, 1]} : vector<8x512xf32> to vector<8x128xf32>
    %16 = vector.extract_strided_slice %14 {offsets = [0, 128], sizes = [8, 128], strides = [1, 1]} : vector<8x512xf32> to vector<8x128xf32>
    %cst_14 = arith.constant 0.000000e+00 : f32
    %17 = vector.broadcast %cst_14 : f32 to vector<8x128xf32>
    %18 = arith.maximumf %16, %17 : vector<8x128xf32>
    %c0_15 = arith.constant 0 : index
    %c0_16 = arith.constant 0 : index
    %19 = vector.load %arg8[%c0_15, %c0_16] : memref<1x128xf32, #tpu.memory_space<vmem>>, vector<1x128xf32>
    %20 = vector.broadcast %19 : vector<1x128xf32> to vector<8x128xf32>
    %21 = arith.mulf %18, %20 : vector<8x128xf32>
    %c0_17 = arith.constant 0 : index
    %c0_18 = arith.constant 0 : index
    %22 = vector.load %arg9[%c0_17, %c0_18] : memref<1x128xf32, #tpu.memory_space<vmem>>, vector<1x128xf32>
    %23 = vector.broadcast %22 : vector<1x128xf32> to vector<8x128xf32>
    %24 = arith.addf %21, %23 : vector<8x128xf32>
    %25 = vector.extract_strided_slice %14 {offsets = [0, 256], sizes = [8, 128], strides = [1, 1]} : vector<8x512xf32> to vector<8x128xf32>
    %cst_19 = arith.constant 0.000000e+00 : f32
    %26 = vector.broadcast %cst_19 : f32 to vector<8x128xf32>
    %27 = arith.maximumf %25, %26 : vector<8x128xf32>
    %c0_20 = arith.constant 0 : index
    %c0_21 = arith.constant 0 : index
    %28 = vector.load %arg10[%c0_20, %c0_21] : memref<1x128xf32, #tpu.memory_space<vmem>>, vector<1x128xf32>
    %29 = vector.broadcast %28 : vector<1x128xf32> to vector<8x128xf32>
    %30 = arith.mulf %27, %29 : vector<8x128xf32>
    %c0_22 = arith.constant 0 : index
    %c0_23 = arith.constant 0 : index
    %31 = vector.load %arg11[%c0_22, %c0_23] : memref<1x128xf32, #tpu.memory_space<vmem>>, vector<1x128xf32>
    %32 = vector.broadcast %31 : vector<1x128xf32> to vector<8x128xf32>
    %33 = arith.addf %30, %32 : vector<8x128xf32>
    %34 = vector.extract_strided_slice %14 {offsets = [0, 384], sizes = [8, 128], strides = [1, 1]} : vector<8x512xf32> to vector<8x128xf32>
    %c0_24 = arith.constant 0 : index
    %c0_25 = arith.constant 0 : index
    %35 = vector.load %arg12[%c0_24, %c0_25] : memref<128x128xbf16, #tpu.memory_space<vmem>>, vector<128x128xbf16>
    %36 = arith.truncf %7 : vector<8x128xf32> to vector<8x128xbf16>
    %cst_26 = arith.constant dense<0.000000e+00> : vector<8x128xf32>
    %37 = tpu.matmul %36, %35, %cst_26 {dimension_numbers = #tpu.dot_dimension_numbers<[1], [0], [0], [1], [0, 0, 1, 1], [], []>} : vector<8x128xbf16>, vector<128x128xbf16>, vector<8x128xf32> -> vector<8x128xf32>
    %c0_27 = arith.constant 0 : index
    %c0_28 = arith.constant 0 : index
    %38 = vector.load %arg13[%c0_27, %c0_28] : memref<128x128xbf16, #tpu.memory_space<vmem>>, vector<128x128xbf16>
    %39 = arith.truncf %24 : vector<8x128xf32> to vector<8x128xbf16>
    %cst_29 = arith.constant dense<0.000000e+00> : vector<8x128xf32>
    %40 = tpu.matmul %39, %38, %cst_29 {dimension_numbers = #tpu.dot_dimension_numbers<[1], [0], [0], [1], [0, 0, 1, 1], [], []>} : vector<8x128xbf16>, vector<128x128xbf16>, vector<8x128xf32> -> vector<8x128xf32>
    %41 = arith.addf %37, %40 : vector<8x128xf32>
    %c0_30 = arith.constant 0 : index
    %c0_31 = arith.constant 0 : index
    %42 = vector.load %arg14[%c0_30, %c0_31] : memref<128x128xbf16, #tpu.memory_space<vmem>>, vector<128x128xbf16>
    %43 = arith.truncf %33 : vector<8x128xf32> to vector<8x128xbf16>
    %cst_32 = arith.constant dense<0.000000e+00> : vector<8x128xf32>
    %44 = tpu.matmul %43, %42, %cst_32 {dimension_numbers = #tpu.dot_dimension_numbers<[1], [0], [0], [1], [0, 0, 1, 1], [], []>} : vector<8x128xbf16>, vector<128x128xbf16>, vector<8x128xf32> -> vector<8x128xf32>
    %45 = arith.addf %41, %44 : vector<8x128xf32>
    %c0_33 = arith.constant 0 : index
    %c0_34 = arith.constant 0 : index
    %46 = vector.load %arg15[%c0_33, %c0_34] : memref<1x128xf32, #tpu.memory_space<vmem>>, vector<1x128xf32>
    %47 = vector.broadcast %46 : vector<1x128xf32> to vector<8x128xf32>
    %48 = arith.addf %45, %47 : vector<8x128xf32>
    %49 = arith.addf %15, %0 : vector<8x128xf32>
    %c0_35 = arith.constant 0 : index
    %c0_36 = arith.constant 0 : index
    %50 = vector.load %arg16[%c0_35, %c0_36] : memref<8x128xf32, #tpu.memory_space<vmem>>, vector<8x128xf32>
    tpu.vector_store %arg16[%c0_35, %c0_36], %49 {strides = array<i32>} : memref<8x128xf32, #tpu.memory_space<vmem>>, vector<8x128xf32>,
    %51 = arith.addf %48, %0 : vector<8x128xf32>
    %c0_37 = arith.constant 0 : index
    %c0_38 = arith.constant 0 : index
    %52 = vector.load %arg17[%c0_37, %c0_38] : memref<8x128xf32, #tpu.memory_space<vmem>>, vector<8x128xf32>
    tpu.vector_store %arg17[%c0_37, %c0_38], %51 {strides = array<i32>} : memref<8x128xf32, #tpu.memory_space<vmem>>, vector<8x128xf32>,
    %53 = arith.addf %34, %0 : vector<8x128xf32>
    %c0_39 = arith.constant 0 : index
    %c0_40 = arith.constant 0 : index
    %54 = vector.load %arg18[%c0_39, %c0_40] : memref<8x128xf32, #tpu.memory_space<vmem>>, vector<8x128xf32>
    tpu.vector_store %arg18[%c0_39, %c0_40], %53 {strides = array<i32>} : memref<8x128xf32, #tpu.memory_space<vmem>>, vector<8x128xf32>,
    return
  }
  func.func @transform_0(%arg0: i32) -> (i32, i32) {
    %c0_i32 = arith.constant 0 : i32
    %c0_i32_0 = arith.constant 0 : i32
    return %arg0, %c0_i32 : i32, i32
  }
  func.func @transform_1(%arg0: i32) -> (i32, i32) {
    %c0_i32 = arith.constant 0 : i32
    %c0_i32_0 = arith.constant 0 : i32
    return %arg0, %c0_i32 : i32, i32
  }
  func.func @transform_2(%arg0: i32) -> (i32, i32) {
    %c0_i32 = arith.constant 0 : i32
    %c0_i32_0 = arith.constant 0 : i32
    return %arg0, %c0_i32 : i32, i32
  }
  func.func @transform_3(%arg0: i32) -> (i32, i32) {
    %c0_i32 = arith.constant 0 : i32
    %c0_i32_0 = arith.constant 0 : i32
    %c0_i32_1 = arith.constant 0 : i32
    return %c0_i32, %c0_i32_0 : i32, i32
  }
  func.func @transform_4(%arg0: i32) -> (i32, i32) {
    %c0_i32 = arith.constant 0 : i32
    %c0_i32_0 = arith.constant 0 : i32
    %c0_i32_1 = arith.constant 0 : i32
    return %c0_i32, %c0_i32_0 : i32, i32
  }
  func.func @transform_5(%arg0: i32) -> (i32, i32) {
    %c0_i32 = arith.constant 0 : i32
    %c0_i32_0 = arith.constant 0 : i32
    %c0_i32_1 = arith.constant 0 : i32
    return %c0_i32, %c0_i32_0 : i32, i32
  }
  func.func @transform_6(%arg0: i32) -> (i32, i32) {
    %c0_i32 = arith.constant 0 : i32
    %c0_i32_0 = arith.constant 0 : i32
    %c0_i32_1 = arith.constant 0 : i32
    return %c0_i32, %c0_i32_0 : i32, i32
  }
  func.func @transform_7(%arg0: i32) -> (i32, i32) {
    %c0_i32 = arith.constant 0 : i32
    %c0_i32_0 = arith.constant 0 : i32
    %c0_i32_1 = arith.constant 0 : i32
    return %c0_i32, %c0_i32_0 : i32, i32
  }
  func.func @transform_8(%arg0: i32) -> (i32, i32) {
    %c0_i32 = arith.constant 0 : i32
    %c0_i32_0 = arith.constant 0 : i32
    %c0_i32_1 = arith.constant 0 : i32
    return %c0_i32, %c0_i32_0 : i32, i32
  }
  func.func @transform_9(%arg0: i32) -> (i32, i32) {
    %c0_i32 = arith.constant 0 : i32
    %c0_i32_0 = arith.constant 0 : i32
    %c0_i32_1 = arith.constant 0 : i32
    return %c0_i32, %c0_i32_0 : i32, i32
  }
  func.func @transform_10(%arg0: i32) -> (i32, i32) {
    %c0_i32 = arith.constant 0 : i32
    %c0_i32_0 = arith.constant 0 : i32
    %c0_i32_1 = arith.constant 0 : i32
    return %c0_i32, %c0_i32_0 : i32, i32
  }
  func.func @transform_11(%arg0: i32) -> (i32, i32) {
    %c0_i32 = arith.constant 0 : i32
    %c0_i32_0 = arith.constant 0 : i32
    %c0_i32_1 = arith.constant 0 : i32
    return %c0_i32, %c0_i32_0 : i32, i32
  }
  func.func @transform_12(%arg0: i32) -> (i32, i32) {
    %c0_i32 = arith.constant 0 : i32
    %c0_i32_0 = arith.constant 0 : i32
    %c0_i32_1 = arith.constant 0 : i32
    return %c0_i32, %c0_i32_0 : i32, i32
  }
  func.func @transform_13(%arg0: i32) -> (i32, i32) {
    %c0_i32 = arith.constant 0 : i32
    %c0_i32_0 = arith.constant 0 : i32
    %c0_i32_1 = arith.constant 0 : i32
    return %c0_i32, %c0_i32_0 : i32, i32
  }
  func.func @transform_14(%arg0: i32) -> (i32, i32) {
    %c0_i32 = arith.constant 0 : i32
    %c0_i32_0 = arith.constant 0 : i32
    %c0_i32_1 = arith.constant 0 : i32
    return %c0_i32, %c0_i32_0 : i32, i32
  }
  func.func @transform_15(%arg0: i32) -> (i32, i32) {
    %c0_i32 = arith.constant 0 : i32
    %c0_i32_0 = arith.constant 0 : i32
    return %arg0, %c0_i32 : i32, i32
  }
  func.func @transform_16(%arg0: i32) -> (i32, i32) {
    %c0_i32 = arith.constant 0 : i32
    %c0_i32_0 = arith.constant 0 : i32
    return %arg0, %c0_i32 : i32, i32
  }
  func.func @transform_17(%arg0: i32) -> (i32, i32) {
    %c0_i32 = arith.constant 0 : i32
    %c0_i32_0 = arith.constant 0 : i32
    return %arg0, %c0_i32 : i32, i32
  }
}

module attributes {stable_mosaic.version = 11 : i64} {
  func.func @_transformer_kernel(%arg0: i32, %arg1: memref<2x16x128xf32, #tpu.memory_space<vmem>>, %arg2: memref<1x128xf32, #tpu.memory_space<vmem>>, %arg3: memref<1x128xf32, #tpu.memory_space<vmem>>, %arg4: memref<3x1x128xf32, #tpu.memory_space<vmem>>, %arg5: memref<3x1x128xf32, #tpu.memory_space<vmem>>, %arg6: memref<3x128x384xbf16, #tpu.memory_space<vmem>>, %arg7: memref<3x1x384xf32, #tpu.memory_space<vmem>>, %arg8: memref<3x128x128xbf16, #tpu.memory_space<vmem>>, %arg9: memref<3x1x128xf32, #tpu.memory_space<vmem>>, %arg10: memref<3x1x128xf32, #tpu.memory_space<vmem>>, %arg11: memref<3x1x128xf32, #tpu.memory_space<vmem>>, %arg12: memref<3x128x512xbf16, #tpu.memory_space<vmem>>, %arg13: memref<3x1x512xf32, #tpu.memory_space<vmem>>, %arg14: memref<3x512x128xbf16, #tpu.memory_space<vmem>>, %arg15: memref<3x1x128xf32, #tpu.memory_space<vmem>>, %arg16: memref<1x128xf32, #tpu.memory_space<vmem>>, %arg17: memref<1x128xf32, #tpu.memory_space<vmem>>, %arg18: memref<128x128xbf16, #tpu.memory_space<vmem>>, %arg19: memref<1x128xf32, #tpu.memory_space<vmem>>, %arg20: memref<2x16x128xf32, #tpu.memory_space<vmem>>) attributes {dimension_semantics = [#tpu.dimension_semantics<parallel>], iteration_bounds = array<i64: 1>, scalar_prefetch = 0 : i64, scratch_operands = 0 : i64, tpu.core_type = #tpu.core_type<tc>, window_params = [{transform_indices = @transform_0, window_bounds = array<i64: 2, 16, 128>}, {pipeline_mode = #tpu.pipeline_mode<synchronous>, transform_indices = @transform_1, window_bounds = array<i64: 1, 128>}, {pipeline_mode = #tpu.pipeline_mode<synchronous>, transform_indices = @transform_2, window_bounds = array<i64: 1, 128>}, {pipeline_mode = #tpu.pipeline_mode<synchronous>, transform_indices = @transform_3, window_bounds = array<i64: 3, 1, 128>}, {pipeline_mode = #tpu.pipeline_mode<synchronous>, transform_indices = @transform_4, window_bounds = array<i64: 3, 1, 128>}, {pipeline_mode = #tpu.pipeline_mode<synchronous>, transform_indices = @transform_5, window_bounds = array<i64: 3, 128, 384>}, {pipeline_mode = #tpu.pipeline_mode<synchronous>, transform_indices = @transform_6, window_bounds = array<i64: 3, 1, 384>}, {pipeline_mode = #tpu.pipeline_mode<synchronous>, transform_indices = @transform_7, window_bounds = array<i64: 3, 128, 128>}, {pipeline_mode = #tpu.pipeline_mode<synchronous>, transform_indices = @transform_8, window_bounds = array<i64: 3, 1, 128>}, {pipeline_mode = #tpu.pipeline_mode<synchronous>, transform_indices = @transform_9, window_bounds = array<i64: 3, 1, 128>}, {pipeline_mode = #tpu.pipeline_mode<synchronous>, transform_indices = @transform_10, window_bounds = array<i64: 3, 1, 128>}, {pipeline_mode = #tpu.pipeline_mode<synchronous>, transform_indices = @transform_11, window_bounds = array<i64: 3, 128, 512>}, {pipeline_mode = #tpu.pipeline_mode<synchronous>, transform_indices = @transform_12, window_bounds = array<i64: 3, 1, 512>}, {pipeline_mode = #tpu.pipeline_mode<synchronous>, transform_indices = @transform_13, window_bounds = array<i64: 3, 512, 128>}, {pipeline_mode = #tpu.pipeline_mode<synchronous>, transform_indices = @transform_14, window_bounds = array<i64: 3, 1, 128>}, {pipeline_mode = #tpu.pipeline_mode<synchronous>, transform_indices = @transform_15, window_bounds = array<i64: 1, 128>}, {pipeline_mode = #tpu.pipeline_mode<synchronous>, transform_indices = @transform_16, window_bounds = array<i64: 1, 128>}, {pipeline_mode = #tpu.pipeline_mode<synchronous>, transform_indices = @transform_17, window_bounds = array<i64: 128, 128>}, {pipeline_mode = #tpu.pipeline_mode<synchronous>, transform_indices = @transform_18, window_bounds = array<i64: 1, 128>}, {transform_indices = @transform_19, window_bounds = array<i64: 2, 16, 128>}]} {
    %c0 = arith.constant 0 : index
    %c0_0 = arith.constant 0 : index
    %c0_1 = arith.constant 0 : index
    %0 = vector.load %arg1[%c0, %c0_0, %c0_1] : memref<2x16x128xf32, #tpu.memory_space<vmem>>, vector<2x16x128xf32>
    %1 = vector.shape_cast %0 : vector<2x16x128xf32> to vector<32x128xf32>
    %c0_2 = arith.constant 0 : index
    %c0_3 = arith.constant 0 : index
    %2 = vector.load %arg2[%c0_2, %c0_3] : memref<1x128xf32, #tpu.memory_space<vmem>>, vector<1x128xf32>
    %c0_4 = arith.constant 0 : index
    %c0_5 = arith.constant 0 : index
    %3 = vector.load %arg3[%c0_4, %c0_5] : memref<1x128xf32, #tpu.memory_space<vmem>>, vector<1x128xf32>
    %cst = arith.constant dense<0.000000e+00> : vector<32xf32>
    %4 = vector.multi_reduction <add>, %1, %cst [1] : vector<32x128xf32> to vector<32xf32>
    %5 = vector.shape_cast %4 : vector<32xf32> to vector<32x1xf32>
    %cst_6 = arith.constant 1.280000e+02 : f32
    %6 = vector.broadcast %cst_6 : f32 to vector<32x1xf32>
    %7 = arith.divf %5, %6 : vector<32x1xf32>
    %8 = vector.broadcast %7 : vector<32x1xf32> to vector<32x128xf32>
    %9 = arith.subf %1, %8 : vector<32x128xf32>
    %10 = arith.mulf %9, %9 : vector<32x128xf32>
    %cst_7 = arith.constant dense<0.000000e+00> : vector<32xf32>
    %11 = vector.multi_reduction <add>, %10, %cst_7 [1] : vector<32x128xf32> to vector<32xf32>
    %12 = vector.shape_cast %11 : vector<32xf32> to vector<32x1xf32>
    %cst_8 = arith.constant 1.280000e+02 : f32
    %13 = vector.broadcast %cst_8 : f32 to vector<32x1xf32>
    %14 = arith.divf %12, %13 : vector<32x1xf32>
    %15 = vector.broadcast %7 : vector<32x1xf32> to vector<32x128xf32>
    %16 = arith.subf %1, %15 : vector<32x128xf32>
    %cst_9 = arith.constant 9.99999974E-6 : f32
    %17 = vector.broadcast %cst_9 : f32 to vector<32x1xf32>
    %18 = arith.addf %14, %17 : vector<32x1xf32>
    %19 = math.rsqrt %18 : vector<32x1xf32>
    %20 = vector.broadcast %19 : vector<32x1xf32> to vector<32x128xf32>
    %21 = arith.mulf %16, %20 : vector<32x128xf32>
    %22 = vector.broadcast %2 : vector<1x128xf32> to vector<32x128xf32>
    %23 = arith.mulf %21, %22 : vector<32x128xf32>
    %24 = vector.broadcast %3 : vector<1x128xf32> to vector<32x128xf32>
    %25 = arith.addf %23, %24 : vector<32x128xf32>
    %26 = tpu.iota {dimensions = array<i32: 1>} : vector<2x16x16xi32>
    %27 = tpu.iota {dimensions = array<i32: 2>} : vector<2x16x16xi32>
    %28 = arith.cmpi sle, %27, %26 : vector<2x16x16xi32>
    %c0_10 = arith.constant 0 : index
    %c0_11 = arith.constant 0 : index
    %c0_12 = arith.constant 0 : index
    %29 = vector.load %arg4[%c0_10, %c0_11, %c0_12] : memref<3x1x128xf32, #tpu.memory_space<vmem>>, vector<1x1x128xf32>
    %30 = vector.shape_cast %29 : vector<1x1x128xf32> to vector<1x128xf32>
    %c0_13 = arith.constant 0 : index
    %c0_14 = arith.constant 0 : index
    %c0_15 = arith.constant 0 : index
    %31 = vector.load %arg5[%c0_13, %c0_14, %c0_15] : memref<3x1x128xf32, #tpu.memory_space<vmem>>, vector<1x1x128xf32>
    %32 = vector.shape_cast %31 : vector<1x1x128xf32> to vector<1x128xf32>
    %cst_16 = arith.constant dense<0.000000e+00> : vector<32xf32>
    %33 = vector.multi_reduction <add>, %25, %cst_16 [1] : vector<32x128xf32> to vector<32xf32>
    %34 = vector.shape_cast %33 : vector<32xf32> to vector<32x1xf32>
    %cst_17 = arith.constant 1.280000e+02 : f32
    %35 = vector.broadcast %cst_17 : f32 to vector<32x1xf32>
    %36 = arith.divf %34, %35 : vector<32x1xf32>
    %37 = vector.broadcast %36 : vector<32x1xf32> to vector<32x128xf32>
    %38 = arith.subf %25, %37 : vector<32x128xf32>
    %39 = arith.mulf %38, %38 : vector<32x128xf32>
    %cst_18 = arith.constant dense<0.000000e+00> : vector<32xf32>
    %40 = vector.multi_reduction <add>, %39, %cst_18 [1] : vector<32x128xf32> to vector<32xf32>
    %41 = vector.shape_cast %40 : vector<32xf32> to vector<32x1xf32>
    %cst_19 = arith.constant 1.280000e+02 : f32
    %42 = vector.broadcast %cst_19 : f32 to vector<32x1xf32>
    %43 = arith.divf %41, %42 : vector<32x1xf32>
    %44 = vector.broadcast %36 : vector<32x1xf32> to vector<32x128xf32>
    %45 = arith.subf %25, %44 : vector<32x128xf32>
    %cst_20 = arith.constant 9.99999974E-6 : f32
    %46 = vector.broadcast %cst_20 : f32 to vector<32x1xf32>
    %47 = arith.addf %43, %46 : vector<32x1xf32>
    %48 = math.rsqrt %47 : vector<32x1xf32>
    %49 = vector.broadcast %48 : vector<32x1xf32> to vector<32x128xf32>
    %50 = arith.mulf %45, %49 : vector<32x128xf32>
    %51 = vector.broadcast %30 : vector<1x128xf32> to vector<32x128xf32>
    %52 = arith.mulf %50, %51 : vector<32x128xf32>
    %53 = vector.broadcast %32 : vector<1x128xf32> to vector<32x128xf32>
    %54 = arith.addf %52, %53 : vector<32x128xf32>
    %c0_21 = arith.constant 0 : index
    %c0_22 = arith.constant 0 : index
    %c0_23 = arith.constant 0 : index
    %55 = vector.load %arg6[%c0_21, %c0_22, %c0_23] : memref<3x128x384xbf16, #tpu.memory_space<vmem>>, vector<1x128x384xbf16>
    %56 = vector.shape_cast %55 : vector<1x128x384xbf16> to vector<128x384xbf16>
    %57 = arith.truncf %54 : vector<32x128xf32> to vector<32x128xbf16>
    %cst_24 = arith.constant dense<0.000000e+00> : vector<32x384xf32>
    %58 = tpu.matmul %57, %56, %cst_24 {dimension_numbers = #tpu.dot_dimension_numbers<[1], [0], [0], [1], [0, 0, 1, 1], [], []>} : vector<32x128xbf16>, vector<128x384xbf16>, vector<32x384xf32> -> vector<32x384xf32>
    %c0_25 = arith.constant 0 : index
    %c0_26 = arith.constant 0 : index
    %c0_27 = arith.constant 0 : index
    %59 = vector.load %arg7[%c0_25, %c0_26, %c0_27] : memref<3x1x384xf32, #tpu.memory_space<vmem>>, vector<1x1x384xf32>
    %60 = vector.shape_cast %59 : vector<1x1x384xf32> to vector<1x384xf32>
    %61 = vector.broadcast %60 : vector<1x384xf32> to vector<32x384xf32>
    %62 = arith.addf %58, %61 : vector<32x384xf32>
    %63 = vector.shape_cast %62 : vector<32x384xf32> to vector<2x16x384xf32>
    %64 = vector.extract_strided_slice %63 {offsets = [0, 0, 0], sizes = [2, 16, 128], strides = [1, 1, 1]} : vector<2x16x384xf32> to vector<2x16x128xf32>
    %65 = vector.extract_strided_slice %63 {offsets = [0, 0, 128], sizes = [2, 16, 128], strides = [1, 1, 1]} : vector<2x16x384xf32> to vector<2x16x128xf32>
    %66 = vector.extract_strided_slice %63 {offsets = [0, 0, 256], sizes = [2, 16, 128], strides = [1, 1, 1]} : vector<2x16x384xf32> to vector<2x16x128xf32>
    %67 = arith.truncf %64 : vector<2x16x128xf32> to vector<2x16x128xbf16>
    %68 = arith.truncf %65 : vector<2x16x128xf32> to vector<2x16x128xbf16>
    "tpu.trace_start"() <{level = 10 : i32, message = "bqd,bkd->bqk"}> : () -> ()
    %cst_28 = arith.constant dense<0.000000e+00> : vector<2x16x16xf32>
    %69 = tpu.matmul %67, %68, %cst_28 {dimension_numbers = #tpu.dot_dimension_numbers<[2], [2], [1], [1], [0, 0, 0, 1, 1, 1], [0], [0]>} : vector<2x16x128xbf16>, vector<2x16x128xbf16>, vector<2x16x16xf32> -> vector<2x16x16xf32>
    "tpu.trace_stop"() : () -> ()
    %cst_29 = arith.constant 0.0883883461 : f32
    %70 = vector.broadcast %cst_29 : f32 to vector<2x16x16xf32>
    %71 = arith.mulf %69, %70 : vector<2x16x16xf32>
    %cst_30 = arith.constant -3.40282347E+38 : f32
    %72 = vector.broadcast %cst_30 : f32 to vector<2x16x16xf32>
    %73 = arith.select %28, %71, %72 : vector<2x16x16xi1>, vector<2x16x16xf32>
    %cst_31 = arith.constant dense<0xFF800000> : vector<2x16xf32>
    %74 = vector.multi_reduction <maximumf>, %73, %cst_31 [2] : vector<2x16x16xf32> to vector<2x16xf32>
    %75 = vector.shape_cast %74 : vector<2x16xf32> to vector<2x16x1xf32>
    %76 = vector.broadcast %75 : vector<2x16x1xf32> to vector<2x16x16xf32>
    %77 = arith.subf %73, %76 : vector<2x16x16xf32>
    %78 = math.exp %77 : vector<2x16x16xf32>
    %cst_32 = arith.constant dense<0.000000e+00> : vector<2x16xf32>
    %79 = vector.multi_reduction <add>, %78, %cst_32 [2] : vector<2x16x16xf32> to vector<2x16xf32>
    %80 = vector.shape_cast %79 : vector<2x16xf32> to vector<2x16x1xf32>
    %81 = tpu.reciprocal %80 {approx = true} : vector<2x16x1xf32> -> vector<2x16x1xf32>
    %82 = vector.broadcast %81 : vector<2x16x1xf32> to vector<2x16x16xf32>
    %83 = arith.mulf %78, %82 : vector<2x16x16xf32>
    %84 = arith.truncf %83 : vector<2x16x16xf32> to vector<2x16x16xbf16>
    %85 = arith.truncf %66 : vector<2x16x128xf32> to vector<2x16x128xbf16>
    "tpu.trace_start"() <{level = 10 : i32, message = "bqk,bkd->bqd"}> : () -> ()
    %cst_33 = arith.constant dense<0.000000e+00> : vector<2x16x128xf32>
    %86 = tpu.matmul %84, %85, %cst_33 {dimension_numbers = #tpu.dot_dimension_numbers<[2], [1], [1], [2], [0, 0, 0, 1, 1, 2], [0], [0]>} : vector<2x16x16xbf16>, vector<2x16x128xbf16>, vector<2x16x128xf32> -> vector<2x16x128xf32>
    "tpu.trace_stop"() : () -> ()
    %87 = vector.shape_cast %86 : vector<2x16x128xf32> to vector<32x128xf32>
    %c0_34 = arith.constant 0 : index
    %c0_35 = arith.constant 0 : index
    %c0_36 = arith.constant 0 : index
    %88 = vector.load %arg8[%c0_34, %c0_35, %c0_36] : memref<3x128x128xbf16, #tpu.memory_space<vmem>>, vector<1x128x128xbf16>
    %89 = vector.shape_cast %88 : vector<1x128x128xbf16> to vector<128x128xbf16>
    %90 = arith.truncf %87 : vector<32x128xf32> to vector<32x128xbf16>
    %cst_37 = arith.constant dense<0.000000e+00> : vector<32x128xf32>
    %91 = tpu.matmul %90, %89, %cst_37 {dimension_numbers = #tpu.dot_dimension_numbers<[1], [0], [0], [1], [0, 0, 1, 1], [], []>} : vector<32x128xbf16>, vector<128x128xbf16>, vector<32x128xf32> -> vector<32x128xf32>
    %92 = arith.addf %25, %91 : vector<32x128xf32>
    %c0_38 = arith.constant 0 : index
    %c0_39 = arith.constant 0 : index
    %c0_40 = arith.constant 0 : index
    %93 = vector.load %arg9[%c0_38, %c0_39, %c0_40] : memref<3x1x128xf32, #tpu.memory_space<vmem>>, vector<1x1x128xf32>
    %94 = vector.shape_cast %93 : vector<1x1x128xf32> to vector<1x128xf32>
    %95 = vector.broadcast %94 : vector<1x128xf32> to vector<32x128xf32>
    %96 = arith.addf %92, %95 : vector<32x128xf32>
    %c0_41 = arith.constant 0 : index
    %c0_42 = arith.constant 0 : index
    %c0_43 = arith.constant 0 : index
    %97 = vector.load %arg10[%c0_41, %c0_42, %c0_43] : memref<3x1x128xf32, #tpu.memory_space<vmem>>, vector<1x1x128xf32>
    %98 = vector.shape_cast %97 : vector<1x1x128xf32> to vector<1x128xf32>
    %c0_44 = arith.constant 0 : index
    %c0_45 = arith.constant 0 : index
    %c0_46 = arith.constant 0 : index
    %99 = vector.load %arg11[%c0_44, %c0_45, %c0_46] : memref<3x1x128xf32, #tpu.memory_space<vmem>>, vector<1x1x128xf32>
    %100 = vector.shape_cast %99 : vector<1x1x128xf32> to vector<1x128xf32>
    %cst_47 = arith.constant dense<0.000000e+00> : vector<32xf32>
    %101 = vector.multi_reduction <add>, %96, %cst_47 [1] : vector<32x128xf32> to vector<32xf32>
    %102 = vector.shape_cast %101 : vector<32xf32> to vector<32x1xf32>
    %cst_48 = arith.constant 1.280000e+02 : f32
    %103 = vector.broadcast %cst_48 : f32 to vector<32x1xf32>
    %104 = arith.divf %102, %103 : vector<32x1xf32>
    %105 = vector.broadcast %104 : vector<32x1xf32> to vector<32x128xf32>
    %106 = arith.subf %96, %105 : vector<32x128xf32>
    %107 = arith.mulf %106, %106 : vector<32x128xf32>
    %cst_49 = arith.constant dense<0.000000e+00> : vector<32xf32>
    %108 = vector.multi_reduction <add>, %107, %cst_49 [1] : vector<32x128xf32> to vector<32xf32>
    %109 = vector.shape_cast %108 : vector<32xf32> to vector<32x1xf32>
    %cst_50 = arith.constant 1.280000e+02 : f32
    %110 = vector.broadcast %cst_50 : f32 to vector<32x1xf32>
    %111 = arith.divf %109, %110 : vector<32x1xf32>
    %112 = vector.broadcast %104 : vector<32x1xf32> to vector<32x128xf32>
    %113 = arith.subf %96, %112 : vector<32x128xf32>
    %cst_51 = arith.constant 9.99999974E-6 : f32
    %114 = vector.broadcast %cst_51 : f32 to vector<32x1xf32>
    %115 = arith.addf %111, %114 : vector<32x1xf32>
    %116 = math.rsqrt %115 : vector<32x1xf32>
    %117 = vector.broadcast %116 : vector<32x1xf32> to vector<32x128xf32>
    %118 = arith.mulf %113, %117 : vector<32x128xf32>
    %119 = vector.broadcast %98 : vector<1x128xf32> to vector<32x128xf32>
    %120 = arith.mulf %118, %119 : vector<32x128xf32>
    %121 = vector.broadcast %100 : vector<1x128xf32> to vector<32x128xf32>
    %122 = arith.addf %120, %121 : vector<32x128xf32>
    %c0_52 = arith.constant 0 : index
    %c0_53 = arith.constant 0 : index
    %c0_54 = arith.constant 0 : index
    %123 = vector.load %arg12[%c0_52, %c0_53, %c0_54] : memref<3x128x512xbf16, #tpu.memory_space<vmem>>, vector<1x128x512xbf16>
    %124 = vector.shape_cast %123 : vector<1x128x512xbf16> to vector<128x512xbf16>
    %125 = arith.truncf %122 : vector<32x128xf32> to vector<32x128xbf16>
    %cst_55 = arith.constant dense<0.000000e+00> : vector<32x512xf32>
    %126 = tpu.matmul %125, %124, %cst_55 {dimension_numbers = #tpu.dot_dimension_numbers<[1], [0], [0], [1], [0, 0, 1, 1], [], []>} : vector<32x128xbf16>, vector<128x512xbf16>, vector<32x512xf32> -> vector<32x512xf32>
    %c0_56 = arith.constant 0 : index
    %c0_57 = arith.constant 0 : index
    %c0_58 = arith.constant 0 : index
    %127 = vector.load %arg13[%c0_56, %c0_57, %c0_58] : memref<3x1x512xf32, #tpu.memory_space<vmem>>, vector<1x1x512xf32>
    %128 = vector.shape_cast %127 : vector<1x1x512xf32> to vector<1x512xf32>
    %129 = vector.broadcast %128 : vector<1x512xf32> to vector<32x512xf32>
    %130 = arith.addf %126, %129 : vector<32x512xf32>
    %cst_59 = arith.constant 0.000000e+00 : f32
    %131 = vector.broadcast %cst_59 : f32 to vector<32x512xf32>
    %132 = arith.maximumf %130, %131 : vector<32x512xf32>
    %c0_60 = arith.constant 0 : index
    %c0_61 = arith.constant 0 : index
    %c0_62 = arith.constant 0 : index
    %133 = vector.load %arg14[%c0_60, %c0_61, %c0_62] : memref<3x512x128xbf16, #tpu.memory_space<vmem>>, vector<1x512x128xbf16>
    %134 = vector.shape_cast %133 : vector<1x512x128xbf16> to vector<512x128xbf16>
    %135 = arith.truncf %132 : vector<32x512xf32> to vector<32x512xbf16>
    %cst_63 = arith.constant dense<0.000000e+00> : vector<32x128xf32>
    %136 = tpu.matmul %135, %134, %cst_63 {dimension_numbers = #tpu.dot_dimension_numbers<[1], [0], [0], [1], [0, 0, 1, 1], [], []>} : vector<32x512xbf16>, vector<512x128xbf16>, vector<32x128xf32> -> vector<32x128xf32>
    %137 = arith.addf %96, %136 : vector<32x128xf32>
    %c0_64 = arith.constant 0 : index
    %c0_65 = arith.constant 0 : index
    %c0_66 = arith.constant 0 : index
    %138 = vector.load %arg15[%c0_64, %c0_65, %c0_66] : memref<3x1x128xf32, #tpu.memory_space<vmem>>, vector<1x1x128xf32>
    %139 = vector.shape_cast %138 : vector<1x1x128xf32> to vector<1x128xf32>
    %140 = vector.broadcast %139 : vector<1x128xf32> to vector<32x128xf32>
    %141 = arith.addf %137, %140 : vector<32x128xf32>
    %c1 = arith.constant 1 : index
    %c0_67 = arith.constant 0 : index
    %c0_68 = arith.constant 0 : index
    %142 = vector.load %arg4[%c1, %c0_67, %c0_68] : memref<3x1x128xf32, #tpu.memory_space<vmem>>, vector<1x1x128xf32>
    %143 = vector.shape_cast %142 : vector<1x1x128xf32> to vector<1x128xf32>
    %c1_69 = arith.constant 1 : index
    %c0_70 = arith.constant 0 : index
    %c0_71 = arith.constant 0 : index
    %144 = vector.load %arg5[%c1_69, %c0_70, %c0_71] : memref<3x1x128xf32, #tpu.memory_space<vmem>>, vector<1x1x128xf32>
    %145 = vector.shape_cast %144 : vector<1x1x128xf32> to vector<1x128xf32>
    %cst_72 = arith.constant dense<0.000000e+00> : vector<32xf32>
    %146 = vector.multi_reduction <add>, %141, %cst_72 [1] : vector<32x128xf32> to vector<32xf32>
    %147 = vector.shape_cast %146 : vector<32xf32> to vector<32x1xf32>
    %cst_73 = arith.constant 1.280000e+02 : f32
    %148 = vector.broadcast %cst_73 : f32 to vector<32x1xf32>
    %149 = arith.divf %147, %148 : vector<32x1xf32>
    %150 = vector.broadcast %149 : vector<32x1xf32> to vector<32x128xf32>
    %151 = arith.subf %141, %150 : vector<32x128xf32>
    %152 = arith.mulf %151, %151 : vector<32x128xf32>
    %cst_74 = arith.constant dense<0.000000e+00> : vector<32xf32>
    %153 = vector.multi_reduction <add>, %152, %cst_74 [1] : vector<32x128xf32> to vector<32xf32>
    %154 = vector.shape_cast %153 : vector<32xf32> to vector<32x1xf32>
    %cst_75 = arith.constant 1.280000e+02 : f32
    %155 = vector.broadcast %cst_75 : f32 to vector<32x1xf32>
    %156 = arith.divf %154, %155 : vector<32x1xf32>
    %157 = vector.broadcast %149 : vector<32x1xf32> to vector<32x128xf32>
    %158 = arith.subf %141, %157 : vector<32x128xf32>
    %cst_76 = arith.constant 9.99999974E-6 : f32
    %159 = vector.broadcast %cst_76 : f32 to vector<32x1xf32>
    %160 = arith.addf %156, %159 : vector<32x1xf32>
    %161 = math.rsqrt %160 : vector<32x1xf32>
    %162 = vector.broadcast %161 : vector<32x1xf32> to vector<32x128xf32>
    %163 = arith.mulf %158, %162 : vector<32x128xf32>
    %164 = vector.broadcast %143 : vector<1x128xf32> to vector<32x128xf32>
    %165 = arith.mulf %163, %164 : vector<32x128xf32>
    %166 = vector.broadcast %145 : vector<1x128xf32> to vector<32x128xf32>
    %167 = arith.addf %165, %166 : vector<32x128xf32>
    %c1_77 = arith.constant 1 : index
    %c0_78 = arith.constant 0 : index
    %c0_79 = arith.constant 0 : index
    %168 = vector.load %arg6[%c1_77, %c0_78, %c0_79] : memref<3x128x384xbf16, #tpu.memory_space<vmem>>, vector<1x128x384xbf16>
    %169 = vector.shape_cast %168 : vector<1x128x384xbf16> to vector<128x384xbf16>
    %170 = arith.truncf %167 : vector<32x128xf32> to vector<32x128xbf16>
    %cst_80 = arith.constant dense<0.000000e+00> : vector<32x384xf32>
    %171 = tpu.matmul %170, %169, %cst_80 {dimension_numbers = #tpu.dot_dimension_numbers<[1], [0], [0], [1], [0, 0, 1, 1], [], []>} : vector<32x128xbf16>, vector<128x384xbf16>, vector<32x384xf32> -> vector<32x384xf32>
    %c1_81 = arith.constant 1 : index
    %c0_82 = arith.constant 0 : index
    %c0_83 = arith.constant 0 : index
    %172 = vector.load %arg7[%c1_81, %c0_82, %c0_83] : memref<3x1x384xf32, #tpu.memory_space<vmem>>, vector<1x1x384xf32>
    %173 = vector.shape_cast %172 : vector<1x1x384xf32> to vector<1x384xf32>
    %174 = vector.broadcast %173 : vector<1x384xf32> to vector<32x384xf32>
    %175 = arith.addf %171, %174 : vector<32x384xf32>
    %176 = vector.shape_cast %175 : vector<32x384xf32> to vector<2x16x384xf32>
    %177 = vector.extract_strided_slice %176 {offsets = [0, 0, 0], sizes = [2, 16, 128], strides = [1, 1, 1]} : vector<2x16x384xf32> to vector<2x16x128xf32>
    %178 = vector.extract_strided_slice %176 {offsets = [0, 0, 128], sizes = [2, 16, 128], strides = [1, 1, 1]} : vector<2x16x384xf32> to vector<2x16x128xf32>
    %179 = vector.extract_strided_slice %176 {offsets = [0, 0, 256], sizes = [2, 16, 128], strides = [1, 1, 1]} : vector<2x16x384xf32> to vector<2x16x128xf32>
    %180 = arith.truncf %177 : vector<2x16x128xf32> to vector<2x16x128xbf16>
    %181 = arith.truncf %178 : vector<2x16x128xf32> to vector<2x16x128xbf16>
    "tpu.trace_start"() <{level = 10 : i32, message = "bqd,bkd->bqk"}> : () -> ()
    %cst_84 = arith.constant dense<0.000000e+00> : vector<2x16x16xf32>
    %182 = tpu.matmul %180, %181, %cst_84 {dimension_numbers = #tpu.dot_dimension_numbers<[2], [2], [1], [1], [0, 0, 0, 1, 1, 1], [0], [0]>} : vector<2x16x128xbf16>, vector<2x16x128xbf16>, vector<2x16x16xf32> -> vector<2x16x16xf32>
    "tpu.trace_stop"() : () -> ()
    %cst_85 = arith.constant 0.0883883461 : f32
    %183 = vector.broadcast %cst_85 : f32 to vector<2x16x16xf32>
    %184 = arith.mulf %182, %183 : vector<2x16x16xf32>
    %cst_86 = arith.constant -3.40282347E+38 : f32
    %185 = vector.broadcast %cst_86 : f32 to vector<2x16x16xf32>
    %186 = arith.select %28, %184, %185 : vector<2x16x16xi1>, vector<2x16x16xf32>
    %cst_87 = arith.constant dense<0xFF800000> : vector<2x16xf32>
    %187 = vector.multi_reduction <maximumf>, %186, %cst_87 [2] : vector<2x16x16xf32> to vector<2x16xf32>
    %188 = vector.shape_cast %187 : vector<2x16xf32> to vector<2x16x1xf32>
    %189 = vector.broadcast %188 : vector<2x16x1xf32> to vector<2x16x16xf32>
    %190 = arith.subf %186, %189 : vector<2x16x16xf32>
    %191 = math.exp %190 : vector<2x16x16xf32>
    %cst_88 = arith.constant dense<0.000000e+00> : vector<2x16xf32>
    %192 = vector.multi_reduction <add>, %191, %cst_88 [2] : vector<2x16x16xf32> to vector<2x16xf32>
    %193 = vector.shape_cast %192 : vector<2x16xf32> to vector<2x16x1xf32>
    %194 = tpu.reciprocal %193 {approx = true} : vector<2x16x1xf32> -> vector<2x16x1xf32>
    %195 = vector.broadcast %194 : vector<2x16x1xf32> to vector<2x16x16xf32>
    %196 = arith.mulf %191, %195 : vector<2x16x16xf32>
    %197 = arith.truncf %196 : vector<2x16x16xf32> to vector<2x16x16xbf16>
    %198 = arith.truncf %179 : vector<2x16x128xf32> to vector<2x16x128xbf16>
    "tpu.trace_start"() <{level = 10 : i32, message = "bqk,bkd->bqd"}> : () -> ()
    %cst_89 = arith.constant dense<0.000000e+00> : vector<2x16x128xf32>
    %199 = tpu.matmul %197, %198, %cst_89 {dimension_numbers = #tpu.dot_dimension_numbers<[2], [1], [1], [2], [0, 0, 0, 1, 1, 2], [0], [0]>} : vector<2x16x16xbf16>, vector<2x16x128xbf16>, vector<2x16x128xf32> -> vector<2x16x128xf32>
    "tpu.trace_stop"() : () -> ()
    %200 = vector.shape_cast %199 : vector<2x16x128xf32> to vector<32x128xf32>
    %c1_90 = arith.constant 1 : index
    %c0_91 = arith.constant 0 : index
    %c0_92 = arith.constant 0 : index
    %201 = vector.load %arg8[%c1_90, %c0_91, %c0_92] : memref<3x128x128xbf16, #tpu.memory_space<vmem>>, vector<1x128x128xbf16>
    %202 = vector.shape_cast %201 : vector<1x128x128xbf16> to vector<128x128xbf16>
    %203 = arith.truncf %200 : vector<32x128xf32> to vector<32x128xbf16>
    %cst_93 = arith.constant dense<0.000000e+00> : vector<32x128xf32>
    %204 = tpu.matmul %203, %202, %cst_93 {dimension_numbers = #tpu.dot_dimension_numbers<[1], [0], [0], [1], [0, 0, 1, 1], [], []>} : vector<32x128xbf16>, vector<128x128xbf16>, vector<32x128xf32> -> vector<32x128xf32>
    %205 = arith.addf %141, %204 : vector<32x128xf32>
    %c1_94 = arith.constant 1 : index
    %c0_95 = arith.constant 0 : index
    %c0_96 = arith.constant 0 : index
    %206 = vector.load %arg9[%c1_94, %c0_95, %c0_96] : memref<3x1x128xf32, #tpu.memory_space<vmem>>, vector<1x1x128xf32>
    %207 = vector.shape_cast %206 : vector<1x1x128xf32> to vector<1x128xf32>
    %208 = vector.broadcast %207 : vector<1x128xf32> to vector<32x128xf32>
    %209 = arith.addf %205, %208 : vector<32x128xf32>
    %c1_97 = arith.constant 1 : index
    %c0_98 = arith.constant 0 : index
    %c0_99 = arith.constant 0 : index
    %210 = vector.load %arg10[%c1_97, %c0_98, %c0_99] : memref<3x1x128xf32, #tpu.memory_space<vmem>>, vector<1x1x128xf32>
    %211 = vector.shape_cast %210 : vector<1x1x128xf32> to vector<1x128xf32>
    %c1_100 = arith.constant 1 : index
    %c0_101 = arith.constant 0 : index
    %c0_102 = arith.constant 0 : index
    %212 = vector.load %arg11[%c1_100, %c0_101, %c0_102] : memref<3x1x128xf32, #tpu.memory_space<vmem>>, vector<1x1x128xf32>
    %213 = vector.shape_cast %212 : vector<1x1x128xf32> to vector<1x128xf32>
    %cst_103 = arith.constant dense<0.000000e+00> : vector<32xf32>
    %214 = vector.multi_reduction <add>, %209, %cst_103 [1] : vector<32x128xf32> to vector<32xf32>
    %215 = vector.shape_cast %214 : vector<32xf32> to vector<32x1xf32>
    %cst_104 = arith.constant 1.280000e+02 : f32
    %216 = vector.broadcast %cst_104 : f32 to vector<32x1xf32>
    %217 = arith.divf %215, %216 : vector<32x1xf32>
    %218 = vector.broadcast %217 : vector<32x1xf32> to vector<32x128xf32>
    %219 = arith.subf %209, %218 : vector<32x128xf32>
    %220 = arith.mulf %219, %219 : vector<32x128xf32>
    %cst_105 = arith.constant dense<0.000000e+00> : vector<32xf32>
    %221 = vector.multi_reduction <add>, %220, %cst_105 [1] : vector<32x128xf32> to vector<32xf32>
    %222 = vector.shape_cast %221 : vector<32xf32> to vector<32x1xf32>
    %cst_106 = arith.constant 1.280000e+02 : f32
    %223 = vector.broadcast %cst_106 : f32 to vector<32x1xf32>
    %224 = arith.divf %222, %223 : vector<32x1xf32>
    %225 = vector.broadcast %217 : vector<32x1xf32> to vector<32x128xf32>
    %226 = arith.subf %209, %225 : vector<32x128xf32>
    %cst_107 = arith.constant 9.99999974E-6 : f32
    %227 = vector.broadcast %cst_107 : f32 to vector<32x1xf32>
    %228 = arith.addf %224, %227 : vector<32x1xf32>
    %229 = math.rsqrt %228 : vector<32x1xf32>
    %230 = vector.broadcast %229 : vector<32x1xf32> to vector<32x128xf32>
    %231 = arith.mulf %226, %230 : vector<32x128xf32>
    %232 = vector.broadcast %211 : vector<1x128xf32> to vector<32x128xf32>
    %233 = arith.mulf %231, %232 : vector<32x128xf32>
    %234 = vector.broadcast %213 : vector<1x128xf32> to vector<32x128xf32>
    %235 = arith.addf %233, %234 : vector<32x128xf32>
    %c1_108 = arith.constant 1 : index
    %c0_109 = arith.constant 0 : index
    %c0_110 = arith.constant 0 : index
    %236 = vector.load %arg12[%c1_108, %c0_109, %c0_110] : memref<3x128x512xbf16, #tpu.memory_space<vmem>>, vector<1x128x512xbf16>
    %237 = vector.shape_cast %236 : vector<1x128x512xbf16> to vector<128x512xbf16>
    %238 = arith.truncf %235 : vector<32x128xf32> to vector<32x128xbf16>
    %cst_111 = arith.constant dense<0.000000e+00> : vector<32x512xf32>
    %239 = tpu.matmul %238, %237, %cst_111 {dimension_numbers = #tpu.dot_dimension_numbers<[1], [0], [0], [1], [0, 0, 1, 1], [], []>} : vector<32x128xbf16>, vector<128x512xbf16>, vector<32x512xf32> -> vector<32x512xf32>
    %c1_112 = arith.constant 1 : index
    %c0_113 = arith.constant 0 : index
    %c0_114 = arith.constant 0 : index
    %240 = vector.load %arg13[%c1_112, %c0_113, %c0_114] : memref<3x1x512xf32, #tpu.memory_space<vmem>>, vector<1x1x512xf32>
    %241 = vector.shape_cast %240 : vector<1x1x512xf32> to vector<1x512xf32>
    %242 = vector.broadcast %241 : vector<1x512xf32> to vector<32x512xf32>
    %243 = arith.addf %239, %242 : vector<32x512xf32>
    %cst_115 = arith.constant 0.000000e+00 : f32
    %244 = vector.broadcast %cst_115 : f32 to vector<32x512xf32>
    %245 = arith.maximumf %243, %244 : vector<32x512xf32>
    %c1_116 = arith.constant 1 : index
    %c0_117 = arith.constant 0 : index
    %c0_118 = arith.constant 0 : index
    %246 = vector.load %arg14[%c1_116, %c0_117, %c0_118] : memref<3x512x128xbf16, #tpu.memory_space<vmem>>, vector<1x512x128xbf16>
    %247 = vector.shape_cast %246 : vector<1x512x128xbf16> to vector<512x128xbf16>
    %248 = arith.truncf %245 : vector<32x512xf32> to vector<32x512xbf16>
    %cst_119 = arith.constant dense<0.000000e+00> : vector<32x128xf32>
    %249 = tpu.matmul %248, %247, %cst_119 {dimension_numbers = #tpu.dot_dimension_numbers<[1], [0], [0], [1], [0, 0, 1, 1], [], []>} : vector<32x512xbf16>, vector<512x128xbf16>, vector<32x128xf32> -> vector<32x128xf32>
    %250 = arith.addf %209, %249 : vector<32x128xf32>
    %c1_120 = arith.constant 1 : index
    %c0_121 = arith.constant 0 : index
    %c0_122 = arith.constant 0 : index
    %251 = vector.load %arg15[%c1_120, %c0_121, %c0_122] : memref<3x1x128xf32, #tpu.memory_space<vmem>>, vector<1x1x128xf32>
    %252 = vector.shape_cast %251 : vector<1x1x128xf32> to vector<1x128xf32>
    %253 = vector.broadcast %252 : vector<1x128xf32> to vector<32x128xf32>
    %254 = arith.addf %250, %253 : vector<32x128xf32>
    %c2 = arith.constant 2 : index
    %c0_123 = arith.constant 0 : index
    %c0_124 = arith.constant 0 : index
    %255 = vector.load %arg4[%c2, %c0_123, %c0_124] : memref<3x1x128xf32, #tpu.memory_space<vmem>>, vector<1x1x128xf32>
    %256 = vector.shape_cast %255 : vector<1x1x128xf32> to vector<1x128xf32>
    %c2_125 = arith.constant 2 : index
    %c0_126 = arith.constant 0 : index
    %c0_127 = arith.constant 0 : index
    %257 = vector.load %arg5[%c2_125, %c0_126, %c0_127] : memref<3x1x128xf32, #tpu.memory_space<vmem>>, vector<1x1x128xf32>
    %258 = vector.shape_cast %257 : vector<1x1x128xf32> to vector<1x128xf32>
    %cst_128 = arith.constant dense<0.000000e+00> : vector<32xf32>
    %259 = vector.multi_reduction <add>, %254, %cst_128 [1] : vector<32x128xf32> to vector<32xf32>
    %260 = vector.shape_cast %259 : vector<32xf32> to vector<32x1xf32>
    %cst_129 = arith.constant 1.280000e+02 : f32
    %261 = vector.broadcast %cst_129 : f32 to vector<32x1xf32>
    %262 = arith.divf %260, %261 : vector<32x1xf32>
    %263 = vector.broadcast %262 : vector<32x1xf32> to vector<32x128xf32>
    %264 = arith.subf %254, %263 : vector<32x128xf32>
    %265 = arith.mulf %264, %264 : vector<32x128xf32>
    %cst_130 = arith.constant dense<0.000000e+00> : vector<32xf32>
    %266 = vector.multi_reduction <add>, %265, %cst_130 [1] : vector<32x128xf32> to vector<32xf32>
    %267 = vector.shape_cast %266 : vector<32xf32> to vector<32x1xf32>
    %cst_131 = arith.constant 1.280000e+02 : f32
    %268 = vector.broadcast %cst_131 : f32 to vector<32x1xf32>
    %269 = arith.divf %267, %268 : vector<32x1xf32>
    %270 = vector.broadcast %262 : vector<32x1xf32> to vector<32x128xf32>
    %271 = arith.subf %254, %270 : vector<32x128xf32>
    %cst_132 = arith.constant 9.99999974E-6 : f32
    %272 = vector.broadcast %cst_132 : f32 to vector<32x1xf32>
    %273 = arith.addf %269, %272 : vector<32x1xf32>
    %274 = math.rsqrt %273 : vector<32x1xf32>
    %275 = vector.broadcast %274 : vector<32x1xf32> to vector<32x128xf32>
    %276 = arith.mulf %271, %275 : vector<32x128xf32>
    %277 = vector.broadcast %256 : vector<1x128xf32> to vector<32x128xf32>
    %278 = arith.mulf %276, %277 : vector<32x128xf32>
    %279 = vector.broadcast %258 : vector<1x128xf32> to vector<32x128xf32>
    %280 = arith.addf %278, %279 : vector<32x128xf32>
    %c2_133 = arith.constant 2 : index
    %c0_134 = arith.constant 0 : index
    %c0_135 = arith.constant 0 : index
    %281 = vector.load %arg6[%c2_133, %c0_134, %c0_135] : memref<3x128x384xbf16, #tpu.memory_space<vmem>>, vector<1x128x384xbf16>
    %282 = vector.shape_cast %281 : vector<1x128x384xbf16> to vector<128x384xbf16>
    %283 = arith.truncf %280 : vector<32x128xf32> to vector<32x128xbf16>
    %cst_136 = arith.constant dense<0.000000e+00> : vector<32x384xf32>
    %284 = tpu.matmul %283, %282, %cst_136 {dimension_numbers = #tpu.dot_dimension_numbers<[1], [0], [0], [1], [0, 0, 1, 1], [], []>} : vector<32x128xbf16>, vector<128x384xbf16>, vector<32x384xf32> -> vector<32x384xf32>
    %c2_137 = arith.constant 2 : index
    %c0_138 = arith.constant 0 : index
    %c0_139 = arith.constant 0 : index
    %285 = vector.load %arg7[%c2_137, %c0_138, %c0_139] : memref<3x1x384xf32, #tpu.memory_space<vmem>>, vector<1x1x384xf32>
    %286 = vector.shape_cast %285 : vector<1x1x384xf32> to vector<1x384xf32>
    %287 = vector.broadcast %286 : vector<1x384xf32> to vector<32x384xf32>
    %288 = arith.addf %284, %287 : vector<32x384xf32>
    %289 = vector.shape_cast %288 : vector<32x384xf32> to vector<2x16x384xf32>
    %290 = vector.extract_strided_slice %289 {offsets = [0, 0, 0], sizes = [2, 16, 128], strides = [1, 1, 1]} : vector<2x16x384xf32> to vector<2x16x128xf32>
    %291 = vector.extract_strided_slice %289 {offsets = [0, 0, 128], sizes = [2, 16, 128], strides = [1, 1, 1]} : vector<2x16x384xf32> to vector<2x16x128xf32>
    %292 = vector.extract_strided_slice %289 {offsets = [0, 0, 256], sizes = [2, 16, 128], strides = [1, 1, 1]} : vector<2x16x384xf32> to vector<2x16x128xf32>
    %293 = arith.truncf %290 : vector<2x16x128xf32> to vector<2x16x128xbf16>
    %294 = arith.truncf %291 : vector<2x16x128xf32> to vector<2x16x128xbf16>
    "tpu.trace_start"() <{level = 10 : i32, message = "bqd,bkd->bqk"}> : () -> ()
    %cst_140 = arith.constant dense<0.000000e+00> : vector<2x16x16xf32>
    %295 = tpu.matmul %293, %294, %cst_140 {dimension_numbers = #tpu.dot_dimension_numbers<[2], [2], [1], [1], [0, 0, 0, 1, 1, 1], [0], [0]>} : vector<2x16x128xbf16>, vector<2x16x128xbf16>, vector<2x16x16xf32> -> vector<2x16x16xf32>
    "tpu.trace_stop"() : () -> ()
    %cst_141 = arith.constant 0.0883883461 : f32
    %296 = vector.broadcast %cst_141 : f32 to vector<2x16x16xf32>
    %297 = arith.mulf %295, %296 : vector<2x16x16xf32>
    %cst_142 = arith.constant -3.40282347E+38 : f32
    %298 = vector.broadcast %cst_142 : f32 to vector<2x16x16xf32>
    %299 = arith.select %28, %297, %298 : vector<2x16x16xi1>, vector<2x16x16xf32>
    %cst_143 = arith.constant dense<0xFF800000> : vector<2x16xf32>
    %300 = vector.multi_reduction <maximumf>, %299, %cst_143 [2] : vector<2x16x16xf32> to vector<2x16xf32>
    %301 = vector.shape_cast %300 : vector<2x16xf32> to vector<2x16x1xf32>
    %302 = vector.broadcast %301 : vector<2x16x1xf32> to vector<2x16x16xf32>
    %303 = arith.subf %299, %302 : vector<2x16x16xf32>
    %304 = math.exp %303 : vector<2x16x16xf32>
    %cst_144 = arith.constant dense<0.000000e+00> : vector<2x16xf32>
    %305 = vector.multi_reduction <add>, %304, %cst_144 [2] : vector<2x16x16xf32> to vector<2x16xf32>
    %306 = vector.shape_cast %305 : vector<2x16xf32> to vector<2x16x1xf32>
    %307 = tpu.reciprocal %306 {approx = true} : vector<2x16x1xf32> -> vector<2x16x1xf32>
    %308 = vector.broadcast %307 : vector<2x16x1xf32> to vector<2x16x16xf32>
    %309 = arith.mulf %304, %308 : vector<2x16x16xf32>
    %310 = arith.truncf %309 : vector<2x16x16xf32> to vector<2x16x16xbf16>
    %311 = arith.truncf %292 : vector<2x16x128xf32> to vector<2x16x128xbf16>
    "tpu.trace_start"() <{level = 10 : i32, message = "bqk,bkd->bqd"}> : () -> ()
    %cst_145 = arith.constant dense<0.000000e+00> : vector<2x16x128xf32>
    %312 = tpu.matmul %310, %311, %cst_145 {dimension_numbers = #tpu.dot_dimension_numbers<[2], [1], [1], [2], [0, 0, 0, 1, 1, 2], [0], [0]>} : vector<2x16x16xbf16>, vector<2x16x128xbf16>, vector<2x16x128xf32> -> vector<2x16x128xf32>
    "tpu.trace_stop"() : () -> ()
    %313 = vector.shape_cast %312 : vector<2x16x128xf32> to vector<32x128xf32>
    %c2_146 = arith.constant 2 : index
    %c0_147 = arith.constant 0 : index
    %c0_148 = arith.constant 0 : index
    %314 = vector.load %arg8[%c2_146, %c0_147, %c0_148] : memref<3x128x128xbf16, #tpu.memory_space<vmem>>, vector<1x128x128xbf16>
    %315 = vector.shape_cast %314 : vector<1x128x128xbf16> to vector<128x128xbf16>
    %316 = arith.truncf %313 : vector<32x128xf32> to vector<32x128xbf16>
    %cst_149 = arith.constant dense<0.000000e+00> : vector<32x128xf32>
    %317 = tpu.matmul %316, %315, %cst_149 {dimension_numbers = #tpu.dot_dimension_numbers<[1], [0], [0], [1], [0, 0, 1, 1], [], []>} : vector<32x128xbf16>, vector<128x128xbf16>, vector<32x128xf32> -> vector<32x128xf32>
    %318 = arith.addf %254, %317 : vector<32x128xf32>
    %c2_150 = arith.constant 2 : index
    %c0_151 = arith.constant 0 : index
    %c0_152 = arith.constant 0 : index
    %319 = vector.load %arg9[%c2_150, %c0_151, %c0_152] : memref<3x1x128xf32, #tpu.memory_space<vmem>>, vector<1x1x128xf32>
    %320 = vector.shape_cast %319 : vector<1x1x128xf32> to vector<1x128xf32>
    %321 = vector.broadcast %320 : vector<1x128xf32> to vector<32x128xf32>
    %322 = arith.addf %318, %321 : vector<32x128xf32>
    %c2_153 = arith.constant 2 : index
    %c0_154 = arith.constant 0 : index
    %c0_155 = arith.constant 0 : index
    %323 = vector.load %arg10[%c2_153, %c0_154, %c0_155] : memref<3x1x128xf32, #tpu.memory_space<vmem>>, vector<1x1x128xf32>
    %324 = vector.shape_cast %323 : vector<1x1x128xf32> to vector<1x128xf32>
    %c2_156 = arith.constant 2 : index
    %c0_157 = arith.constant 0 : index
    %c0_158 = arith.constant 0 : index
    %325 = vector.load %arg11[%c2_156, %c0_157, %c0_158] : memref<3x1x128xf32, #tpu.memory_space<vmem>>, vector<1x1x128xf32>
    %326 = vector.shape_cast %325 : vector<1x1x128xf32> to vector<1x128xf32>
    %cst_159 = arith.constant dense<0.000000e+00> : vector<32xf32>
    %327 = vector.multi_reduction <add>, %322, %cst_159 [1] : vector<32x128xf32> to vector<32xf32>
    %328 = vector.shape_cast %327 : vector<32xf32> to vector<32x1xf32>
    %cst_160 = arith.constant 1.280000e+02 : f32
    %329 = vector.broadcast %cst_160 : f32 to vector<32x1xf32>
    %330 = arith.divf %328, %329 : vector<32x1xf32>
    %331 = vector.broadcast %330 : vector<32x1xf32> to vector<32x128xf32>
    %332 = arith.subf %322, %331 : vector<32x128xf32>
    %333 = arith.mulf %332, %332 : vector<32x128xf32>
    %cst_161 = arith.constant dense<0.000000e+00> : vector<32xf32>
    %334 = vector.multi_reduction <add>, %333, %cst_161 [1] : vector<32x128xf32> to vector<32xf32>
    %335 = vector.shape_cast %334 : vector<32xf32> to vector<32x1xf32>
    %cst_162 = arith.constant 1.280000e+02 : f32
    %336 = vector.broadcast %cst_162 : f32 to vector<32x1xf32>
    %337 = arith.divf %335, %336 : vector<32x1xf32>
    %338 = vector.broadcast %330 : vector<32x1xf32> to vector<32x128xf32>
    %339 = arith.subf %322, %338 : vector<32x128xf32>
    %cst_163 = arith.constant 9.99999974E-6 : f32
    %340 = vector.broadcast %cst_163 : f32 to vector<32x1xf32>
    %341 = arith.addf %337, %340 : vector<32x1xf32>
    %342 = math.rsqrt %341 : vector<32x1xf32>
    %343 = vector.broadcast %342 : vector<32x1xf32> to vector<32x128xf32>
    %344 = arith.mulf %339, %343 : vector<32x128xf32>
    %345 = vector.broadcast %324 : vector<1x128xf32> to vector<32x128xf32>
    %346 = arith.mulf %344, %345 : vector<32x128xf32>
    %347 = vector.broadcast %326 : vector<1x128xf32> to vector<32x128xf32>
    %348 = arith.addf %346, %347 : vector<32x128xf32>
    %c2_164 = arith.constant 2 : index
    %c0_165 = arith.constant 0 : index
    %c0_166 = arith.constant 0 : index
    %349 = vector.load %arg12[%c2_164, %c0_165, %c0_166] : memref<3x128x512xbf16, #tpu.memory_space<vmem>>, vector<1x128x512xbf16>
    %350 = vector.shape_cast %349 : vector<1x128x512xbf16> to vector<128x512xbf16>
    %351 = arith.truncf %348 : vector<32x128xf32> to vector<32x128xbf16>
    %cst_167 = arith.constant dense<0.000000e+00> : vector<32x512xf32>
    %352 = tpu.matmul %351, %350, %cst_167 {dimension_numbers = #tpu.dot_dimension_numbers<[1], [0], [0], [1], [0, 0, 1, 1], [], []>} : vector<32x128xbf16>, vector<128x512xbf16>, vector<32x512xf32> -> vector<32x512xf32>
    %c2_168 = arith.constant 2 : index
    %c0_169 = arith.constant 0 : index
    %c0_170 = arith.constant 0 : index
    %353 = vector.load %arg13[%c2_168, %c0_169, %c0_170] : memref<3x1x512xf32, #tpu.memory_space<vmem>>, vector<1x1x512xf32>
    %354 = vector.shape_cast %353 : vector<1x1x512xf32> to vector<1x512xf32>
    %355 = vector.broadcast %354 : vector<1x512xf32> to vector<32x512xf32>
    %356 = arith.addf %352, %355 : vector<32x512xf32>
    %cst_171 = arith.constant 0.000000e+00 : f32
    %357 = vector.broadcast %cst_171 : f32 to vector<32x512xf32>
    %358 = arith.maximumf %356, %357 : vector<32x512xf32>
    %c2_172 = arith.constant 2 : index
    %c0_173 = arith.constant 0 : index
    %c0_174 = arith.constant 0 : index
    %359 = vector.load %arg14[%c2_172, %c0_173, %c0_174] : memref<3x512x128xbf16, #tpu.memory_space<vmem>>, vector<1x512x128xbf16>
    %360 = vector.shape_cast %359 : vector<1x512x128xbf16> to vector<512x128xbf16>
    %361 = arith.truncf %358 : vector<32x512xf32> to vector<32x512xbf16>
    %cst_175 = arith.constant dense<0.000000e+00> : vector<32x128xf32>
    %362 = tpu.matmul %361, %360, %cst_175 {dimension_numbers = #tpu.dot_dimension_numbers<[1], [0], [0], [1], [0, 0, 1, 1], [], []>} : vector<32x512xbf16>, vector<512x128xbf16>, vector<32x128xf32> -> vector<32x128xf32>
    %363 = arith.addf %322, %362 : vector<32x128xf32>
    %c2_176 = arith.constant 2 : index
    %c0_177 = arith.constant 0 : index
    %c0_178 = arith.constant 0 : index
    %364 = vector.load %arg15[%c2_176, %c0_177, %c0_178] : memref<3x1x128xf32, #tpu.memory_space<vmem>>, vector<1x1x128xf32>
    %365 = vector.shape_cast %364 : vector<1x1x128xf32> to vector<1x128xf32>
    %366 = vector.broadcast %365 : vector<1x128xf32> to vector<32x128xf32>
    %367 = arith.addf %363, %366 : vector<32x128xf32>
    %c0_179 = arith.constant 0 : index
    %c0_180 = arith.constant 0 : index
    %368 = vector.load %arg16[%c0_179, %c0_180] : memref<1x128xf32, #tpu.memory_space<vmem>>, vector<1x128xf32>
    %c0_181 = arith.constant 0 : index
    %c0_182 = arith.constant 0 : index
    %369 = vector.load %arg17[%c0_181, %c0_182] : memref<1x128xf32, #tpu.memory_space<vmem>>, vector<1x128xf32>
    %cst_183 = arith.constant dense<0.000000e+00> : vector<32xf32>
    %370 = vector.multi_reduction <add>, %367, %cst_183 [1] : vector<32x128xf32> to vector<32xf32>
    %371 = vector.shape_cast %370 : vector<32xf32> to vector<32x1xf32>
    %cst_184 = arith.constant 1.280000e+02 : f32
    %372 = vector.broadcast %cst_184 : f32 to vector<32x1xf32>
    %373 = arith.divf %371, %372 : vector<32x1xf32>
    %374 = vector.broadcast %373 : vector<32x1xf32> to vector<32x128xf32>
    %375 = arith.subf %367, %374 : vector<32x128xf32>
    %376 = arith.mulf %375, %375 : vector<32x128xf32>
    %cst_185 = arith.constant dense<0.000000e+00> : vector<32xf32>
    %377 = vector.multi_reduction <add>, %376, %cst_185 [1] : vector<32x128xf32> to vector<32xf32>
    %378 = vector.shape_cast %377 : vector<32xf32> to vector<32x1xf32>
    %cst_186 = arith.constant 1.280000e+02 : f32
    %379 = vector.broadcast %cst_186 : f32 to vector<32x1xf32>
    %380 = arith.divf %378, %379 : vector<32x1xf32>
    %381 = vector.broadcast %373 : vector<32x1xf32> to vector<32x128xf32>
    %382 = arith.subf %367, %381 : vector<32x128xf32>
    %cst_187 = arith.constant 9.99999974E-6 : f32
    %383 = vector.broadcast %cst_187 : f32 to vector<32x1xf32>
    %384 = arith.addf %380, %383 : vector<32x1xf32>
    %385 = math.rsqrt %384 : vector<32x1xf32>
    %386 = vector.broadcast %385 : vector<32x1xf32> to vector<32x128xf32>
    %387 = arith.mulf %382, %386 : vector<32x128xf32>
    %388 = vector.broadcast %368 : vector<1x128xf32> to vector<32x128xf32>
    %389 = arith.mulf %387, %388 : vector<32x128xf32>
    %390 = vector.broadcast %369 : vector<1x128xf32> to vector<32x128xf32>
    %391 = arith.addf %389, %390 : vector<32x128xf32>
    %c0_188 = arith.constant 0 : index
    %c0_189 = arith.constant 0 : index
    %392 = vector.load %arg18[%c0_188, %c0_189] : memref<128x128xbf16, #tpu.memory_space<vmem>>, vector<128x128xbf16>
    %393 = arith.truncf %391 : vector<32x128xf32> to vector<32x128xbf16>
    %cst_190 = arith.constant dense<0.000000e+00> : vector<32x128xf32>
    %394 = tpu.matmul %393, %392, %cst_190 {dimension_numbers = #tpu.dot_dimension_numbers<[1], [0], [0], [1], [0, 0, 1, 1], [], []>} : vector<32x128xbf16>, vector<128x128xbf16>, vector<32x128xf32> -> vector<32x128xf32>
    %c0_191 = arith.constant 0 : index
    %c0_192 = arith.constant 0 : index
    %395 = vector.load %arg19[%c0_191, %c0_192] : memref<1x128xf32, #tpu.memory_space<vmem>>, vector<1x128xf32>
    %396 = vector.broadcast %395 : vector<1x128xf32> to vector<32x128xf32>
    %397 = arith.addf %394, %396 : vector<32x128xf32>
    %398 = tpu.iota {dimensions = array<i32: 1>} : vector<32x128xi32>
    %c0_i32 = arith.constant 0 : i32
    %399 = vector.broadcast %c0_i32 : i32 to vector<32x128xi32>
    %400 = arith.cmpi eq, %398, %399 : vector<32x128xi32>
    %401 = math.tanh %397 : vector<32x128xf32>
    %c1_i32 = arith.constant 1 : i32
    %402 = vector.broadcast %c1_i32 : i32 to vector<32x128xi32>
    %403 = arith.cmpi eq, %398, %402 : vector<32x128xi32>
    %cst_193 = arith.constant 0.000000e+00 : f32
    %404 = vector.broadcast %cst_193 : f32 to vector<32x128xf32>
    %405 = arith.subf %404, %397 : vector<32x128xf32>
    %406 = math.exp %405 : vector<32x128xf32>
    %cst_194 = arith.constant 1.000000e+00 : f32
    %407 = vector.broadcast %cst_194 : f32 to vector<32x128xf32>
    %408 = arith.addf %407, %406 : vector<32x128xf32>
    %cst_195 = arith.constant 1.000000e+00 : f32
    %409 = vector.broadcast %cst_195 : f32 to vector<32x128xf32>
    %410 = arith.divf %409, %408 : vector<32x128xf32>
    %411 = arith.select %403, %410, %397 : vector<32x128xi1>, vector<32x128xf32>
    %412 = arith.select %400, %401, %411 : vector<32x128xi1>, vector<32x128xf32>
    %413 = vector.shape_cast %412 : vector<32x128xf32> to vector<2x16x128xf32>
    %c0_196 = arith.constant 0 : index
    %c0_197 = arith.constant 0 : index
    %c0_198 = arith.constant 0 : index
    %414 = vector.load %arg20[%c0_196, %c0_197, %c0_198] : memref<2x16x128xf32, #tpu.memory_space<vmem>>, vector<2x16x128xf32>
    tpu.vector_store %arg20[%c0_196, %c0_197, %c0_198], %413 {strides = array<i32>} : memref<2x16x128xf32, #tpu.memory_space<vmem>>, vector<2x16x128xf32>,
    return
  }
  func.func @transform_0(%arg0: i32) -> (i32, i32, i32) {
    %c0_i32 = arith.constant 0 : i32
    %c0_i32_0 = arith.constant 0 : i32
    %c0_i32_1 = arith.constant 0 : i32
    return %arg0, %c0_i32, %c0_i32_0 : i32, i32, i32
  }
  func.func @transform_1(%arg0: i32) -> (i32, i32) {
    %c0_i32 = arith.constant 0 : i32
    %c0_i32_0 = arith.constant 0 : i32
    %c0_i32_1 = arith.constant 0 : i32
    return %c0_i32, %c0_i32_0 : i32, i32
  }
  func.func @transform_2(%arg0: i32) -> (i32, i32) {
    %c0_i32 = arith.constant 0 : i32
    %c0_i32_0 = arith.constant 0 : i32
    %c0_i32_1 = arith.constant 0 : i32
    return %c0_i32, %c0_i32_0 : i32, i32
  }
  func.func @transform_3(%arg0: i32) -> (i32, i32, i32) {
    %c0_i32 = arith.constant 0 : i32
    %c0_i32_0 = arith.constant 0 : i32
    %c0_i32_1 = arith.constant 0 : i32
    %c0_i32_2 = arith.constant 0 : i32
    return %c0_i32, %c0_i32_0, %c0_i32_1 : i32, i32, i32
  }
  func.func @transform_4(%arg0: i32) -> (i32, i32, i32) {
    %c0_i32 = arith.constant 0 : i32
    %c0_i32_0 = arith.constant 0 : i32
    %c0_i32_1 = arith.constant 0 : i32
    %c0_i32_2 = arith.constant 0 : i32
    return %c0_i32, %c0_i32_0, %c0_i32_1 : i32, i32, i32
  }
  func.func @transform_5(%arg0: i32) -> (i32, i32, i32) {
    %c0_i32 = arith.constant 0 : i32
    %c0_i32_0 = arith.constant 0 : i32
    %c0_i32_1 = arith.constant 0 : i32
    %c0_i32_2 = arith.constant 0 : i32
    return %c0_i32, %c0_i32_0, %c0_i32_1 : i32, i32, i32
  }
  func.func @transform_6(%arg0: i32) -> (i32, i32, i32) {
    %c0_i32 = arith.constant 0 : i32
    %c0_i32_0 = arith.constant 0 : i32
    %c0_i32_1 = arith.constant 0 : i32
    %c0_i32_2 = arith.constant 0 : i32
    return %c0_i32, %c0_i32_0, %c0_i32_1 : i32, i32, i32
  }
  func.func @transform_7(%arg0: i32) -> (i32, i32, i32) {
    %c0_i32 = arith.constant 0 : i32
    %c0_i32_0 = arith.constant 0 : i32
    %c0_i32_1 = arith.constant 0 : i32
    %c0_i32_2 = arith.constant 0 : i32
    return %c0_i32, %c0_i32_0, %c0_i32_1 : i32, i32, i32
  }
  func.func @transform_8(%arg0: i32) -> (i32, i32, i32) {
    %c0_i32 = arith.constant 0 : i32
    %c0_i32_0 = arith.constant 0 : i32
    %c0_i32_1 = arith.constant 0 : i32
    %c0_i32_2 = arith.constant 0 : i32
    return %c0_i32, %c0_i32_0, %c0_i32_1 : i32, i32, i32
  }
  func.func @transform_9(%arg0: i32) -> (i32, i32, i32) {
    %c0_i32 = arith.constant 0 : i32
    %c0_i32_0 = arith.constant 0 : i32
    %c0_i32_1 = arith.constant 0 : i32
    %c0_i32_2 = arith.constant 0 : i32
    return %c0_i32, %c0_i32_0, %c0_i32_1 : i32, i32, i32
  }
  func.func @transform_10(%arg0: i32) -> (i32, i32, i32) {
    %c0_i32 = arith.constant 0 : i32
    %c0_i32_0 = arith.constant 0 : i32
    %c0_i32_1 = arith.constant 0 : i32
    %c0_i32_2 = arith.constant 0 : i32
    return %c0_i32, %c0_i32_0, %c0_i32_1 : i32, i32, i32
  }
  func.func @transform_11(%arg0: i32) -> (i32, i32, i32) {
    %c0_i32 = arith.constant 0 : i32
    %c0_i32_0 = arith.constant 0 : i32
    %c0_i32_1 = arith.constant 0 : i32
    %c0_i32_2 = arith.constant 0 : i32
    return %c0_i32, %c0_i32_0, %c0_i32_1 : i32, i32, i32
  }
  func.func @transform_12(%arg0: i32) -> (i32, i32, i32) {
    %c0_i32 = arith.constant 0 : i32
    %c0_i32_0 = arith.constant 0 : i32
    %c0_i32_1 = arith.constant 0 : i32
    %c0_i32_2 = arith.constant 0 : i32
    return %c0_i32, %c0_i32_0, %c0_i32_1 : i32, i32, i32
  }
  func.func @transform_13(%arg0: i32) -> (i32, i32, i32) {
    %c0_i32 = arith.constant 0 : i32
    %c0_i32_0 = arith.constant 0 : i32
    %c0_i32_1 = arith.constant 0 : i32
    %c0_i32_2 = arith.constant 0 : i32
    return %c0_i32, %c0_i32_0, %c0_i32_1 : i32, i32, i32
  }
  func.func @transform_14(%arg0: i32) -> (i32, i32, i32) {
    %c0_i32 = arith.constant 0 : i32
    %c0_i32_0 = arith.constant 0 : i32
    %c0_i32_1 = arith.constant 0 : i32
    %c0_i32_2 = arith.constant 0 : i32
    return %c0_i32, %c0_i32_0, %c0_i32_1 : i32, i32, i32
  }
  func.func @transform_15(%arg0: i32) -> (i32, i32) {
    %c0_i32 = arith.constant 0 : i32
    %c0_i32_0 = arith.constant 0 : i32
    %c0_i32_1 = arith.constant 0 : i32
    return %c0_i32, %c0_i32_0 : i32, i32
  }
  func.func @transform_16(%arg0: i32) -> (i32, i32) {
    %c0_i32 = arith.constant 0 : i32
    %c0_i32_0 = arith.constant 0 : i32
    %c0_i32_1 = arith.constant 0 : i32
    return %c0_i32, %c0_i32_0 : i32, i32
  }
  func.func @transform_17(%arg0: i32) -> (i32, i32) {
    %c0_i32 = arith.constant 0 : i32
    %c0_i32_0 = arith.constant 0 : i32
    %c0_i32_1 = arith.constant 0 : i32
    return %c0_i32, %c0_i32_0 : i32, i32
  }
  func.func @transform_18(%arg0: i32) -> (i32, i32) {
    %c0_i32 = arith.constant 0 : i32
    %c0_i32_0 = arith.constant 0 : i32
    %c0_i32_1 = arith.constant 0 : i32
    return %c0_i32, %c0_i32_0 : i32, i32
  }
  func.func @transform_19(%arg0: i32) -> (i32, i32, i32) {
    %c0_i32 = arith.constant 0 : i32
    %c0_i32_0 = arith.constant 0 : i32
    %c0_i32_1 = arith.constant 0 : i32
    return %arg0, %c0_i32, %c0_i32_0 : i32, i32, i32
  }
}

</mosaic_0001>

<llo_original>
// kernel: agent_transformer_forward.2
$region0: #{agent_transformer_forward.2}
  #allocation0 [shape = 'u32[]', space=smem, size = 0x4, offset = 0x4, fixed_abs, tag = 'smem constant byte address 0x4 - core index']
  #allocation1 [shape = 'u32[72,128]{1,0:T(1,128)}', space=vmem, size = 0x9000, scoped, tag = 'internal scratch']
  %s0 = inlined_call_operand.vmem [shape: f32[8,768], index: 0, kind: input, shape index: {}]
  %s1 = inlined_call_operand.vmem [shape: f32[8,32], index: 1, kind: input, shape index: {}]
  %s2 = inlined_call_operand.vmem [shape: f32[8,128], index: 2, kind: input, shape index: {}]
  %s3 = inlined_call_operand.hbm [shape: bf16[768,128], index: 3, kind: input, shape index: {}]
  %s4 = inlined_call_operand.vmem [shape: f32[1,128], index: 4, kind: input, shape index: {}]
  %s5 = inlined_call_operand.vmem [shape: bf16[32,512], index: 5, kind: input, shape index: {}]
  %s6 = inlined_call_operand.vmem [shape: f32[1,512], index: 6, kind: input, shape index: {}]
  %s7 = inlined_call_operand.vmem [shape: f32[1,128], index: 7, kind: input, shape index: {}]
  %s8 = inlined_call_operand.vmem [shape: f32[1,128], index: 8, kind: input, shape index: {}]
  %s9 = inlined_call_operand.vmem [shape: f32[1,128], index: 9, kind: input, shape index: {}]
  %s10 = inlined_call_operand.vmem [shape: f32[1,128], index: 10, kind: input, shape index: {}]
  %s11 = inlined_call_operand.vmem [shape: bf16[128,128], index: 11, kind: input, shape index: {}]
  %s12 = inlined_call_operand.hbm [shape: bf16[128,128], index: 12, kind: input, shape index: {}]
  %s13 = inlined_call_operand.hbm [shape: bf16[128,128], index: 13, kind: input, shape index: {}]
  %s14 = inlined_call_operand.vmem [shape: f32[1,128], index: 14, kind: input, shape index: {}]
  %s15 = inlined_call_operand.vmem [shape: f32[8,128], index: 15, kind: output, shape index: {0}]
  %s16 = inlined_call_operand.vmem [shape: f32[8,128], index: 16, kind: output, shape index: {1}]
  %s17 = inlined_call_operand.vmem [shape: f32[8,128], index: 17, kind: output, shape index: {2}]
  %18 = xla_tuple %s15, %s16, %s17
  %s19 = sld [smem:[#allocation0]]
  $region98: #{agent_transformer_forward.2} parent=0
    _
  %s21 = ssub.s32 1, %s19
  %s22 = scalar_select 0, %s21, %s19
  $region1: #{agent_transformer_forward.2} parent=0
    #allocation2 [shape = 'u8[196608]{0}', space=vmem, size = 0x30000, scoped, tag = 'input window, operand 3, single buffered']
    #allocation3 [shape = 's32[1]{0}', space=sflag, size = 0x4, scoped, tag = 'scoped memory for agent_transformer_forward.2']
    #allocation4 [shape = 'u8[32768]{0}', space=vmem, size = 0x8000, scoped, tag = 'input window, operand 12, single buffered']
    #allocation5 [shape = 's32[1]{0}', space=sflag, size = 0x4, scoped, tag = 'scoped memory for agent_transformer_forward.2']
    #allocation6 [shape = 'u8[32768]{0}', space=vmem, size = 0x8000, scoped, tag = 'input window, operand 13, single buffered']
    %23 = vsyncpa [#allocation3], 0
    %24 = vsyncpa [#allocation5], 0
    // Predicated region
    $region2: #{agent_transformer_forward.2} parent=1 // pred_check
      _
    $region3: #{agent_transformer_forward.2} parent=1 // pred_check_branch
      %26 = sbr.rel (0) target = $region5
    $region4: #{agent_transformer_forward.2} parent=1 // pred_region
      _
    $region5: #{agent_transformer_forward.2} parent=1 // pred_fallthru
      _
    // Predicated region
    $region6: #{agent_transformer_forward.2} parent=1 // pred_check
      _
    $region7: #{agent_transformer_forward.2} parent=1 // pred_check_branch
      %28 = sbr.rel (0) target = $region9
    $region8: #{agent_transformer_forward.2} parent=1 // pred_region
      _
    $region9: #{agent_transformer_forward.2} parent=1 // pred_fallthru
      _
    // Predicated region
    $region10: #{agent_transformer_forward.2} parent=1 // pred_check
      _
    $region11: #{agent_transformer_forward.2} parent=1 // pred_check_branch
      %30 = sbr.rel (0) target = $region13
    $region12: #{agent_transformer_forward.2} parent=1 // pred_region
      _
    $region13: #{agent_transformer_forward.2} parent=1 // pred_fallthru
      _
    // Predicated region
    $region14: #{agent_transformer_forward.2} parent=1 // pred_check
      _
    $region15: #{agent_transformer_forward.2} parent=1 // pred_check_branch
      %32 = sbr.rel (0) target = $region17
    $region16: #{agent_transformer_forward.2} parent=1 // pred_region
      %34 = vsyncadd [#allocation3], 0
      %s35 = sshll.u32 %s3, 4
      %s36 = int_to_ptr.hbm [resolvable:$true] %s35
      %s37 = sshll.u32 [#allocation2], 4
      %s38 = int_to_ptr.vmem [resolvable:$true] %s37
      %43 = dma.hbm_to_vmem [thread:$0]  %s36, 6144, %s38, [#allocation3], 64, 64, 4
    $region17: #{agent_transformer_forward.2} parent=1 // pred_fallthru
      _
    // Predicated region
    $region18: #{agent_transformer_forward.2} parent=1 // pred_check
      _
    $region19: #{agent_transformer_forward.2} parent=1 // pred_check_branch
      %45 = sbr.rel (0) target = $region21
    $region20: #{agent_transformer_forward.2} parent=1 // pred_region
      _
    $region21: #{agent_transformer_forward.2} parent=1 // pred_fallthru
      _
    // Predicated region
    $region22: #{agent_transformer_forward.2} parent=1 // pred_check
      _
    $region23: #{agent_transformer_forward.2} parent=1 // pred_check_branch
      %47 = sbr.rel (0) target = $region25
    $region24: #{agent_transformer_forward.2} parent=1 // pred_region
      _
    $region25: #{agent_transformer_forward.2} parent=1 // pred_fallthru
      _
    // Predicated region
    $region26: #{agent_transformer_forward.2} parent=1 // pred_check
      _
    $region27: #{agent_transformer_forward.2} parent=1 // pred_check_branch
      %49 = sbr.rel (0) target = $region29
    $region28: #{agent_transformer_forward.2} parent=1 // pred_region
      _
    $region29: #{agent_transformer_forward.2} parent=1 // pred_fallthru
      _
    // Predicated region
    $region30: #{agent_transformer_forward.2} parent=1 // pred_check
      _
    $region31: #{agent_transformer_forward.2} parent=1 // pred_check_branch
      %51 = sbr.rel (0) target = $region33
    $region32: #{agent_transformer_forward.2} parent=1 // pred_region
      _
    $region33: #{agent_transformer_forward.2} parent=1 // pred_fallthru
      _
    // Predicated region
    $region34: #{agent_transformer_forward.2} parent=1 // pred_check
      _
    $region35: #{agent_transformer_forward.2} parent=1 // pred_check_branch
      %53 = sbr.rel (0) target = $region37
    $region36: #{agent_transformer_forward.2} parent=1 // pred_region
      _
    $region37: #{agent_transformer_forward.2} parent=1 // pred_fallthru
      _
    // Predicated region
    $region38: #{agent_transformer_forward.2} parent=1 // pred_check
      _
    $region39: #{agent_transformer_forward.2} parent=1 // pred_check_branch
      %55 = sbr.rel (0) target = $region41
    $region40: #{agent_transformer_forward.2} parent=1 // pred_region
      _
    $region41: #{agent_transformer_forward.2} parent=1 // pred_fallthru
      _
    // Predicated region
    $region42: #{agent_transformer_forward.2} parent=1 // pred_check
      _
    $region43: #{agent_transformer_forward.2} parent=1 // pred_check_branch
      %57 = sbr.rel (0) target = $region45
    $region44: #{agent_transformer_forward.2} parent=1 // pred_region
      _
    $region45: #{agent_transformer_forward.2} parent=1 // pred_fallthru
      _
    // Predicated region
    $region46: #{agent_transformer_forward.2} parent=1 // pred_check
      _
    $region47: #{agent_transformer_forward.2} parent=1 // pred_check_branch
      %59 = sbr.rel (0) target = $region49
    $region48: #{agent_transformer_forward.2} parent=1 // pred_region
      _
    $region49: #{agent_transformer_forward.2} parent=1 // pred_fallthru
      _
    // Predicated region
    $region50: #{agent_transformer_forward.2} parent=1 // pred_check
      _
    $region51: #{agent_transformer_forward.2} parent=1 // pred_check_branch
      %61 = sbr.rel (0) target = $region53
    $region52: #{agent_transformer_forward.2} parent=1 // pred_region
      %63 = vsyncadd [#allocation5], 0
      %s64 = sshll.u32 %s12, 4
      %s65 = int_to_ptr.hbm [resolvable:$true] %s64
      %s66 = sshll.u32 [#allocation4], 4
      %s67 = int_to_ptr.vmem [resolvable:$true] %s66
      %72 = dma.hbm_to_vmem [thread:$0]  %s65, 1024, %s67, [#allocation5], 64, 64, 4
    $region53: #{agent_transformer_forward.2} parent=1 // pred_fallthru
      _
    // Predicated region
    $region54: #{agent_transformer_forward.2} parent=1 // pred_check
      _
    $region55: #{agent_transformer_forward.2} parent=1 // pred_check_branch
      %74 = sbr.rel (0) target = $region57
    $region56: #{agent_transformer_forward.2} parent=1 // pred_region
      %76 = vsyncadd [#allocation5], 0
      %s77 = sshll.u32 %s13, 4
      %s78 = int_to_ptr.hbm [resolvable:$true] %s77
      %s79 = sshll.u32 [#allocation6], 4
      %s80 = int_to_ptr.vmem [resolvable:$true] %s79
      %85 = dma.hbm_to_vmem [thread:$0]  %s78, 1024, %s80, [#allocation5], 64, 64, 4
    $region57: #{agent_transformer_forward.2} parent=1 // pred_fallthru
      _
    // Predicated region
    $region58: #{agent_transformer_forward.2} parent=1 // pred_check
      _
    $region59: #{agent_transformer_forward.2} parent=1 // pred_check_branch
      %87 = sbr.rel (0) target = $region61
    $region60: #{agent_transformer_forward.2} parent=1 // pred_region
      _
    $region61: #{agent_transformer_forward.2} parent=1 // pred_fallthru
      _
    // Predicated region
    $region62: #{agent_transformer_forward.2} parent=1 // pred_check
      _
    $region63: #{agent_transformer_forward.2} parent=1 // pred_check_branch
      %89 = sbr.rel (0) target = $region65
    $region64: #{agent_transformer_forward.2} parent=1 // pred_region
      %91 = dma.done [#allocation3], 6144
    $region65: #{agent_transformer_forward.2} parent=1 // pred_fallthru
      _
    // Predicated region
    $region66: #{agent_transformer_forward.2} parent=1 // pred_check
      _
    $region67: #{agent_transformer_forward.2} parent=1 // pred_check_branch
      %93 = sbr.rel (0) target = $region69
    $region68: #{agent_transformer_forward.2} parent=1 // pred_region
      %95 = dma.done [#allocation5], 1024
    $region69: #{agent_transformer_forward.2} parent=1 // pred_fallthru
      _
    // Predicated region
    $region70: #{agent_transformer_forward.2} parent=1 // pred_check
      _
    $region71: #{agent_transformer_forward.2} parent=1 // pred_check_branch
      %97 = sbr.rel (0) target = $region73
    $region72: #{agent_transformer_forward.2} parent=1 // pred_region
      %99 = dma.done [#allocation5], 1024
    $region73: #{agent_transformer_forward.2} parent=1 // pred_fallthru
      _
    %v101 = vld [vmem:[%s2] sm:$0xff]
    %v102 = vld [vmem:[%s0] sm:$0xff]
    %v103 = vld [vmem:[%s0 + $0x8] sm:$0xff]
    %v104 = vld [vmem:[%s0 + $0x10] sm:$0xff]
    %v105 = vld [vmem:[%s0 + $0x18] sm:$0xff]
    %v106 = vld [vmem:[%s0 + $0x20] sm:$0xff]
    %v107 = vld [vmem:[%s0 + $0x28] sm:$0xff]
    %v108 = vld [vmem:[#allocation2] sm:$0xf]
    %v109 = vld [vmem:[#allocation2 + $0x4] sm:$0xf]
    %v110 = vld [vmem:[#allocation2 + $0x8] sm:$0xf]
    %v111 = vld [vmem:[#allocation2 + $0xc] sm:$0xf]
    %v112 = vld [vmem:[#allocation2 + $0x10] sm:$0xf]
    %v113 = vld [vmem:[#allocation2 + $0x14] sm:$0xf]
    %v114 = vld [vmem:[#allocation2 + $0x18] sm:$0xf]
    %v115 = vld [vmem:[#allocation2 + $0x1c] sm:$0xf]
    %v116 = vld [vmem:[#allocation2 + $0x20] sm:$0xf]
    %v117 = vld [vmem:[#allocation2 + $0x24] sm:$0xf]
    %v118 = vld [vmem:[#allocation2 + $0x28] sm:$0xf]
    %v119 = vld [vmem:[#allocation2 + $0x2c] sm:$0xf]
    %v120 = vld [vmem:[#allocation2 + $0x30] sm:$0xf]
    %v121 = vld [vmem:[#allocation2 + $0x34] sm:$0xf]
    %v122 = vld [vmem:[#allocation2 + $0x38] sm:$0xf]
    %v123 = vld [vmem:[#allocation2 + $0x3c] sm:$0xf]
    %v124 = vld [vmem:[#allocation2 + $0x40] sm:$0xf]
    %v125 = vld [vmem:[#allocation2 + $0x44] sm:$0xf]
    %v126 = vld [vmem:[#allocation2 + $0x48] sm:$0xf]
    %v127 = vld [vmem:[#allocation2 + $0x4c] sm:$0xf]
    %v128 = vld [vmem:[#allocation2 + $0x50] sm:$0xf]
    %v129 = vld [vmem:[#allocation2 + $0x54] sm:$0xf]
    %v130 = vld [vmem:[#allocation2 + $0x58] sm:$0xf]
    %v131 = vld [vmem:[#allocation2 + $0x5c] sm:$0xf]
    %v132 = vld [vmem:[#allocation2 + $0x60] sm:$0xf]
    %v133 = vld [vmem:[#allocation2 + $0x64] sm:$0xf]
    %v134 = vld [vmem:[#allocation2 + $0x68] sm:$0xf]
    %v135 = vld [vmem:[#allocation2 + $0x6c] sm:$0xf]
    %v136 = vld [vmem:[#allocation2 + $0x70] sm:$0xf]
    %v137 = vld [vmem:[#allocation2 + $0x74] sm:$0xf]
    %v138 = vld [vmem:[#allocation2 + $0x78] sm:$0xf]
    %v139 = vld [vmem:[#allocation2 + $0x7c] sm:$0xf]
    %v140 = vld [vmem:[#allocation2 + $0x80] sm:$0xf]
    %v141 = vld [vmem:[#allocation2 + $0x84] sm:$0xf]
    %v142 = vld [vmem:[#allocation2 + $0x88] sm:$0xf]
    %v143 = vld [vmem:[#allocation2 + $0x8c] sm:$0xf]
    %v144 = vld [vmem:[#allocation2 + $0x90] sm:$0xf]
    %v145 = vld [vmem:[#allocation2 + $0x94] sm:$0xf]
    %v146 = vld [vmem:[#allocation2 + $0x98] sm:$0xf]
    %v147 = vld [vmem:[#allocation2 + $0x9c] sm:$0xf]
    %v148 = vld [vmem:[#allocation2 + $0xa0] sm:$0xf]
    %v149 = vld [vmem:[#allocation2 + $0xa4] sm:$0xf]
    %v150 = vld [vmem:[#allocation2 + $0xa8] sm:$0xf]
    %v151 = vld [vmem:[#allocation2 + $0xac] sm:$0xf]
    %v152 = vld [vmem:[#allocation2 + $0xb0] sm:$0xf]
    %v153 = vld [vmem:[#allocation2 + $0xb4] sm:$0xf]
    %v154 = vld [vmem:[#allocation2 + $0xb8] sm:$0xf]
    %v155 = vld [vmem:[#allocation2 + $0xbc] sm:$0xf]
    %v156 = vld [vmem:[#allocation2 + $0xc0] sm:$0xf]
    %v157 = vld [vmem:[#allocation2 + $0xc4] sm:$0xf]
    %v158 = vld [vmem:[#allocation2 + $0xc8] sm:$0xf]
    %v159 = vld [vmem:[#allocation2 + $0xcc] sm:$0xf]
    %v160 = vld [vmem:[#allocation2 + $0xd0] sm:$0xf]
    %v161 = vld [vmem:[#allocation2 + $0xd4] sm:$0xf]
    %v162 = vld [vmem:[#allocation2 + $0xd8] sm:$0xf]
    %v163 = vld [vmem:[#allocation2 + $0xdc] sm:$0xf]
    %v164 = vld [vmem:[#allocation2 + $0xe0] sm:$0xf]
    %v165 = vld [vmem:[#allocation2 + $0xe4] sm:$0xf]
    %v166 = vld [vmem:[#allocation2 + $0xe8] sm:$0xf]
    %v167 = vld [vmem:[#allocation2 + $0xec] sm:$0xf]
    %v168 = vld [vmem:[#allocation2 + $0xf0] sm:$0xf]
    %v169 = vld [vmem:[#allocation2 + $0xf4] sm:$0xf]
    %v170 = vld [vmem:[#allocation2 + $0xf8] sm:$0xf]
    %v171 = vld [vmem:[#allocation2 + $0xfc] sm:$0xf]
    %v172 = vld [vmem:[#allocation2 + $0x100] sm:$0xf]
    %v173 = vld [vmem:[#allocation2 + $0x104] sm:$0xf]
    %v174 = vld [vmem:[#allocation2 + $0x108] sm:$0xf]
    %v175 = vld [vmem:[#allocation2 + $0x10c] sm:$0xf]
    %v176 = vld [vmem:[#allocation2 + $0x110] sm:$0xf]
    %v177 = vld [vmem:[#allocation2 + $0x114] sm:$0xf]
    %v178 = vld [vmem:[#allocation2 + $0x118] sm:$0xf]
    %v179 = vld [vmem:[#allocation2 + $0x11c] sm:$0xf]
    %v180 = vld [vmem:[#allocation2 + $0x120] sm:$0xf]
    %v181 = vld [vmem:[#allocation2 + $0x124] sm:$0xf]
    %v182 = vld [vmem:[#allocation2 + $0x128] sm:$0xf]
    %v183 = vld [vmem:[#allocation2 + $0x12c] sm:$0xf]
    %v184 = vld [vmem:[#allocation2 + $0x130] sm:$0xf]
    %v185 = vld [vmem:[#allocation2 + $0x134] sm:$0xf]
    %v186 = vld [vmem:[#allocation2 + $0x138] sm:$0xf]
    %v187 = vld [vmem:[#allocation2 + $0x13c] sm:$0xf]
    %v188 = vld [vmem:[#allocation2 + $0x140] sm:$0xf]
    %v189 = vld [vmem:[#allocation2 + $0x144] sm:$0xf]
    %v190 = vld [vmem:[#allocation2 + $0x148] sm:$0xf]
    %v191 = vld [vmem:[#allocation2 + $0x14c] sm:$0xf]
    %v192 = vld [vmem:[#allocation2 + $0x150] sm:$0xf]
    %v193 = vld [vmem:[#allocation2 + $0x154] sm:$0xf]
    %v194 = vld [vmem:[#allocation2 + $0x158] sm:$0xf]
    %v195 = vld [vmem:[#allocation2 + $0x15c] sm:$0xf]
    %v196 = vld [vmem:[#allocation2 + $0x160] sm:$0xf]
    %v197 = vld [vmem:[#allocation2 + $0x164] sm:$0xf]
    %v198 = vld [vmem:[#allocation2 + $0x168] sm:$0xf]
    %v199 = vld [vmem:[#allocation2 + $0x16c] sm:$0xf]
    %v200 = vld [vmem:[#allocation2 + $0x170] sm:$0xf]
    %v201 = vld [vmem:[#allocation2 + $0x174] sm:$0xf]
    %v202 = vld [vmem:[#allocation2 + $0x178] sm:$0xf]
    %v203 = vld [vmem:[#allocation2 + $0x17c] sm:$0xf]
    %v204 = vpack.c.bf16 %v102, %v102
    %v205 = vpack.c.bf16 %v103, %v103
    %v206 = vpack.c.bf16 %v104, %v104
    %v207 = vpack.c.bf16 %v105, %v105
    %v208 = vpack.c.bf16 %v106, %v106
    %v209 = vpack.c.bf16 %v107, %v107
    %v210 = vld [vmem:[%s4] sm:$0x1]
    %v212 = vperm.slane %v210, 0
    %v310 = vunpack.c.l.b16 %v108
    %v311 = vunpack.c.l.b16 %v109
    %v312 = vunpack.c.l.b16 %v110
    %v313 = vunpack.c.l.b16 %v111
    %v314 = vunpack.c.l.b16 %v112
    %v315 = vunpack.c.l.b16 %v113
    %v316 = vunpack.c.l.b16 %v114
    %v317 = vunpack.c.l.b16 %v115
    %v318 = vunpack.c.l.b16 %v116
    %v319 = vunpack.c.l.b16 %v117
    %v320 = vunpack.c.l.b16 %v118
    %v321 = vunpack.c.l.b16 %v119
    %v322 = vunpack.c.l.b16 %v120
    %v323 = vunpack.c.l.b16 %v121
    %v324 = vunpack.c.l.b16 %v122
    %v325 = vunpack.c.l.b16 %v123
    %v326 = vunpack.c.l.b16 %v124
    %v327 = vunpack.c.l.b16 %v125
    %v328 = vunpack.c.l.b16 %v126
    %v329 = vunpack.c.l.b16 %v127
    %v330 = vunpack.c.l.b16 %v128
    %v331 = vunpack.c.l.b16 %v129
    %v332 = vunpack.c.l.b16 %v130
    %v333 = vunpack.c.l.b16 %v131
    %v334 = vunpack.c.l.b16 %v132
    %v335 = vunpack.c.l.b16 %v133
    %v336 = vunpack.c.l.b16 %v134
    %v337 = vunpack.c.l.b16 %v135
    %v338 = vunpack.c.l.b16 %v136
    %v339 = vunpack.c.l.b16 %v137
    %v340 = vunpack.c.l.b16 %v138
    %v341 = vunpack.c.l.b16 %v139
    %v342 = vunpack.c.l.b16 %v140
    %v343 = vunpack.c.l.b16 %v141
    %v344 = vunpack.c.l.b16 %v142
    %v345 = vunpack.c.l.b16 %v143
    %v346 = vunpack.c.l.b16 %v144
    %v347 = vunpack.c.l.b16 %v145
    %v348 = vunpack.c.l.b16 %v146
    %v349 = vunpack.c.l.b16 %v147
    %v350 = vunpack.c.l.b16 %v148
    %v351 = vunpack.c.l.b16 %v149
    %v352 = vunpack.c.l.b16 %v150
    %v353 = vunpack.c.l.b16 %v151
    %v354 = vunpack.c.l.b16 %v152
    %v355 = vunpack.c.l.b16 %v153
    %v356 = vunpack.c.l.b16 %v154
    %v357 = vunpack.c.l.b16 %v155
    %v358 = vunpack.c.l.b16 %v156
    %v359 = vunpack.c.l.b16 %v157
    %v360 = vunpack.c.l.b16 %v158
    %v361 = vunpack.c.l.b16 %v159
    %v362 = vunpack.c.l.b16 %v160
    %v363 = vunpack.c.l.b16 %v161
    %v364 = vunpack.c.l.b16 %v162
    %v365 = vunpack.c.l.b16 %v163
    %v366 = vunpack.c.l.b16 %v164
    %v367 = vunpack.c.l.b16 %v165
    %v368 = vunpack.c.l.b16 %v166
    %v369 = vunpack.c.l.b16 %v167
    %v370 = vunpack.c.l.b16 %v168
    %v371 = vunpack.c.l.b16 %v169
    %v372 = vunpack.c.l.b16 %v170
    %v373 = vunpack.c.l.b16 %v171
    %v374 = vunpack.c.l.b16 %v172
    %v375 = vunpack.c.l.b16 %v173
    %v376 = vunpack.c.l.b16 %v174
    %v377 = vunpack.c.l.b16 %v175
    %v378 = vunpack.c.l.b16 %v176
    %v379 = vunpack.c.l.b16 %v177
    %v380 = vunpack.c.l.b16 %v178
    %v381 = vunpack.c.l.b16 %v179
    %v382 = vunpack.c.l.b16 %v180
    %v383 = vunpack.c.l.b16 %v181
    %v384 = vunpack.c.l.b16 %v182
    %v385 = vunpack.c.l.b16 %v183
    %v386 = vunpack.c.l.b16 %v184
    %v387 = vunpack.c.l.b16 %v185
    %v388 = vunpack.c.l.b16 %v186
    %v389 = vunpack.c.l.b16 %v187
    %v390 = vunpack.c.l.b16 %v188
    %v391 = vunpack.c.l.b16 %v189
    %v392 = vunpack.c.l.b16 %v190
    %v393 = vunpack.c.l.b16 %v191
    %v394 = vunpack.c.l.b16 %v192
    %v395 = vunpack.c.l.b16 %v193
    %v396 = vunpack.c.l.b16 %v194
    %v397 = vunpack.c.l.b16 %v195
    %v398 = vunpack.c.l.b16 %v196
    %v399 = vunpack.c.l.b16 %v197
    %v400 = vunpack.c.l.b16 %v198
    %v401 = vunpack.c.l.b16 %v199
    %v402 = vunpack.c.l.b16 %v200
    %v403 = vunpack.c.l.b16 %v201
    %v404 = vunpack.c.l.b16 %v202
    %v405 = vunpack.c.l.b16 %v203
    %v406 = vpack.c.b16 %v311, %v310
    %v407 = vpack.c.b16 %v313, %v312
    %v408 = vpack.c.b16 %v315, %v314
    %v409 = vpack.c.b16 %v317, %v316
    %v410 = vpack.c.b16 %v319, %v318
    %v411 = vpack.c.b16 %v321, %v320
    %v412 = vpack.c.b16 %v323, %v322
    %v413 = vpack.c.b16 %v325, %v324
    %v414 = vpack.c.b16 %v327, %v326
    %v415 = vpack.c.b16 %v329, %v328
    %v416 = vpack.c.b16 %v331, %v330
    %v417 = vpack.c.b16 %v333, %v332
    %v418 = vpack.c.b16 %v335, %v334
    %v419 = vpack.c.b16 %v337, %v336
    %v420 = vpack.c.b16 %v339, %v338
    %v421 = vpack.c.b16 %v341, %v340
    %v422 = vpack.c.b16 %v343, %v342
    %v423 = vpack.c.b16 %v345, %v344
    %v424 = vpack.c.b16 %v347, %v346
    %v425 = vpack.c.b16 %v349, %v348
    %v426 = vpack.c.b16 %v351, %v350
    %v427 = vpack.c.b16 %v353, %v352
    %v428 = vpack.c.b16 %v355, %v354
    %v429 = vpack.c.b16 %v357, %v356
    %v430 = vpack.c.b16 %v359, %v358
    %v431 = vpack.c.b16 %v361, %v360
    %v432 = vpack.c.b16 %v363, %v362
    %v433 = vpack.c.b16 %v365, %v364
    %v434 = vpack.c.b16 %v367, %v366
    %v435 = vpack.c.b16 %v369, %v368
    %v436 = vpack.c.b16 %v371, %v370
    %v437 = vpack.c.b16 %v373, %v372
    %v438 = vpack.c.b16 %v375, %v374
    %v439 = vpack.c.b16 %v377, %v376
    %v440 = vpack.c.b16 %v379, %v378
    %v441 = vpack.c.b16 %v381, %v380
    %v442 = vpack.c.b16 %v383, %v382
    %v443 = vpack.c.b16 %v385, %v384
    %v444 = vpack.c.b16 %v387, %v386
    %v445 = vpack.c.b16 %v389, %v388
    %v446 = vpack.c.b16 %v391, %v390
    %v447 = vpack.c.b16 %v393, %v392
    %v448 = vpack.c.b16 %v395, %v394
    %v449 = vpack.c.b16 %v397, %v396
    %v450 = vpack.c.b16 %v399, %v398
    %v451 = vpack.c.b16 %v401, %v400
    %v452 = vpack.c.b16 %v403, %v402
    %v453 = vpack.c.b16 %v405, %v404
    %502 = vmatpush.bf16.msra.mxu0 %v413
    %503 = vmatpush.bf16.msra.mxu0 %v412
    %504 = vmatpush.bf16.msra.mxu0 %v411
    %505 = vmatpush.bf16.msra.mxu0 %v410
    %506 = vmatpush.bf16.msra.mxu0 %v409
    %507 = vmatpush.bf16.msra.mxu0 %v408
    %508 = vmatpush.bf16.msra.mxu0 %v407
    %509 = vmatpush.bf16.msra.mxu0 %v406
    %510 = vmatmul.bf16.gmra.mxu0 %v204
    %v511 = vpop.f32.mrf.mxu0
    %v512 = vadd.f32 %v212, %v511
    %v513 = vpop.f32.mrf.mxu0
    %514 = vdwg.mxu0
    %515 = vmatpush.bf16.msra.mxu0 %v421
    %516 = vmatpush.bf16.msra.mxu0 %v420
    %517 = vmatpush.bf16.msra.mxu0 %v419
    %518 = vmatpush.bf16.msra.mxu0 %v418
    %519 = vmatpush.bf16.msra.mxu0 %v417
    %520 = vmatpush.bf16.msra.mxu0 %v416
    %521 = vmatpush.bf16.msra.mxu0 %v415
    %522 = vmatpush.bf16.msra.mxu0 %v414
    %523 = vmatmul.bf16.gmra.mxu0 %v205
    %v524 = vpop.f32.mrf.mxu0
    %v525 = vadd.f32 %v512, %v524
    %v526 = vpop.f32.mrf.mxu0
    %527 = vdwg.mxu0
    %528 = vmatpush.bf16.msra.mxu0 %v429
    %529 = vmatpush.bf16.msra.mxu0 %v428
    %530 = vmatpush.bf16.msra.mxu0 %v427
    %531 = vmatpush.bf16.msra.mxu0 %v426
    %532 = vmatpush.bf16.msra.mxu0 %v425
    %533 = vmatpush.bf16.msra.mxu0 %v424
    %534 = vmatpush.bf16.msra.mxu0 %v423
    %535 = vmatpush.bf16.msra.mxu0 %v422
    %536 = vmatmul.bf16.gmra.mxu0 %v206
    %v537 = vpop.f32.mrf.mxu0
    %v538 = vadd.f32 %v525, %v537
    %v539 = vpop.f32.mrf.mxu0
    %540 = vdwg.mxu0
    %541 = vmatpush.bf16.msra.mxu0 %v437
    %542 = vmatpush.bf16.msra.mxu0 %v436
    %543 = vmatpush.bf16.msra.mxu0 %v435
    %544 = vmatpush.bf16.msra.mxu0 %v434
    %545 = vmatpush.bf16.msra.mxu0 %v433
    %546 = vmatpush.bf16.msra.mxu0 %v432
    %547 = vmatpush.bf16.msra.mxu0 %v431
    %548 = vmatpush.bf16.msra.mxu0 %v430
    %549 = vmatmul.bf16.gmra.mxu0 %v207
    %v550 = vpop.f32.mrf.mxu0
    %v551 = vadd.f32 %v538, %v550
    %v552 = vpop.f32.mrf.mxu0
    %553 = vdwg.mxu0
    %554 = vmatpush.bf16.msra.mxu0 %v445
    %555 = vmatpush.bf16.msra.mxu0 %v444
    %556 = vmatpush.bf16.msra.mxu0 %v443
    %557 = vmatpush.bf16.msra.mxu0 %v442
    %558 = vmatpush.bf16.msra.mxu0 %v441
    %559 = vmatpush.bf16.msra.mxu0 %v440
    %560 = vmatpush.bf16.msra.mxu0 %v439
    %561 = vmatpush.bf16.msra.mxu0 %v438
    %562 = vmatmul.bf16.gmra.mxu0 %v208
    %v563 = vpop.f32.mrf.mxu0
    %v564 = vadd.f32 %v551, %v563
    %v565 = vpop.f32.mrf.mxu0
    %566 = vdwg.mxu0
    %567 = vmatpush.bf16.msra.mxu0 %v453
    %568 = vmatpush.bf16.msra.mxu0 %v452
    %569 = vmatpush.bf16.msra.mxu0 %v451
    %570 = vmatpush.bf16.msra.mxu0 %v450
    %571 = vmatpush.bf16.msra.mxu0 %v449
    %572 = vmatpush.bf16.msra.mxu0 %v448
    %573 = vmatpush.bf16.msra.mxu0 %v447
    %574 = vmatpush.bf16.msra.mxu0 %v446
    %575 = vmatmul.bf16.gmra.mxu0 %v209
    %v576 = vpop.f32.mrf.mxu0
    %v577 = vadd.f32 %v564, %v576
    %v578 = vpop.f32.mrf.mxu0
    %579 = vdwg.mxu0
    %v580 = vld [vmem:[%s1] sm:$0xff]
    %v581 = vld [vmem:[%s5] sm:$0xff]
    %v582 = vld [vmem:[%s5 + $0x8] sm:$0xff]
    %v583 = vld [vmem:[%s5 + $0x10] sm:$0xff]
    %v584 = vld [vmem:[%s5 + $0x18] sm:$0xff]
    %v585 = vld [vmem:[%s5 + $0x20] sm:$0xff]
    %v586 = vld [vmem:[%s5 + $0x28] sm:$0xff]
    %v587 = vld [vmem:[%s5 + $0x30] sm:$0xff]
    %v588 = vld [vmem:[%s5 + $0x38] sm:$0xff]
    %v589 = vpack.c.bf16 %v580, %v580
    %v590 = vld [vmem:[%s6] sm:$0xf]
    %v592 = vperm.slane %v590, 0
    %v593 = vperm.slane %v590, 1
    %v594 = vperm.slane %v590, 2
    %v595 = vperm.slane %v590, 3
    %v608 = vunpack.c.l.b16 %v581
    %v609 = vunpack.c.h.b16 %v581
    %v610 = vunpack.c.l.b16 %v582
    %v611 = vunpack.c.h.b16 %v582
    %v612 = vunpack.c.l.b16 %v583
    %v613 = vunpack.c.h.b16 %v583
    %v614 = vunpack.c.l.b16 %v584
    %v615 = vunpack.c.h.b16 %v584
    %v616 = vunpack.c.l.b16 %v585
    %v617 = vunpack.c.h.b16 %v585
    %v618 = vunpack.c.l.b16 %v586
    %v619 = vunpack.c.h.b16 %v586
    %v620 = vunpack.c.l.b16 %v587
    %v621 = vunpack.c.h.b16 %v587
    %v622 = vunpack.c.l.b16 %v588
    %v623 = vunpack.c.h.b16 %v588
    %v624 = vpack.c.b16 %v612, %v608
    %v625 = vpack.c.b16 %v613, %v609
    %v626 = vpack.c.b16 %v614, %v610
    %v627 = vpack.c.b16 %v615, %v611
    %v628 = vpack.c.b16 %v620, %v616
    %v629 = vpack.c.b16 %v621, %v617
    %v630 = vpack.c.b16 %v622, %v618
    %v631 = vpack.c.b16 %v623, %v619
    %vm640 = vcmask 261120
    %v642 = vsel %vm640, %v589, 0
    %644 = vmatpush.bf16.msra.mxu0 0
    %645 = vmatpush.bf16.msra.mxu0 0
    %646 = vmatpush.bf16.msra.mxu0 0
    %647 = vmatpush.bf16.msra.mxu0 0
    %648 = vmatpush.bf16.msra.mxu0 0
    %649 = vmatpush.bf16.msra.mxu0 0
    %650 = vmatpush.bf16.msra.mxu0 %v628
    %651 = vmatpush.bf16.msra.mxu0 %v624
    %652 = vmatmul.bf16.gmra.mxu0 %v642
    %v653 = vpop.f32.mrf.mxu0
    %v654 = vadd.f32 %v592, %v653
    %v655 = vpop.f32.mrf.mxu0
    %656 = vdwg.mxu0
    %657 = vmatpush.bf16.msra.mxu0 0
    %658 = vmatpush.bf16.msra.mxu0 0
    %659 = vmatpush.bf16.msra.mxu0 0
    %660 = vmatpush.bf16.msra.mxu0 0
    %661 = vmatpush.bf16.msra.mxu0 0
    %662 = vmatpush.bf16.msra.mxu0 0
    %663 = vmatpush.bf16.msra.mxu0 %v629
    %664 = vmatpush.bf16.msra.mxu0 %v625
    %665 = vmatmul.bf16.gmra.mxu0 %v642
    %v666 = vpop.f32.mrf.mxu0
    %v667 = vadd.f32 %v593, %v666
    %v668 = vpop.f32.mrf.mxu0
    %669 = vdwg.mxu0
    %670 = vmatpush.bf16.msra.mxu0 0
    %671 = vmatpush.bf16.msra.mxu0 0
    %672 = vmatpush.bf16.msra.mxu0 0
    %673 = vmatpush.bf16.msra.mxu0 0
    %674 = vmatpush.bf16.msra.mxu0 0
    %675 = vmatpush.bf16.msra.mxu0 0
    %676 = vmatpush.bf16.msra.mxu0 %v630
    %677 = vmatpush.bf16.msra.mxu0 %v626
    %678 = vmatmul.bf16.gmra.mxu0 %v642
    %v679 = vpop.f32.mrf.mxu0
    %v680 = vadd.f32 %v594, %v679
    %v681 = vpop.f32.mrf.mxu0
    %682 = vdwg.mxu0
    %683 = vmatpush.bf16.msra.mxu0 0
    %684 = vmatpush.bf16.msra.mxu0 0
    %685 = vmatpush.bf16.msra.mxu0 0
    %686 = vmatpush.bf16.msra.mxu0 0
    %687 = vmatpush.bf16.msra.mxu0 0
    %688 = vmatpush.bf16.msra.mxu0 0
    %689 = vmatpush.bf16.msra.mxu0 %v631
    %690 = vmatpush.bf16.msra.mxu0 %v627
    %691 = vmatmul.bf16.gmra.mxu0 %v642
    %v692 = vpop.f32.mrf.mxu0
    %v693 = vadd.f32 %v595, %v692
    %v694 = vpop.f32.mrf.mxu0
    %695 = vdwg.mxu0
    %v696 = vmax.f32 %v667, 0.0
    %v697 = vld [vmem:[%s7] sm:$0x1]
    %v699 = vperm.slane %v697, 0
    %v701 = vmul.f32 %v696, %v699
    %v702 = vld [vmem:[%s8] sm:$0x1]
    %v704 = vperm.slane %v702, 0
    %v706 = vadd.f32 %v701, %v704
    %v707 = vmax.f32 %v680, 0.0
    %v708 = vld [vmem:[%s9] sm:$0x1]
    %v710 = vperm.slane %v708, 0
    %v712 = vmul.f32 %v707, %v710
    %v713 = vld [vmem:[%s10] sm:$0x1]
    %v715 = vperm.slane %v713, 0
    %v717 = vadd.f32 %v712, %v715
    %v718 = vld [vmem:[%s11] sm:$0xf]
    %v719 = vld [vmem:[%s11 + $0x4] sm:$0xf]
    %v720 = vld [vmem:[%s11 + $0x8] sm:$0xf]
    %v721 = vld [vmem:[%s11 + $0xc] sm:$0xf]
    %v722 = vld [vmem:[%s11 + $0x10] sm:$0xf]
    %v723 = vld [vmem:[%s11 + $0x14] sm:$0xf]
    %v724 = vld [vmem:[%s11 + $0x18] sm:$0xf]
    %v725 = vld [vmem:[%s11 + $0x1c] sm:$0xf]
    %v726 = vld [vmem:[%s11 + $0x20] sm:$0xf]
    %v727 = vld [vmem:[%s11 + $0x24] sm:$0xf]
    %v728 = vld [vmem:[%s11 + $0x28] sm:$0xf]
    %v729 = vld [vmem:[%s11 + $0x2c] sm:$0xf]
    %v730 = vld [vmem:[%s11 + $0x30] sm:$0xf]
    %v731 = vld [vmem:[%s11 + $0x34] sm:$0xf]
    %v732 = vld [vmem:[%s11 + $0x38] sm:$0xf]
    %v733 = vld [vmem:[%s11 + $0x3c] sm:$0xf]
    %v734 = vpack.c.bf16 %v577, %v577
    %v735 = vld [vmem:[#allocation4] sm:$0xf]
    %v736 = vld [vmem:[#allocation4 + $0x4] sm:$0xf]
    %v737 = vld [vmem:[#allocation4 + $0x8] sm:$0xf]
    %v738 = vld [vmem:[#allocation4 + $0xc] sm:$0xf]
    %v739 = vld [vmem:[#allocation4 + $0x10] sm:$0xf]
    %v740 = vld [vmem:[#allocation4 + $0x14] sm:$0xf]
    %v741 = vld [vmem:[#allocation4 + $0x18] sm:$0xf]
    %v742 = vld [vmem:[#allocation4 + $0x1c] sm:$0xf]
    %v743 = vld [vmem:[#allocation4 + $0x20] sm:$0xf]
    %v744 = vld [vmem:[#allocation4 + $0x24] sm:$0xf]
    %v745 = vld [vmem:[#allocation4 + $0x28] sm:$0xf]
    %v746 = vld [vmem:[#allocation4 + $0x2c] sm:$0xf]
    %v747 = vld [vmem:[#allocation4 + $0x30] sm:$0xf]
    %v748 = vld [vmem:[#allocation4 + $0x34] sm:$0xf]
    %v749 = vld [vmem:[#allocation4 + $0x38] sm:$0xf]
    %v750 = vld [vmem:[#allocation4 + $0x3c] sm:$0xf]
    %v751 = vpack.c.bf16 %v706, %v706
    %v768 = vunpack.c.l.b16 %v735
    %v769 = vunpack.c.l.b16 %v736
    %v770 = vunpack.c.l.b16 %v737
    %v771 = vunpack.c.l.b16 %v738
    %v772 = vunpack.c.l.b16 %v739
    %v773 = vunpack.c.l.b16 %v740
    %v774 = vunpack.c.l.b16 %v741
    %v775 = vunpack.c.l.b16 %v742
    %v776 = vunpack.c.l.b16 %v743
    %v777 = vunpack.c.l.b16 %v744
    %v778 = vunpack.c.l.b16 %v745
    %v779 = vunpack.c.l.b16 %v746
    %v780 = vunpack.c.l.b16 %v747
    %v781 = vunpack.c.l.b16 %v748
    %v782 = vunpack.c.l.b16 %v749
    %v783 = vunpack.c.l.b16 %v750
    %v784 = vpack.c.b16 %v769, %v768
    %v785 = vpack.c.b16 %v771, %v770
    %v786 = vpack.c.b16 %v773, %v772
    %v787 = vpack.c.b16 %v775, %v774
    %v788 = vpack.c.b16 %v777, %v776
    %v789 = vpack.c.b16 %v779, %v778
    %v790 = vpack.c.b16 %v781, %v780
    %v791 = vpack.c.b16 %v783, %v782
    %800 = vmatpush.bf16.msra.mxu0 %v791
    %801 = vmatpush.bf16.msra.mxu0 %v790
    %802 = vmatpush.bf16.msra.mxu0 %v789
    %803 = vmatpush.bf16.msra.mxu0 %v788
    %804 = vmatpush.bf16.msra.mxu0 %v787
    %805 = vmatpush.bf16.msra.mxu0 %v786
    %806 = vmatpush.bf16.msra.mxu0 %v785
    %807 = vmatpush.bf16.msra.mxu0 %v784
    %808 = vmatmul.bf16.gmra.mxu0 %v751
    %v809 = vpop.f32.mrf.mxu0
    %v810 = vadd.f32 0.0, %v809
    %v811 = vpop.f32.mrf.mxu0
    %812 = vdwg.mxu0
    %v829 = vunpack.c.l.b16 %v718
    %v830 = vunpack.c.l.b16 %v719
    %v831 = vunpack.c.l.b16 %v720
    %v832 = vunpack.c.l.b16 %v721
    %v833 = vunpack.c.l.b16 %v722
    %v834 = vunpack.c.l.b16 %v723
    %v835 = vunpack.c.l.b16 %v724
    %v836 = vunpack.c.l.b16 %v725
    %v837 = vunpack.c.l.b16 %v726
    %v838 = vunpack.c.l.b16 %v727
    %v839 = vunpack.c.l.b16 %v728
    %v840 = vunpack.c.l.b16 %v729
    %v841 = vunpack.c.l.b16 %v730
    %v842 = vunpack.c.l.b16 %v731
    %v843 = vunpack.c.l.b16 %v732
    %v844 = vunpack.c.l.b16 %v733
    %v845 = vpack.c.b16 %v830, %v829
    %v846 = vpack.c.b16 %v832, %v831
    %v847 = vpack.c.b16 %v834, %v833
    %v848 = vpack.c.b16 %v836, %v835
    %v849 = vpack.c.b16 %v838, %v837
    %v850 = vpack.c.b16 %v840, %v839
    %v851 = vpack.c.b16 %v842, %v841
    %v852 = vpack.c.b16 %v844, %v843
    %861 = vmatpush.bf16.msra.mxu0 %v852
    %862 = vmatpush.bf16.msra.mxu0 %v851
    %863 = vmatpush.bf16.msra.mxu0 %v850
    %864 = vmatpush.bf16.msra.mxu0 %v849
    %865 = vmatpush.bf16.msra.mxu0 %v848
    %866 = vmatpush.bf16.msra.mxu0 %v847
    %867 = vmatpush.bf16.msra.mxu0 %v846
    %868 = vmatpush.bf16.msra.mxu0 %v845
    %869 = vmatmul.bf16.gmra.mxu0 %v734
    %v870 = vpop.f32.mrf.mxu0
    %v871 = vadd.f32 %v810, %v870
    %v872 = vpop.f32.mrf.mxu0
    %873 = vdwg.mxu0
    %v874 = vld [vmem:[#allocation6] sm:$0xf]
    %v875 = vld [vmem:[#allocation6 + $0x4] sm:$0xf]
    %v876 = vld [vmem:[#allocation6 + $0x8] sm:$0xf]
    %v877 = vld [vmem:[#allocation6 + $0xc] sm:$0xf]
    %v878 = vld [vmem:[#allocation6 + $0x10] sm:$0xf]
    %v879 = vld [vmem:[#allocation6 + $0x14] sm:$0xf]
    %v880 = vld [vmem:[#allocation6 + $0x18] sm:$0xf]
    %v881 = vld [vmem:[#allocation6 + $0x1c] sm:$0xf]
    %v882 = vld [vmem:[#allocation6 + $0x20] sm:$0xf]
    %v883 = vld [vmem:[#allocation6 + $0x24] sm:$0xf]
    %v884 = vld [vmem:[#allocation6 + $0x28] sm:$0xf]
    %v885 = vld [vmem:[#allocation6 + $0x2c] sm:$0xf]
    %v886 = vld [vmem:[#allocation6 + $0x30] sm:$0xf]
    %v887 = vld [vmem:[#allocation6 + $0x34] sm:$0xf]
    %v888 = vld [vmem:[#allocation6 + $0x38] sm:$0xf]
    %v889 = vld [vmem:[#allocation6 + $0x3c] sm:$0xf]
    %v890 = vpack.c.bf16 %v717, %v717
    %v907 = vunpack.c.l.b16 %v874
    %v908 = vunpack.c.l.b16 %v875
    %v909 = vunpack.c.l.b16 %v876
    %v910 = vunpack.c.l.b16 %v877
    %v911 = vunpack.c.l.b16 %v878
    %v912 = vunpack.c.l.b16 %v879
    %v913 = vunpack.c.l.b16 %v880
    %v914 = vunpack.c.l.b16 %v881
    %v915 = vunpack.c.l.b16 %v882
    %v916 = vunpack.c.l.b16 %v883
    %v917 = vunpack.c.l.b16 %v884
    %v918 = vunpack.c.l.b16 %v885
    %v919 = vunpack.c.l.b16 %v886
    %v920 = vunpack.c.l.b16 %v887
    %v921 = vunpack.c.l.b16 %v888
    %v922 = vunpack.c.l.b16 %v889
    %v923 = vpack.c.b16 %v908, %v907
    %v924 = vpack.c.b16 %v910, %v909
    %v925 = vpack.c.b16 %v912, %v911
    %v926 = vpack.c.b16 %v914, %v913
    %v927 = vpack.c.b16 %v916, %v915
    %v928 = vpack.c.b16 %v918, %v917
    %v929 = vpack.c.b16 %v920, %v919
    %v930 = vpack.c.b16 %v922, %v921
    %939 = vmatpush.bf16.msra.mxu0 %v930
    %940 = vmatpush.bf16.msra.mxu0 %v929
    %941 = vmatpush.bf16.msra.mxu0 %v928
    %942 = vmatpush.bf16.msra.mxu0 %v927
    %943 = vmatpush.bf16.msra.mxu0 %v926
    %944 = vmatpush.bf16.msra.mxu0 %v925
    %945 = vmatpush.bf16.msra.mxu0 %v924
    %946 = vmatpush.bf16.msra.mxu0 %v923
    %947 = vmatmul.bf16.gmra.mxu0 %v890
    %v948 = vpop.f32.mrf.mxu0
    %v949 = vadd.f32 0.0, %v948
    %v950 = vpop.f32.mrf.mxu0
    %951 = vdwg.mxu0
    %v952 = vadd.f32 %v871, %v949
    %v953 = vld [vmem:[%s14] sm:$0x1]
    %v955 = vperm.slane %v953, 0
    %v957 = vadd.f32 %v952, %v955
    %v958 = vadd.f32 %v654, %v101
    %959 = vst [vmem:[%s15] sm:$0xff] %v958
    %v960 = vadd.f32 %v957, %v101
    %961 = vst [vmem:[%s16] sm:$0xff] %v960
    %v962 = vadd.f32 %v693, %v101
    %963 = vst [vmem:[%s17] sm:$0xff] %v962
    // Predicated region
    $region74: #{agent_transformer_forward.2} parent=1 // pred_check
      _
    $region75: #{agent_transformer_forward.2} parent=1 // pred_check_branch
      %965 = sbr.rel (0) target = $region77
    $region76: #{agent_transformer_forward.2} parent=1 // pred_region
      _
    $region77: #{agent_transformer_forward.2} parent=1 // pred_fallthru
      _
    // Predicated region
    $region78: #{agent_transformer_forward.2} parent=1 // pred_check
      _
    $region79: #{agent_transformer_forward.2} parent=1 // pred_check_branch
      %967 = sbr.rel (0) target = $region81
    $region80: #{agent_transformer_forward.2} parent=1 // pred_region
      _
    $region81: #{agent_transformer_forward.2} parent=1 // pred_fallthru
      _
    // Predicated region
    $region82: #{agent_transformer_forward.2} parent=1 // pred_check
      _
    $region83: #{agent_transformer_forward.2} parent=1 // pred_check_branch
      %969 = sbr.rel (0) target = $region85
    $region84: #{agent_transformer_forward.2} parent=1 // pred_region
      _
    $region85: #{agent_transformer_forward.2} parent=1 // pred_fallthru
      _
    // Predicated region
    $region86: #{agent_transformer_forward.2} parent=1 // pred_check
      _
    $region87: #{agent_transformer_forward.2} parent=1 // pred_check_branch
      %971 = sbr.rel (0) target = $region89
    $region88: #{agent_transformer_forward.2} parent=1 // pred_region
      _
    $region89: #{agent_transformer_forward.2} parent=1 // pred_fallthru
      _
    // Predicated region
    $region90: #{agent_transformer_forward.2} parent=1 // pred_check
      _
    $region91: #{agent_transformer_forward.2} parent=1 // pred_check_branch
      %973 = sbr.rel (0) target = $region93
    $region92: #{agent_transformer_forward.2} parent=1 // pred_region
      _
    $region93: #{agent_transformer_forward.2} parent=1 // pred_fallthru
      _
    // Predicated region
    $region94: #{agent_transformer_forward.2} parent=1 // pred_check
      _
    $region95: #{agent_transformer_forward.2} parent=1 // pred_check_branch
      %975 = sbr.rel (0) target = $region97
    $region96: #{agent_transformer_forward.2} parent=1 // pred_region
      _
    $region97: #{agent_transformer_forward.2} parent=1 // pred_fallthru
      _
    %976 = vsyncpa [#allocation3], 1
    %977 = vsyncpa [#allocation5], 1

// kernel: agent_transformer_forward.3
$region0: #{agent_transformer_forward.3}
  #allocation0 [shape = 'u32[]', space=smem, size = 0x4, offset = 0x4, fixed_abs, tag = 'smem constant byte address 0x4 - core index']
  #allocation1 [shape = 'u32[72,128]{1,0:T(1,128)}', space=vmem, size = 0x9000, scoped, tag = 'internal scratch']
  %s0 = inlined_call_operand.vmem [shape: f32[2,16,128], index: 0, kind: input, shape index: {}]
  %s1 = inlined_call_operand.vmem [shape: f32[1,128], index: 1, kind: input, shape index: {}]
  %s2 = inlined_call_operand.vmem [shape: f32[1,128], index: 2, kind: input, shape index: {}]
  %s3 = inlined_call_operand.vmem [shape: f32[3,1,128], index: 3, kind: input, shape index: {}]
  %s4 = inlined_call_operand.vmem [shape: f32[3,1,128], index: 4, kind: input, shape index: {}]
  %s5 = inlined_call_operand.hbm [shape: bf16[3,128,384], index: 5, kind: input, shape index: {}]
  %s6 = inlined_call_operand.vmem [shape: f32[3,1,384], index: 6, kind: input, shape index: {}]
  %s7 = inlined_call_operand.vmem [shape: bf16[3,128,128], index: 7, kind: input, shape index: {}]
  %s8 = inlined_call_operand.vmem [shape: f32[3,1,128], index: 8, kind: input, shape index: {}]
  %s9 = inlined_call_operand.vmem [shape: f32[3,1,128], index: 9, kind: input, shape index: {}]
  %s10 = inlined_call_operand.vmem [shape: f32[3,1,128], index: 10, kind: input, shape index: {}]
  %s11 = inlined_call_operand.hbm [shape: bf16[3,128,512], index: 11, kind: input, shape index: {}]
  %s12 = inlined_call_operand.vmem [shape: f32[3,1,512], index: 12, kind: input, shape index: {}]
  %s13 = inlined_call_operand.hbm [shape: bf16[3,512,128], index: 13, kind: input, shape index: {}]
  %s14 = inlined_call_operand.vmem [shape: f32[3,1,128], index: 14, kind: input, shape index: {}]
  %s15 = inlined_call_operand.vmem [shape: f32[1,128], index: 15, kind: input, shape index: {}]
  %s16 = inlined_call_operand.vmem [shape: f32[1,128], index: 16, kind: input, shape index: {}]
  %s17 = inlined_call_operand.vmem [shape: bf16[128,128], index: 17, kind: input, shape index: {}]
  %s18 = inlined_call_operand.vmem [shape: f32[1,128], index: 18, kind: input, shape index: {}]
  %s19 = inlined_call_operand.vmem [shape: f32[2,16,128], index: 19, kind: output, shape index: {}]
  %s20 = sld [smem:[#allocation0]]
  $region98: #{agent_transformer_forward.3} parent=0
    _
  %s22 = ssub.s32 1, %s20
  %s23 = scalar_select 0, %s22, %s20
  $region1: #{agent_transformer_forward.3} parent=0
    #allocation2 [shape = 'u8[294912]{0}', space=vmem, size = 0x48000, scoped, tag = 'input window, operand 5, single buffered']
    #allocation3 [shape = 's32[1]{0}', space=sflag, size = 0x4, scoped, tag = 'scoped memory for agent_transformer_forward.3']
    #allocation4 [shape = 'u8[393216]{0}', space=vmem, size = 0x60000, scoped, tag = 'input window, operand 11, single buffered']
    #allocation5 [shape = 's32[1]{0}', space=sflag, size = 0x4, scoped, tag = 'scoped memory for agent_transformer_forward.3']
    #allocation6 [shape = 'u8[393216]{0}', space=vmem, size = 0x60000, scoped, tag = 'input window, operand 13, single buffered']
    %24 = vsyncpa [#allocation3], 0
    %25 = vsyncpa [#allocation5], 0
    // Predicated region
    $region2: #{agent_transformer_forward.3} parent=1 // pred_check
      _
    $region3: #{agent_transformer_forward.3} parent=1 // pred_check_branch
      %27 = sbr.rel (0) target = $region5
    $region4: #{agent_transformer_forward.3} parent=1 // pred_region
      _
    $region5: #{agent_transformer_forward.3} parent=1 // pred_fallthru
      _
    // Predicated region
    $region6: #{agent_transformer_forward.3} parent=1 // pred_check
      _
    $region7: #{agent_transformer_forward.3} parent=1 // pred_check_branch
      %29 = sbr.rel (0) target = $region9
    $region8: #{agent_transformer_forward.3} parent=1 // pred_region
      _
    $region9: #{agent_transformer_forward.3} parent=1 // pred_fallthru
      _
    // Predicated region
    $region10: #{agent_transformer_forward.3} parent=1 // pred_check
      _
    $region11: #{agent_transformer_forward.3} parent=1 // pred_check_branch
      %31 = sbr.rel (0) target = $region13
    $region12: #{agent_transformer_forward.3} parent=1 // pred_region
      _
    $region13: #{agent_transformer_forward.3} parent=1 // pred_fallthru
      _
    // Predicated region
    $region14: #{agent_transformer_forward.3} parent=1 // pred_check
      _
    $region15: #{agent_transformer_forward.3} parent=1 // pred_check_branch
      %33 = sbr.rel (0) target = $region17
    $region16: #{agent_transformer_forward.3} parent=1 // pred_region
      _
    $region17: #{agent_transformer_forward.3} parent=1 // pred_fallthru
      _
    // Predicated region
    $region18: #{agent_transformer_forward.3} parent=1 // pred_check
      _
    $region19: #{agent_transformer_forward.3} parent=1 // pred_check_branch
      %35 = sbr.rel (0) target = $region21
    $region20: #{agent_transformer_forward.3} parent=1 // pred_region
      _
    $region21: #{agent_transformer_forward.3} parent=1 // pred_fallthru
      _
    // Predicated region
    $region22: #{agent_transformer_forward.3} parent=1 // pred_check
      _
    $region23: #{agent_transformer_forward.3} parent=1 // pred_check_branch
      %37 = sbr.rel (0) target = $region25
    $region24: #{agent_transformer_forward.3} parent=1 // pred_region
      %39 = vsyncadd [#allocation3], 0
      %s40 = sshll.u32 %s5, 4
      %s41 = int_to_ptr.hbm [resolvable:$true] %s40
      %s42 = sshll.u32 [#allocation2], 4
      %s43 = int_to_ptr.vmem [resolvable:$true] %s42
      %48 = dma.hbm_to_vmem [thread:$0]  %s41, 9216, %s43, [#allocation3], 192, 192, 12
    $region25: #{agent_transformer_forward.3} parent=1 // pred_fallthru
      _
    // Predicated region
    $region26: #{agent_transformer_forward.3} parent=1 // pred_check
      _
    $region27: #{agent_transformer_forward.3} parent=1 // pred_check_branch
      %50 = sbr.rel (0) target = $region29
    $region28: #{agent_transformer_forward.3} parent=1 // pred_region
      _
    $region29: #{agent_transformer_forward.3} parent=1 // pred_fallthru
      _
    // Predicated region
    $region30: #{agent_transformer_forward.3} parent=1 // pred_check
      _
    $region31: #{agent_transformer_forward.3} parent=1 // pred_check_branch
      %52 = sbr.rel (0) target = $region33
    $region32: #{agent_transformer_forward.3} parent=1 // pred_region
      _
    $region33: #{agent_transformer_forward.3} parent=1 // pred_fallthru
      _
    // Predicated region
    $region34: #{agent_transformer_forward.3} parent=1 // pred_check
      _
    $region35: #{agent_transformer_forward.3} parent=1 // pred_check_branch
      %54 = sbr.rel (0) target = $region37
    $region36: #{agent_transformer_forward.3} parent=1 // pred_region
      _
    $region37: #{agent_transformer_forward.3} parent=1 // pred_fallthru
      _
    // Predicated region
    $region38: #{agent_transformer_forward.3} parent=1 // pred_check
      _
    $region39: #{agent_transformer_forward.3} parent=1 // pred_check_branch
      %56 = sbr.rel (0) target = $region41
    $region40: #{agent_transformer_forward.3} parent=1 // pred_region
      _
    $region41: #{agent_transformer_forward.3} parent=1 // pred_fallthru
      _
    // Predicated region
    $region42: #{agent_transformer_forward.3} parent=1 // pred_check
      _
    $region43: #{agent_transformer_forward.3} parent=1 // pred_check_branch
      %58 = sbr.rel (0) target = $region45
    $region44: #{agent_transformer_forward.3} parent=1 // pred_region
      _
    $region45: #{agent_transformer_forward.3} parent=1 // pred_fallthru
      _
    // Predicated region
    $region46: #{agent_transformer_forward.3} parent=1 // pred_check
      _
    $region47: #{agent_transformer_forward.3} parent=1 // pred_check_branch
      %60 = sbr.rel (0) target = $region49
    $region48: #{agent_transformer_forward.3} parent=1 // pred_region
      %62 = vsyncadd [#allocation5], 0
      %s63 = sshll.u32 %s11, 4
      %s64 = int_to_ptr.hbm [resolvable:$true] %s63
      %s65 = sshll.u32 [#allocation4], 4
      %s66 = int_to_ptr.vmem [resolvable:$true] %s65
      %71 = dma.hbm_to_vmem [thread:$0]  %s64, 12288, %s66, [#allocation5], 256, 256, 16
    $region49: #{agent_transformer_forward.3} parent=1 // pred_fallthru
      _
    // Predicated region
    $region50: #{agent_transformer_forward.3} parent=1 // pred_check
      _
    $region51: #{agent_transformer_forward.3} parent=1 // pred_check_branch
      %73 = sbr.rel (0) target = $region53
    $region52: #{agent_transformer_forward.3} parent=1 // pred_region
      _
    $region53: #{agent_transformer_forward.3} parent=1 // pred_fallthru
      _
    // Predicated region
    $region54: #{agent_transformer_forward.3} parent=1 // pred_check
      _
    $region55: #{agent_transformer_forward.3} parent=1 // pred_check_branch
      %75 = sbr.rel (0) target = $region57
    $region56: #{agent_transformer_forward.3} parent=1 // pred_region
      %77 = vsyncadd [#allocation5], 0
      %s78 = sshll.u32 %s13, 4
      %s79 = int_to_ptr.hbm [resolvable:$true] %s78
      %s80 = sshll.u32 [#allocation6], 4
      %s81 = int_to_ptr.vmem [resolvable:$true] %s80
      %86 = dma.hbm_to_vmem [thread:$0]  %s79, 12288, %s81, [#allocation5], 64, 64, 4
    $region57: #{agent_transformer_forward.3} parent=1 // pred_fallthru
      _
    // Predicated region
    $region58: #{agent_transformer_forward.3} parent=1 // pred_check
      _
    $region59: #{agent_transformer_forward.3} parent=1 // pred_check_branch
      %88 = sbr.rel (0) target = $region61
    $region60: #{agent_transformer_forward.3} parent=1 // pred_region
      _
    $region61: #{agent_transformer_forward.3} parent=1 // pred_fallthru
      _
    // Predicated region
    $region62: #{agent_transformer_forward.3} parent=1 // pred_check
      _
    $region63: #{agent_transformer_forward.3} parent=1 // pred_check_branch
      %90 = sbr.rel (0) target = $region65
    $region64: #{agent_transformer_forward.3} parent=1 // pred_region
      _
    $region65: #{agent_transformer_forward.3} parent=1 // pred_fallthru
      _
    // Predicated region
    $region66: #{agent_transformer_forward.3} parent=1 // pred_check
      _
    $region67: #{agent_transformer_forward.3} parent=1 // pred_check_branch
      %92 = sbr.rel (0) target = $region69
    $region68: #{agent_transformer_forward.3} parent=1 // pred_region
      _
    $region69: #{agent_transformer_forward.3} parent=1 // pred_fallthru
      _
    // Predicated region
    $region70: #{agent_transformer_forward.3} parent=1 // pred_check
      _
    $region71: #{agent_transformer_forward.3} parent=1 // pred_check_branch
      %94 = sbr.rel (0) target = $region73
    $region72: #{agent_transformer_forward.3} parent=1 // pred_region
      _
    $region73: #{agent_transformer_forward.3} parent=1 // pred_fallthru
      _
    // Predicated region
    $region74: #{agent_transformer_forward.3} parent=1 // pred_check
      _
    $region75: #{agent_transformer_forward.3} parent=1 // pred_check_branch
      %96 = sbr.rel (0) target = $region77
    $region76: #{agent_transformer_forward.3} parent=1 // pred_region
      _
    $region77: #{agent_transformer_forward.3} parent=1 // pred_fallthru
      _
    // Predicated region
    $region78: #{agent_transformer_forward.3} parent=1 // pred_check
      _
    $region79: #{agent_transformer_forward.3} parent=1 // pred_check_branch
      %98 = sbr.rel (0) target = $region81
    $region80: #{agent_transformer_forward.3} parent=1 // pred_region
      %100 = dma.done [#allocation3], 9216
    $region81: #{agent_transformer_forward.3} parent=1 // pred_fallthru
      _
    // Predicated region
    $region82: #{agent_transformer_forward.3} parent=1 // pred_check
      _
    $region83: #{agent_transformer_forward.3} parent=1 // pred_check_branch
      %102 = sbr.rel (0) target = $region85
    $region84: #{agent_transformer_forward.3} parent=1 // pred_region
      %104 = dma.done [#allocation5], 12288
    $region85: #{agent_transformer_forward.3} parent=1 // pred_fallthru
      _
    // Predicated region
    $region86: #{agent_transformer_forward.3} parent=1 // pred_check
      _
    $region87: #{agent_transformer_forward.3} parent=1 // pred_check_branch
      %106 = sbr.rel (0) target = $region89
    $region88: #{agent_transformer_forward.3} parent=1 // pred_region
      %108 = dma.done [#allocation5], 12288
    $region89: #{agent_transformer_forward.3} parent=1 // pred_fallthru
      _
    %v110 = vld [vmem:[%s0] sm:$0xff]
    %v111 = vld [vmem:[%s0 + $0x8] sm:$0xff]
    %v112 = vld [vmem:[%s0 + $0x10] sm:$0xff]
    %v113 = vld [vmem:[%s0 + $0x18] sm:$0xff]
    %v114 = vld [vmem:[%s1] sm:$0x1]
    %v115 = vld [vmem:[%s2] sm:$0x1]
    %116 = vadd.xlane.f32.xlu0 %v110
    %v117 = vpop.xlane.xlu0 %116
    %118 = vadd.xlane.f32.xlu0 %v111
    %v119 = vpop.xlane.xlu0 %118
    %120 = vadd.xlane.f32.xlu0 %v112
    %v121 = vpop.xlane.xlu0 %120
    %122 = vadd.xlane.f32.xlu0 %v113
    %v123 = vpop.xlane.xlu0 %122
    %v124 = vrcp.pop 128.0
    %v125 = vmul.f32 128.0, %v124
    %v126 = vsub.f32 1.0, %v125
    %v127 = vmul.f32 %v124, %v126
    %v128 = vadd.f32 %v124, %v127
    %vm129 = vweird.f32 %v124
    %v130 = vsel %vm129, %v124, %v128
    %v131 = vmul.f32 %v117, %v130
    %v132 = vmul.f32 %v119, %v130
    %v133 = vmul.f32 %v121, %v130
    %v134 = vmul.f32 %v123, %v130
    %v135 = vsub.f32 %v110, %v131
    %v136 = vsub.f32 %v111, %v132
    %v137 = vsub.f32 %v112, %v133
    %v138 = vsub.f32 %v113, %v134
    %v139 = vmul.f32 %v135, %v135
    %v140 = vmul.f32 %v136, %v136
    %v141 = vmul.f32 %v137, %v137
    %v142 = vmul.f32 %v138, %v138
    %143 = vadd.xlane.f32.xlu0 %v139
    %v144 = vpop.xlane.xlu0 %143
    %145 = vadd.xlane.f32.xlu0 %v140
    %v146 = vpop.xlane.xlu0 %145
    %147 = vadd.xlane.f32.xlu0 %v141
    %v148 = vpop.xlane.xlu0 %147
    %149 = vadd.xlane.f32.xlu0 %v142
    %v150 = vpop.xlane.xlu0 %149
    %v151 = vmul.f32 %v144, %v130
    %v152 = vmul.f32 %v146, %v130
    %v153 = vmul.f32 %v148, %v130
    %v154 = vmul.f32 %v150, %v130
    %v155 = vadd.f32 %v151, 1e-05
    %v156 = vadd.f32 %v152, 1e-05
    %v157 = vadd.f32 %v153, 1e-05
    %v158 = vadd.f32 %v154, 1e-05
    %v159 = vrsqrt.pop %v155
    %v160 = vmul.f32 %v159, %v155
    %v161 = vmul.f32 %v160, %v159
    %v162 = vmul.f32 0.5, %v161
    %v163 = vsub.f32 1.5, %v162
    %v164 = vmul.f32 %v159, %v163
    %vm165 = vweird.f32 %v155
    %vm166 = vweird.f32 %v159
    %vm167 = vmor %vm165, %vm166
    %v168 = vsel %vm167, %v159, %v164
    %v169 = vrsqrt.pop %v156
    %v170 = vmul.f32 %v169, %v156
    %v171 = vmul.f32 %v170, %v169
    %v172 = vmul.f32 0.5, %v171
    %v173 = vsub.f32 1.5, %v172
    %v174 = vmul.f32 %v169, %v173
    %vm175 = vweird.f32 %v156
    %vm176 = vweird.f32 %v169
    %vm177 = vmor %vm175, %vm176
    %v178 = vsel %vm177, %v169, %v174
    %v179 = vrsqrt.pop %v157
    %v180 = vmul.f32 %v179, %v157
    %v181 = vmul.f32 %v180, %v179
    %v182 = vmul.f32 0.5, %v181
    %v183 = vsub.f32 1.5, %v182
    %v184 = vmul.f32 %v179, %v183
    %vm185 = vweird.f32 %v157
    %vm186 = vweird.f32 %v179
    %vm187 = vmor %vm185, %vm186
    %v188 = vsel %vm187, %v179, %v184
    %v189 = vrsqrt.pop %v158
    %v190 = vmul.f32 %v189, %v158
    %v191 = vmul.f32 %v190, %v189
    %v192 = vmul.f32 0.5, %v191
    %v193 = vsub.f32 1.5, %v192
    %v194 = vmul.f32 %v189, %v193
    %vm195 = vweird.f32 %v158
    %vm196 = vweird.f32 %v189
    %vm197 = vmor %vm195, %vm196
    %v198 = vsel %vm197, %v189, %v194
    %v199 = vmul.f32 %v135, %v168
    %v200 = vmul.f32 %v136, %v178
    %v201 = vmul.f32 %v137, %v188
    %v202 = vmul.f32 %v138, %v198
    %v204 = vperm.slane %v114, 0
    %v206 = vmul.f32 %v199, %v204
    %v207 = vmul.f32 %v200, %v204
    %v208 = vmul.f32 %v201, %v204
    %v209 = vmul.f32 %v202, %v204
    %v211 = vperm.slane %v115, 0
    %v213 = vadd.f32 %v206, %v211
    %v214 = vadd.f32 %v207, %v211
    %v215 = vadd.f32 %v208, %v211
    %v216 = vadd.f32 %v209, %v211
    %v217 = vlaneseq
    %v218 = vshrl.u32 %v217, 7
    %v219 = vadd.s32 %v218, 8
    %v220 = vlaneseq
    %v221 = vand.u32 %v220, 127
    %vm222 = vcmp.le.s32.totalorder %v221, %v218
    %vm223 = vcmp.le.s32.totalorder %v221, %v219
    %v224 = vld [vmem:[%s3] sm:$0x1]
    %v225 = vld [vmem:[%s4] sm:$0x1]
    %226 = vadd.xlane.f32.xlu0 %v213
    %v227 = vpop.xlane.xlu0 %226
    %228 = vadd.xlane.f32.xlu0 %v214
    %v229 = vpop.xlane.xlu0 %228
    %230 = vadd.xlane.f32.xlu0 %v215
    %v231 = vpop.xlane.xlu0 %230
    %232 = vadd.xlane.f32.xlu0 %v216
    %v233 = vpop.xlane.xlu0 %232
    %v234 = vmul.f32 %v227, %v130
    %v235 = vmul.f32 %v229, %v130
    %v236 = vmul.f32 %v231, %v130
    %v237 = vmul.f32 %v233, %v130
    %v238 = vsub.f32 %v213, %v234
    %v239 = vsub.f32 %v214, %v235
    %v240 = vsub.f32 %v215, %v236
    %v241 = vsub.f32 %v216, %v237
    %v242 = vmul.f32 %v238, %v238
    %v243 = vmul.f32 %v239, %v239
    %v244 = vmul.f32 %v240, %v240
    %v245 = vmul.f32 %v241, %v241
    %246 = vadd.xlane.f32.xlu0 %v242
    %v247 = vpop.xlane.xlu0 %246
    %248 = vadd.xlane.f32.xlu0 %v243
    %v249 = vpop.xlane.xlu0 %248
    %250 = vadd.xlane.f32.xlu0 %v244
    %v251 = vpop.xlane.xlu0 %250
    %252 = vadd.xlane.f32.xlu0 %v245
    %v253 = vpop.xlane.xlu0 %252
    %v254 = vmul.f32 %v247, %v130
    %v255 = vmul.f32 %v249, %v130
    %v256 = vmul.f32 %v251, %v130
    %v257 = vmul.f32 %v253, %v130
    %v258 = vadd.f32 %v254, 1e-05
    %v259 = vadd.f32 %v255, 1e-05
    %v260 = vadd.f32 %v256, 1e-05
    %v261 = vadd.f32 %v257, 1e-05
    %v262 = vrsqrt.pop %v258
    %v263 = vmul.f32 %v262, %v258
    %v264 = vmul.f32 %v263, %v262
    %v265 = vmul.f32 0.5, %v264
    %v266 = vsub.f32 1.5, %v265
    %v267 = vmul.f32 %v262, %v266
    %vm268 = vweird.f32 %v258
    %vm269 = vweird.f32 %v262
    %vm270 = vmor %vm268, %vm269
    %v271 = vsel %vm270, %v262, %v267
    %v272 = vrsqrt.pop %v259
    %v273 = vmul.f32 %v272, %v259
    %v274 = vmul.f32 %v273, %v272
    %v275 = vmul.f32 0.5, %v274
    %v276 = vsub.f32 1.5, %v275
    %v277 = vmul.f32 %v272, %v276
    %vm278 = vweird.f32 %v259
    %vm279 = vweird.f32 %v272
    %vm280 = vmor %vm278, %vm279
    %v281 = vsel %vm280, %v272, %v277
    %v282 = vrsqrt.pop %v260
    %v283 = vmul.f32 %v282, %v260
    %v284 = vmul.f32 %v283, %v282
    %v285 = vmul.f32 0.5, %v284
    %v286 = vsub.f32 1.5, %v285
    %v287 = vmul.f32 %v282, %v286
    %vm288 = vweird.f32 %v260
    %vm289 = vweird.f32 %v282
    %vm290 = vmor %vm288, %vm289
    %v291 = vsel %vm290, %v282, %v287
    %v292 = vrsqrt.pop %v261
    %v293 = vmul.f32 %v292, %v261
    %v294 = vmul.f32 %v293, %v292
    %v295 = vmul.f32 0.5, %v294
    %v296 = vsub.f32 1.5, %v295
    %v297 = vmul.f32 %v292, %v296
    %vm298 = vweird.f32 %v261
    %vm299 = vweird.f32 %v292
    %vm300 = vmor %vm298, %vm299
    %v301 = vsel %vm300, %v292, %v297
    %v302 = vmul.f32 %v238, %v271
    %v303 = vmul.f32 %v239, %v281
    %v304 = vmul.f32 %v240, %v291
    %v305 = vmul.f32 %v241, %v301
    %v307 = vperm.slane %v224, 0
    %v309 = vmul.f32 %v302, %v307
    %v310 = vmul.f32 %v303, %v307
    %v311 = vmul.f32 %v304, %v307
    %v312 = vmul.f32 %v305, %v307
    %v314 = vperm.slane %v225, 0
    %v316 = vadd.f32 %v309, %v314
    %v317 = vadd.f32 %v310, %v314
    %v318 = vadd.f32 %v311, %v314
    %v319 = vadd.f32 %v312, %v314
    %v320 = vld [vmem:[#allocation2] sm:$0xff]
    %v321 = vld [vmem:[#allocation2 + $0x8] sm:$0xf]
    %v322 = vld [vmem:[#allocation2 + $0xc] sm:$0xff]
    %v323 = vld [vmem:[#allocation2 + $0x14] sm:$0xf]
    %v324 = vld [vmem:[#allocation2 + $0x18] sm:$0xff]
    %v325 = vld [vmem:[#allocation2 + $0x20] sm:$0xf]
    %v326 = vld [vmem:[#allocation2 + $0x24] sm:$0xff]
    %v327 = vld [vmem:[#allocation2 + $0x2c] sm:$0xf]
    %v328 = vld [vmem:[#allocation2 + $0x30] sm:$0xff]
    %v329 = vld [vmem:[#allocation2 + $0x38] sm:$0xf]
    %v330 = vld [vmem:[#allocation2 + $0x3c] sm:$0xff]
    %v331 = vld [vmem:[#allocation2 + $0x44] sm:$0xf]
    %v332 = vld [vmem:[#allocation2 + $0x48] sm:$0xff]
    %v333 = vld [vmem:[#allocation2 + $0x50] sm:$0xf]
    %v334 = vld [vmem:[#allocation2 + $0x54] sm:$0xff]
    %v335 = vld [vmem:[#allocation2 + $0x5c] sm:$0xf]
    %v336 = vld [vmem:[#allocation2 + $0x60] sm:$0xff]
    %v337 = vld [vmem:[#allocation2 + $0x68] sm:$0xf]
    %v338 = vld [vmem:[#allocation2 + $0x6c] sm:$0xff]
    %v339 = vld [vmem:[#allocation2 + $0x74] sm:$0xf]
    %v340 = vld [vmem:[#allocation2 + $0x78] sm:$0xff]
    %v341 = vld [vmem:[#allocation2 + $0x80] sm:$0xf]
    %v342 = vld [vmem:[#allocation2 + $0x84] sm:$0xff]
    %v343 = vld [vmem:[#allocation2 + $0x8c] sm:$0xf]
    %v344 = vld [vmem:[#allocation2 + $0x90] sm:$0xff]
    %v345 = vld [vmem:[#allocation2 + $0x98] sm:$0xf]
    %v346 = vld [vmem:[#allocation2 + $0x9c] sm:$0xff]
    %v347 = vld [vmem:[#allocation2 + $0xa4] sm:$0xf]
    %v348 = vld [vmem:[#allocation2 + $0xa8] sm:$0xff]
    %v349 = vld [vmem:[#allocation2 + $0xb0] sm:$0xf]
    %v350 = vld [vmem:[#allocation2 + $0xb4] sm:$0xff]
    %v351 = vld [vmem:[#allocation2 + $0xbc] sm:$0xf]
    %v352 = vpack.c.bf16 %v317, %v316
    %v353 = vpack.c.bf16 %v319, %v318
    %v354 = vld [vmem:[%s6] sm:$0x7]
    %v356 = vperm.slane %v354, 0
    %v357 = vperm.slane %v354, 1
    %v358 = vperm.slane %v354, 2
    %v394 = vunpack.c.l.b16 %v320
    %v395 = vunpack.c.h.b16 %v320
    %v396 = vunpack.c.l.b16 %v321
    %v397 = vunpack.c.l.b16 %v322
    %v398 = vunpack.c.h.b16 %v322
    %v399 = vunpack.c.l.b16 %v323
    %v400 = vunpack.c.l.b16 %v324
    %v401 = vunpack.c.h.b16 %v324
    %v402 = vunpack.c.l.b16 %v325
    %v403 = vunpack.c.l.b16 %v326
    %v404 = vunpack.c.h.b16 %v326
    %v405 = vunpack.c.l.b16 %v327
    %v406 = vunpack.c.l.b16 %v328
    %v407 = vunpack.c.h.b16 %v328
    %v408 = vunpack.c.l.b16 %v329
    %v409 = vunpack.c.l.b16 %v330
    %v410 = vunpack.c.h.b16 %v330
    %v411 = vunpack.c.l.b16 %v331
    %v412 = vunpack.c.l.b16 %v332
    %v413 = vunpack.c.h.b16 %v332
    %v414 = vunpack.c.l.b16 %v333
    %v415 = vunpack.c.l.b16 %v334
    %v416 = vunpack.c.h.b16 %v334
    %v417 = vunpack.c.l.b16 %v335
    %v418 = vunpack.c.l.b16 %v336
    %v419 = vunpack.c.h.b16 %v336
    %v420 = vunpack.c.l.b16 %v337
    %v421 = vunpack.c.l.b16 %v338
    %v422 = vunpack.c.h.b16 %v338
    %v423 = vunpack.c.l.b16 %v339
    %v424 = vunpack.c.l.b16 %v340
    %v425 = vunpack.c.h.b16 %v340
    %v426 = vunpack.c.l.b16 %v341
    %v427 = vunpack.c.l.b16 %v342
    %v428 = vunpack.c.h.b16 %v342
    %v429 = vunpack.c.l.b16 %v343
    %v430 = vunpack.c.l.b16 %v344
    %v431 = vunpack.c.h.b16 %v344
    %v432 = vunpack.c.l.b16 %v345
    %v433 = vunpack.c.l.b16 %v346
    %v434 = vunpack.c.h.b16 %v346
    %v435 = vunpack.c.l.b16 %v347
    %v436 = vunpack.c.l.b16 %v348
    %v437 = vunpack.c.h.b16 %v348
    %v438 = vunpack.c.l.b16 %v349
    %v439 = vunpack.c.l.b16 %v350
    %v440 = vunpack.c.h.b16 %v350
    %v441 = vunpack.c.l.b16 %v351
    %v442 = vpack.c.b16 %v397, %v394
    %v443 = vpack.c.b16 %v398, %v395
    %v444 = vpack.c.b16 %v399, %v396
    %v445 = vpack.c.b16 %v403, %v400
    %v446 = vpack.c.b16 %v404, %v401
    %v447 = vpack.c.b16 %v405, %v402
    %v448 = vpack.c.b16 %v409, %v406
    %v449 = vpack.c.b16 %v410, %v407
    %v450 = vpack.c.b16 %v411, %v408
    %v451 = vpack.c.b16 %v415, %v412
    %v452 = vpack.c.b16 %v416, %v413
    %v453 = vpack.c.b16 %v417, %v414
    %v454 = vpack.c.b16 %v421, %v418
    %v455 = vpack.c.b16 %v422, %v419
    %v456 = vpack.c.b16 %v423, %v420
    %v457 = vpack.c.b16 %v427, %v424
    %v458 = vpack.c.b16 %v428, %v425
    %v459 = vpack.c.b16 %v429, %v426
    %v460 = vpack.c.b16 %v433, %v430
    %v461 = vpack.c.b16 %v434, %v431
    %v462 = vpack.c.b16 %v435, %v432
    %v463 = vpack.c.b16 %v439, %v436
    %v464 = vpack.c.b16 %v440, %v437
    %v465 = vpack.c.b16 %v441, %v438
    %490 = vmatpush.bf16.msra.mxu0 %v463
    %491 = vmatpush.bf16.msra.mxu0 %v460
    %492 = vmatpush.bf16.msra.mxu0 %v457
    %493 = vmatpush.bf16.msra.mxu0 %v454
    %494 = vmatpush.bf16.msra.mxu0 %v451
    %495 = vmatpush.bf16.msra.mxu0 %v448
    %496 = vmatpush.bf16.msra.mxu0 %v445
    %497 = vmatpush.bf16.msra.mxu0 %v442
    %498 = vmatmul.bf16.gmra.mxu0 %v352
    %v499 = vpop.f32.mrf.mxu0
    %v500 = vadd.f32 %v356, %v499
    %v501 = vpop.f32.mrf.mxu0
    %v502 = vadd.f32 %v356, %v501
    %503 = vmatmul.bf16.gmra.mxu0 %v353
    %v504 = vpop.f32.mrf.mxu0
    %v505 = vadd.f32 %v356, %v504
    %v506 = vpop.f32.mrf.mxu0
    %v507 = vadd.f32 %v356, %v506
    %508 = vdwg.mxu0
    %509 = vmatpush.bf16.msra.mxu0 %v464
    %510 = vmatpush.bf16.msra.mxu0 %v461
    %511 = vmatpush.bf16.msra.mxu0 %v458
    %512 = vmatpush.bf16.msra.mxu0 %v455
    %513 = vmatpush.bf16.msra.mxu0 %v452
    %514 = vmatpush.bf16.msra.mxu0 %v449
    %515 = vmatpush.bf16.msra.mxu0 %v446
    %516 = vmatpush.bf16.msra.mxu0 %v443
    %517 = vmatmul.bf16.gmra.mxu0 %v352
    %v518 = vpop.f32.mrf.mxu0
    %v519 = vadd.f32 %v357, %v518
    %v520 = vpop.f32.mrf.mxu0
    %v521 = vadd.f32 %v357, %v520
    %522 = vmatmul.bf16.gmra.mxu0 %v353
    %v523 = vpop.f32.mrf.mxu0
    %v524 = vadd.f32 %v357, %v523
    %v525 = vpop.f32.mrf.mxu0
    %v526 = vadd.f32 %v357, %v525
    %527 = vdwg.mxu0
    %528 = vmatpush.bf16.msra.mxu0 %v465
    %529 = vmatpush.bf16.msra.mxu0 %v462
    %530 = vmatpush.bf16.msra.mxu0 %v459
    %531 = vmatpush.bf16.msra.mxu0 %v456
    %532 = vmatpush.bf16.msra.mxu0 %v453
    %533 = vmatpush.bf16.msra.mxu0 %v450
    %534 = vmatpush.bf16.msra.mxu0 %v447
    %535 = vmatpush.bf16.msra.mxu0 %v444
    %536 = vmatmul.bf16.gmra.mxu0 %v352
    %v537 = vpop.f32.mrf.mxu0
    %v538 = vadd.f32 %v358, %v537
    %v539 = vpop.f32.mrf.mxu0
    %v540 = vadd.f32 %v358, %v539
    %541 = vmatmul.bf16.gmra.mxu0 %v353
    %v542 = vpop.f32.mrf.mxu0
    %v543 = vadd.f32 %v358, %v542
    %v544 = vpop.f32.mrf.mxu0
    %v545 = vadd.f32 %v358, %v544
    %546 = vdwg.mxu0
    %v547 = vpack.c.bf16 %v500, %v500
    %v548 = vpack.c.bf16 %v502, %v502
    %v549 = vpack.c.bf16 %v505, %v505
    %v550 = vpack.c.bf16 %v507, %v507
    %v551 = vpack.c.bf16 %v519, %v519
    %v552 = vpack.c.bf16 %v521, %v521
    %v553 = vpack.c.bf16 %v524, %v524
    %v554 = vpack.c.bf16 %v526, %v526
    %v557 = vunpack.c.l.b16 %v547
    %v558 = vunpack.c.l.b16 %v548
    %v559 = vpack.c.b16 %v558, %v557
    %v563 = vunpack.c.l.b16 %v551
    %v564 = vunpack.c.l.b16 %v552
    %v565 = vpack.c.b16 %v564, %v563
    %567 = vmatpush.bf16.xpose.msra.mxu0 0
    %568 = vmatpush.bf16.xpose.msra.mxu0 0
    %569 = vmatpush.bf16.xpose.msra.mxu0 0
    %570 = vmatpush.bf16.xpose.msra.mxu0 0
    %571 = vmatpush.bf16.xpose.msra.mxu0 0
    %572 = vmatpush.bf16.xpose.msra.mxu0 0
    %573 = vmatpush.bf16.xpose.msra.mxu0 0
    %574 = vmatpush.bf16.xpose.msra.mxu0 %v565
    %575 = vmatmul.bf16.gmra.mxu0 %v559
    %v576 = vpop.f32.mrf.mxu0
    %v577 = vadd.f32 0.0, %v576
    %v578 = vpop.f32.mrf.mxu0
    %v579 = vadd.f32 0.0, %v578
    %580 = vdwg.mxu0
    %v583 = vunpack.c.l.b16 %v549
    %v584 = vunpack.c.l.b16 %v550
    %v585 = vpack.c.b16 %v584, %v583
    %v589 = vunpack.c.l.b16 %v553
    %v590 = vunpack.c.l.b16 %v554
    %v591 = vpack.c.b16 %v590, %v589
    %593 = vmatpush.bf16.xpose.msra.mxu0 0
    %594 = vmatpush.bf16.xpose.msra.mxu0 0
    %595 = vmatpush.bf16.xpose.msra.mxu0 0
    %596 = vmatpush.bf16.xpose.msra.mxu0 0
    %597 = vmatpush.bf16.xpose.msra.mxu0 0
    %598 = vmatpush.bf16.xpose.msra.mxu0 0
    %599 = vmatpush.bf16.xpose.msra.mxu0 0
    %600 = vmatpush.bf16.xpose.msra.mxu0 %v591
    %601 = vmatmul.bf16.gmra.mxu0 %v585
    %v602 = vpop.f32.mrf.mxu0
    %v603 = vadd.f32 0.0, %v602
    %v604 = vpop.f32.mrf.mxu0
    %v605 = vadd.f32 0.0, %v604
    %606 = vdwg.mxu0
    %v607 = vmul.f32 %v577, 0.088388346
    %v608 = vmul.f32 %v579, 0.088388346
    %v609 = vmul.f32 %v603, 0.088388346
    %v610 = vmul.f32 %v605, 0.088388346
    %v611 = vsel %vm222, %v607, -3.4028235e+38
    %v612 = vsel %vm223, %v608, -3.4028235e+38
    %v613 = vsel %vm222, %v609, -3.4028235e+38
    %v614 = vsel %vm223, %v610, -3.4028235e+38
    %vm615 = vcmask 130048
    %v616 = vsel %vm615, %v611, -inf
    %617 = vmax.xlane.f32.xlu0 %v616
    %v618 = vpop.xlane.xlu0 %617
    %v619 = vsel %vm615, %v612, -inf
    %620 = vmax.xlane.f32.xlu0 %v619
    %v621 = vpop.xlane.xlu0 %620
    %v622 = vsel %vm615, %v613, -inf
    %623 = vmax.xlane.f32.xlu0 %v622
    %v624 = vpop.xlane.xlu0 %623
    %v625 = vsel %vm615, %v614, -inf
    %626 = vmax.xlane.f32.xlu0 %v625
    %v627 = vpop.xlane.xlu0 %626
    %v628 = vsub.f32 %v611, %v618
    %v629 = vsub.f32 %v612, %v621
    %v630 = vsub.f32 %v613, %v624
    %v631 = vsub.f32 %v614, %v627
    %v632 = vmul.f32 %v628, 1.442695
    %v633 = vpow.pop %v632
    %v634 = vmul.f32 %v629, 1.442695
    %v635 = vpow.pop %v634
    %v636 = vmul.f32 %v630, 1.442695
    %v637 = vpow.pop %v636
    %v638 = vmul.f32 %v631, 1.442695
    %v639 = vpow.pop %v638
    %v640 = vsel %vm615, %v633, 0.0
    %641 = vadd.xlane.f32.xlu0 %v640
    %v642 = vpop.xlane.xlu0 %641
    %v643 = vsel %vm615, %v635, 0.0
    %644 = vadd.xlane.f32.xlu0 %v643
    %v645 = vpop.xlane.xlu0 %644
    %v646 = vsel %vm615, %v637, 0.0
    %647 = vadd.xlane.f32.xlu0 %v646
    %v648 = vpop.xlane.xlu0 %647
    %v649 = vsel %vm615, %v639, 0.0
    %650 = vadd.xlane.f32.xlu0 %v649
    %v651 = vpop.xlane.xlu0 %650
    %v652 = vrcp.pop %v642
    %v653 = vrcp.pop %v645
    %v654 = vrcp.pop %v648
    %v655 = vrcp.pop %v651
    %v656 = vmul.f32 %v633, %v652
    %v657 = vmul.f32 %v635, %v653
    %v658 = vmul.f32 %v637, %v654
    %v659 = vmul.f32 %v639, %v655
    %v660 = vpack.c.bf16 %v656, %v656
    %v661 = vpack.c.bf16 %v657, %v657
    %v662 = vpack.c.bf16 %v658, %v658
    %v663 = vpack.c.bf16 %v659, %v659
    %v664 = vpack.c.bf16 %v538, %v538
    %v665 = vpack.c.bf16 %v540, %v540
    %v666 = vpack.c.bf16 %v543, %v543
    %v667 = vpack.c.bf16 %v545, %v545
    %v670 = vunpack.c.l.b16 %v660
    %v671 = vunpack.c.l.b16 %v661
    %v672 = vpack.c.b16 %v671, %v670
    %v675 = vunpack.c.l.b16 %v664
    %v676 = vunpack.c.l.b16 %v665
    %v677 = vpack.c.b16 %v676, %v675
    %v680 = vsel %vm615, %v672, 0
    %682 = vmatpush.bf16.msra.mxu0 0
    %683 = vmatpush.bf16.msra.mxu0 0
    %684 = vmatpush.bf16.msra.mxu0 0
    %685 = vmatpush.bf16.msra.mxu0 0
    %686 = vmatpush.bf16.msra.mxu0 0
    %687 = vmatpush.bf16.msra.mxu0 0
    %688 = vmatpush.bf16.msra.mxu0 0
    %689 = vmatpush.bf16.msra.mxu0 %v677
    %690 = vmatmul.bf16.gmra.mxu0 %v680
    %v691 = vpop.f32.mrf.mxu0
    %v692 = vadd.f32 0.0, %v691
    %v693 = vpop.f32.mrf.mxu0
    %v694 = vadd.f32 0.0, %v693
    %695 = vdwg.mxu0
    %v698 = vunpack.c.l.b16 %v662
    %v699 = vunpack.c.l.b16 %v663
    %v700 = vpack.c.b16 %v699, %v698
    %v703 = vunpack.c.l.b16 %v666
    %v704 = vunpack.c.l.b16 %v667
    %v705 = vpack.c.b16 %v704, %v703
    %v708 = vsel %vm615, %v700, 0
    %710 = vmatpush.bf16.msra.mxu0 0
    %711 = vmatpush.bf16.msra.mxu0 0
    %712 = vmatpush.bf16.msra.mxu0 0
    %713 = vmatpush.bf16.msra.mxu0 0
    %714 = vmatpush.bf16.msra.mxu0 0
    %715 = vmatpush.bf16.msra.mxu0 0
    %716 = vmatpush.bf16.msra.mxu0 0
    %717 = vmatpush.bf16.msra.mxu0 %v705
    %718 = vmatmul.bf16.gmra.mxu0 %v708
    %v719 = vpop.f32.mrf.mxu0
    %v720 = vadd.f32 0.0, %v719
    %v721 = vpop.f32.mrf.mxu0
    %v722 = vadd.f32 0.0, %v721
    %723 = vdwg.mxu0
    %v724 = vld [vmem:[%s7] sm:$0xf]
    %v725 = vld [vmem:[%s7 + $0x4] sm:$0xf]
    %v726 = vld [vmem:[%s7 + $0x8] sm:$0xf]
    %v727 = vld [vmem:[%s7 + $0xc] sm:$0xf]
    %v728 = vld [vmem:[%s7 + $0x10] sm:$0xf]
    %v729 = vld [vmem:[%s7 + $0x14] sm:$0xf]
    %v730 = vld [vmem:[%s7 + $0x18] sm:$0xf]
    %v731 = vld [vmem:[%s7 + $0x1c] sm:$0xf]
    %v732 = vld [vmem:[%s7 + $0x20] sm:$0xf]
    %v733 = vld [vmem:[%s7 + $0x24] sm:$0xf]
    %v734 = vld [vmem:[%s7 + $0x28] sm:$0xf]
    %v735 = vld [vmem:[%s7 + $0x2c] sm:$0xf]
    %v736 = vld [vmem:[%s7 + $0x30] sm:$0xf]
    %v737 = vld [vmem:[%s7 + $0x34] sm:$0xf]
    %v738 = vld [vmem:[%s7 + $0x38] sm:$0xf]
    %v739 = vld [vmem:[%s7 + $0x3c] sm:$0xf]
    %v740 = vpack.c.bf16 %v694, %v692
    %v741 = vpack.c.bf16 %v722, %v720
    %v758 = vunpack.c.l.b16 %v724
    %v759 = vunpack.c.l.b16 %v725
    %v760 = vunpack.c.l.b16 %v726
    %v761 = vunpack.c.l.b16 %v727
    %v762 = vunpack.c.l.b16 %v728
    %v763 = vunpack.c.l.b16 %v729
    %v764 = vunpack.c.l.b16 %v730
    %v765 = vunpack.c.l.b16 %v731
    %v766 = vunpack.c.l.b16 %v732
    %v767 = vunpack.c.l.b16 %v733
    %v768 = vunpack.c.l.b16 %v734
    %v769 = vunpack.c.l.b16 %v735
    %v770 = vunpack.c.l.b16 %v736
    %v771 = vunpack.c.l.b16 %v737
    %v772 = vunpack.c.l.b16 %v738
    %v773 = vunpack.c.l.b16 %v739
    %v774 = vpack.c.b16 %v759, %v758
    %v775 = vpack.c.b16 %v761, %v760
    %v776 = vpack.c.b16 %v763, %v762
    %v777 = vpack.c.b16 %v765, %v764
    %v778 = vpack.c.b16 %v767, %v766
    %v779 = vpack.c.b16 %v769, %v768
    %v780 = vpack.c.b16 %v771, %v770
    %v781 = vpack.c.b16 %v773, %v772
    %790 = vmatpush.bf16.msra.mxu0 %v781
    %791 = vmatpush.bf16.msra.mxu0 %v780
    %792 = vmatpush.bf16.msra.mxu0 %v779
    %793 = vmatpush.bf16.msra.mxu0 %v778
    %794 = vmatpush.bf16.msra.mxu0 %v777
    %795 = vmatpush.bf16.msra.mxu0 %v776
    %796 = vmatpush.bf16.msra.mxu0 %v775
    %797 = vmatpush.bf16.msra.mxu0 %v774
    %798 = vmatmul.bf16.gmra.mxu0 %v740
    %v799 = vpop.f32.mrf.mxu0
    %v800 = vadd.f32 0.0, %v799
    %v801 = vpop.f32.mrf.mxu0
    %v802 = vadd.f32 0.0, %v801
    %803 = vmatmul.bf16.gmra.mxu0 %v741
    %v804 = vpop.f32.mrf.mxu0
    %v805 = vadd.f32 0.0, %v804
    %v806 = vpop.f32.mrf.mxu0
    %v807 = vadd.f32 0.0, %v806
    %808 = vdwg.mxu0
    %v809 = vadd.f32 %v213, %v800
    %v810 = vadd.f32 %v214, %v802
    %v811 = vadd.f32 %v215, %v805
    %v812 = vadd.f32 %v216, %v807
    %v813 = vld [vmem:[%s8] sm:$0x1]
    %v815 = vperm.slane %v813, 0
    %v817 = vadd.f32 %v809, %v815
    %v818 = vadd.f32 %v810, %v815
    %v819 = vadd.f32 %v811, %v815
    %v820 = vadd.f32 %v812, %v815
    %v821 = vld [vmem:[%s9] sm:$0x1]
    %v822 = vld [vmem:[%s10] sm:$0x1]
    %823 = vadd.xlane.f32.xlu0 %v817
    %v824 = vpop.xlane.xlu0 %823
    %825 = vadd.xlane.f32.xlu0 %v818
    %v826 = vpop.xlane.xlu0 %825
    %827 = vadd.xlane.f32.xlu0 %v819
    %v828 = vpop.xlane.xlu0 %827
    %829 = vadd.xlane.f32.xlu0 %v820
    %v830 = vpop.xlane.xlu0 %829
    %v831 = vmul.f32 %v824, %v130
    %v832 = vmul.f32 %v826, %v130
    %v833 = vmul.f32 %v828, %v130
    %v834 = vmul.f32 %v830, %v130
    %v835 = vsub.f32 %v817, %v831
    %v836 = vsub.f32 %v818, %v832
    %v837 = vsub.f32 %v819, %v833
    %v838 = vsub.f32 %v820, %v834
    %v839 = vmul.f32 %v835, %v835
    %v840 = vmul.f32 %v836, %v836
    %v841 = vmul.f32 %v837, %v837
    %v842 = vmul.f32 %v838, %v838
    %843 = vadd.xlane.f32.xlu0 %v839
    %v844 = vpop.xlane.xlu0 %843
    %845 = vadd.xlane.f32.xlu0 %v840
    %v846 = vpop.xlane.xlu0 %845
    %847 = vadd.xlane.f32.xlu0 %v841
    %v848 = vpop.xlane.xlu0 %847
    %849 = vadd.xlane.f32.xlu0 %v842
    %v850 = vpop.xlane.xlu0 %849
    %v851 = vmul.f32 %v844, %v130
    %v852 = vmul.f32 %v846, %v130
    %v853 = vmul.f32 %v848, %v130
    %v854 = vmul.f32 %v850, %v130
    %v855 = vadd.f32 %v851, 1e-05
    %v856 = vadd.f32 %v852, 1e-05
    %v857 = vadd.f32 %v853, 1e-05
    %v858 = vadd.f32 %v854, 1e-05
    %v859 = vrsqrt.pop %v855
    %v860 = vmul.f32 %v859, %v855
    %v861 = vmul.f32 %v860, %v859
    %v862 = vmul.f32 0.5, %v861
    %v863 = vsub.f32 1.5, %v862
    %v864 = vmul.f32 %v859, %v863
    %vm865 = vweird.f32 %v855
    %vm866 = vweird.f32 %v859
    %vm867 = vmor %vm865, %vm866
    %v868 = vsel %vm867, %v859, %v864
    %v869 = vrsqrt.pop %v856
    %v870 = vmul.f32 %v869, %v856
    %v871 = vmul.f32 %v870, %v869
    %v872 = vmul.f32 0.5, %v871
    %v873 = vsub.f32 1.5, %v872
    %v874 = vmul.f32 %v869, %v873
    %vm875 = vweird.f32 %v856
    %vm876 = vweird.f32 %v869
    %vm877 = vmor %vm875, %vm876
    %v878 = vsel %vm877, %v869, %v874
    %v879 = vrsqrt.pop %v857
    %v880 = vmul.f32 %v879, %v857
    %v881 = vmul.f32 %v880, %v879
    %v882 = vmul.f32 0.5, %v881
    %v883 = vsub.f32 1.5, %v882
    %v884 = vmul.f32 %v879, %v883
    %vm885 = vweird.f32 %v857
    %vm886 = vweird.f32 %v879
    %vm887 = vmor %vm885, %vm886
    %v888 = vsel %vm887, %v879, %v884
    %v889 = vrsqrt.pop %v858
    %v890 = vmul.f32 %v889, %v858
    %v891 = vmul.f32 %v890, %v889
    %v892 = vmul.f32 0.5, %v891
    %v893 = vsub.f32 1.5, %v892
    %v894 = vmul.f32 %v889, %v893
    %vm895 = vweird.f32 %v858
    %vm896 = vweird.f32 %v889
    %vm897 = vmor %vm895, %vm896
    %v898 = vsel %vm897, %v889, %v894
    %v899 = vmul.f32 %v835, %v868
    %v900 = vmul.f32 %v836, %v878
    %v901 = vmul.f32 %v837, %v888
    %v902 = vmul.f32 %v838, %v898
    %v904 = vperm.slane %v821, 0
    %v906 = vmul.f32 %v899, %v904
    %v907 = vmul.f32 %v900, %v904
    %v908 = vmul.f32 %v901, %v904
    %v909 = vmul.f32 %v902, %v904
    %v911 = vperm.slane %v822, 0
    %v913 = vadd.f32 %v906, %v911
    %v914 = vadd.f32 %v907, %v911
    %v915 = vadd.f32 %v908, %v911
    %v916 = vadd.f32 %v909, %v911
    %v917 = vld [vmem:[#allocation4] sm:$0xff]
    %v918 = vld [vmem:[#allocation4 + $0x8] sm:$0xff]
    %v919 = vld [vmem:[#allocation4 + $0x10] sm:$0xff]
    %v920 = vld [vmem:[#allocation4 + $0x18] sm:$0xff]
    %v921 = vld [vmem:[#allocation4 + $0x20] sm:$0xff]
    %v922 = vld [vmem:[#allocation4 + $0x28] sm:$0xff]
    %v923 = vld [vmem:[#allocation4 + $0x30] sm:$0xff]
    %v924 = vld [vmem:[#allocation4 + $0x38] sm:$0xff]
    %v925 = vld [vmem:[#allocation4 + $0x40] sm:$0xff]
    %v926 = vld [vmem:[#allocation4 + $0x48] sm:$0xff]
    %v927 = vld [vmem:[#allocation4 + $0x50] sm:$0xff]
    %v928 = vld [vmem:[#allocation4 + $0x58] sm:$0xff]
    %v929 = vld [vmem:[#allocation4 + $0x60] sm:$0xff]
    %v930 = vld [vmem:[#allocation4 + $0x68] sm:$0xff]
    %v931 = vld [vmem:[#allocation4 + $0x70] sm:$0xff]
    %v932 = vld [vmem:[#allocation4 + $0x78] sm:$0xff]
    %v933 = vld [vmem:[#allocation4 + $0x80] sm:$0xff]
    %v934 = vld [vmem:[#allocation4 + $0x88] sm:$0xff]
    %v935 = vld [vmem:[#allocation4 + $0x90] sm:$0xff]
    %v936 = vld [vmem:[#allocation4 + $0x98] sm:$0xff]
    %v937 = vld [vmem:[#allocation4 + $0xa0] sm:$0xff]
    %v938 = vld [vmem:[#allocation4 + $0xa8] sm:$0xff]
    %v939 = vld [vmem:[#allocation4 + $0xb0] sm:$0xff]
    %v940 = vld [vmem:[#allocation4 + $0xb8] sm:$0xff]
    %v941 = vld [vmem:[#allocation4 + $0xc0] sm:$0xff]
    %v942 = vld [vmem:[#allocation4 + $0xc8] sm:$0xff]
    %v943 = vld [vmem:[#allocation4 + $0xd0] sm:$0xff]
    %v944 = vld [vmem:[#allocation4 + $0xd8] sm:$0xff]
    %v945 = vld [vmem:[#allocation4 + $0xe0] sm:$0xff]
    %v946 = vld [vmem:[#allocation4 + $0xe8] sm:$0xff]
    %v947 = vld [vmem:[#allocation4 + $0xf0] sm:$0xff]
    %v948 = vld [vmem:[#allocation4 + $0xf8] sm:$0xff]
    %v949 = vpack.c.bf16 %v914, %v913
    %v950 = vpack.c.bf16 %v916, %v915
    %v951 = vld [vmem:[%s12] sm:$0xf]
    %v953 = vperm.slane %v951, 0
    %v954 = vperm.slane %v951, 1
    %v955 = vperm.slane %v951, 2
    %v956 = vperm.slane %v951, 3
    %v993 = vunpack.c.l.b16 %v917
    %v994 = vunpack.c.h.b16 %v917
    %v995 = vunpack.c.l.b16 %v918
    %v996 = vunpack.c.h.b16 %v918
    %v997 = vunpack.c.l.b16 %v919
    %v998 = vunpack.c.h.b16 %v919
    %v999 = vunpack.c.l.b16 %v920
    %v1000 = vunpack.c.h.b16 %v920
    %v1001 = vunpack.c.l.b16 %v921
    %v1002 = vunpack.c.h.b16 %v921
    %v1003 = vunpack.c.l.b16 %v922
    %v1004 = vunpack.c.h.b16 %v922
    %v1005 = vunpack.c.l.b16 %v923
    %v1006 = vunpack.c.h.b16 %v923
    %v1007 = vunpack.c.l.b16 %v924
    %v1008 = vunpack.c.h.b16 %v924
    %v1009 = vunpack.c.l.b16 %v925
    %v1010 = vunpack.c.h.b16 %v925
    %v1011 = vunpack.c.l.b16 %v926
    %v1012 = vunpack.c.h.b16 %v926
    %v1013 = vunpack.c.l.b16 %v927
    %v1014 = vunpack.c.h.b16 %v927
    %v1015 = vunpack.c.l.b16 %v928
    %v1016 = vunpack.c.h.b16 %v928
    %v1017 = vunpack.c.l.b16 %v929
    %v1018 = vunpack.c.h.b16 %v929
    %v1019 = vunpack.c.l.b16 %v930
    %v1020 = vunpack.c.h.b16 %v930
    %v1021 = vunpack.c.l.b16 %v931
    %v1022 = vunpack.c.h.b16 %v931
    %v1023 = vunpack.c.l.b16 %v932
    %v1024 = vunpack.c.h.b16 %v932
    %v1025 = vunpack.c.l.b16 %v933
    %v1026 = vunpack.c.h.b16 %v933
    %v1027 = vunpack.c.l.b16 %v934
    %v1028 = vunpack.c.h.b16 %v934
    %v1029 = vunpack.c.l.b16 %v935
    %v1030 = vunpack.c.h.b16 %v935
    %v1031 = vunpack.c.l.b16 %v936
    %v1032 = vunpack.c.h.b16 %v936
    %v1033 = vunpack.c.l.b16 %v937
    %v1034 = vunpack.c.h.b16 %v937
    %v1035 = vunpack.c.l.b16 %v938
    %v1036 = vunpack.c.h.b16 %v938
    %v1037 = vunpack.c.l.b16 %v939
    %v1038 = vunpack.c.h.b16 %v939
    %v1039 = vunpack.c.l.b16 %v940
    %v1040 = vunpack.c.h.b16 %v940
    %v1041 = vunpack.c.l.b16 %v941
    %v1042 = vunpack.c.h.b16 %v941
    %v1043 = vunpack.c.l.b16 %v942
    %v1044 = vunpack.c.h.b16 %v942
    %v1045 = vunpack.c.l.b16 %v943
    %v1046 = vunpack.c.h.b16 %v943
    %v1047 = vunpack.c.l.b16 %v944
    %v1048 = vunpack.c.h.b16 %v944
    %v1049 = vunpack.c.l.b16 %v945
    %v1050 = vunpack.c.h.b16 %v945
    %v1051 = vunpack.c.l.b16 %v946
    %v1052 = vunpack.c.h.b16 %v946
    %v1053 = vunpack.c.l.b16 %v947
    %v1054 = vunpack.c.h.b16 %v947
    %v1055 = vunpack.c.l.b16 %v948
    %v1056 = vunpack.c.h.b16 %v948
    %v1057 = vpack.c.b16 %v997, %v993
    %v1058 = vpack.c.b16 %v998, %v994
    %v1059 = vpack.c.b16 %v999, %v995
    %v1060 = vpack.c.b16 %v1000, %v996
    %v1061 = vpack.c.b16 %v1005, %v1001
    %v1062 = vpack.c.b16 %v1006, %v1002
    %v1063 = vpack.c.b16 %v1007, %v1003
    %v1064 = vpack.c.b16 %v1008, %v1004
    %v1065 = vpack.c.b16 %v1013, %v1009
    %v1066 = vpack.c.b16 %v1014, %v1010
    %v1067 = vpack.c.b16 %v1015, %v1011
    %v1068 = vpack.c.b16 %v1016, %v1012
    %v1069 = vpack.c.b16 %v1021, %v1017
    %v1070 = vpack.c.b16 %v1022, %v1018
    %v1071 = vpack.c.b16 %v1023, %v1019
    %v1072 = vpack.c.b16 %v1024, %v1020
    %v1073 = vpack.c.b16 %v1029, %v1025
    %v1074 = vpack.c.b16 %v1030, %v1026
    %v1075 = vpack.c.b16 %v1031, %v1027
    %v1076 = vpack.c.b16 %v1032, %v1028
    %v1077 = vpack.c.b16 %v1037, %v1033
    %v1078 = vpack.c.b16 %v1038, %v1034
    %v1079 = vpack.c.b16 %v1039, %v1035
    %v1080 = vpack.c.b16 %v1040, %v1036
    %v1081 = vpack.c.b16 %v1045, %v1041
    %v1082 = vpack.c.b16 %v1046, %v1042
    %v1083 = vpack.c.b16 %v1047, %v1043
    %v1084 = vpack.c.b16 %v1048, %v1044
    %v1085 = vpack.c.b16 %v1053, %v1049
    %v1086 = vpack.c.b16 %v1054, %v1050
    %v1087 = vpack.c.b16 %v1055, %v1051
    %v1088 = vpack.c.b16 %v1056, %v1052
    %1121 = vmatpush.bf16.msra.mxu0 %v1085
    %1122 = vmatpush.bf16.msra.mxu0 %v1081
    %1123 = vmatpush.bf16.msra.mxu0 %v1077
    %1124 = vmatpush.bf16.msra.mxu0 %v1073
    %1125 = vmatpush.bf16.msra.mxu0 %v1069
    %1126 = vmatpush.bf16.msra.mxu0 %v1065
    %1127 = vmatpush.bf16.msra.mxu0 %v1061
    %1128 = vmatpush.bf16.msra.mxu0 %v1057
    %1129 = vmatmul.bf16.gmra.mxu0 %v949
    %v1130 = vpop.f32.mrf.mxu0
    %v1131 = vadd.f32 %v953, %v1130
    %v1132 = vpop.f32.mrf.mxu0
    %v1133 = vadd.f32 %v953, %v1132
    %1134 = vmatmul.bf16.gmra.mxu0 %v950
    %v1135 = vpop.f32.mrf.mxu0
    %v1136 = vadd.f32 %v953, %v1135
    %v1137 = vpop.f32.mrf.mxu0
    %v1138 = vadd.f32 %v953, %v1137
    %1139 = vdwg.mxu0
    %1140 = vmatpush.bf16.msra.mxu0 %v1086
    %1141 = vmatpush.bf16.msra.mxu0 %v1082
    %1142 = vmatpush.bf16.msra.mxu0 %v1078
    %1143 = vmatpush.bf16.msra.mxu0 %v1074
    %1144 = vmatpush.bf16.msra.mxu0 %v1070
    %1145 = vmatpush.bf16.msra.mxu0 %v1066
    %1146 = vmatpush.bf16.msra.mxu0 %v1062
    %1147 = vmatpush.bf16.msra.mxu0 %v1058
    %1148 = vmatmul.bf16.gmra.mxu0 %v949
    %v1149 = vpop.f32.mrf.mxu0
    %v1150 = vadd.f32 %v954, %v1149
    %v1151 = vpop.f32.mrf.mxu0
    %v1152 = vadd.f32 %v954, %v1151
    %1153 = vmatmul.bf16.gmra.mxu0 %v950
    %v1154 = vpop.f32.mrf.mxu0
    %v1155 = vadd.f32 %v954, %v1154
    %v1156 = vpop.f32.mrf.mxu0
    %v1157 = vadd.f32 %v954, %v1156
    %1158 = vdwg.mxu0
    %1159 = vmatpush.bf16.msra.mxu0 %v1087
    %1160 = vmatpush.bf16.msra.mxu0 %v1083
    %1161 = vmatpush.bf16.msra.mxu0 %v1079
    %1162 = vmatpush.bf16.msra.mxu0 %v1075
    %1163 = vmatpush.bf16.msra.mxu0 %v1071
    %1164 = vmatpush.bf16.msra.mxu0 %v1067
    %1165 = vmatpush.bf16.msra.mxu0 %v1063
    %1166 = vmatpush.bf16.msra.mxu0 %v1059
    %1167 = vmatmul.bf16.gmra.mxu0 %v949
    %v1168 = vpop.f32.mrf.mxu0
    %v1169 = vadd.f32 %v955, %v1168
    %v1170 = vpop.f32.mrf.mxu0
    %v1171 = vadd.f32 %v955, %v1170
    %1172 = vmatmul.bf16.gmra.mxu0 %v950
    %v1173 = vpop.f32.mrf.mxu0
    %v1174 = vadd.f32 %v955, %v1173
    %v1175 = vpop.f32.mrf.mxu0
    %v1176 = vadd.f32 %v955, %v1175
    %1177 = vdwg.mxu0
    %1178 = vmatpush.bf16.msra.mxu0 %v1088
    %1179 = vmatpush.bf16.msra.mxu0 %v1084
    %1180 = vmatpush.bf16.msra.mxu0 %v1080
    %1181 = vmatpush.bf16.msra.mxu0 %v1076
    %1182 = vmatpush.bf16.msra.mxu0 %v1072
    %1183 = vmatpush.bf16.msra.mxu0 %v1068
    %1184 = vmatpush.bf16.msra.mxu0 %v1064
    %1185 = vmatpush.bf16.msra.mxu0 %v1060
    %1186 = vmatmul.bf16.gmra.mxu0 %v949
    %v1187 = vpop.f32.mrf.mxu0
    %v1188 = vadd.f32 %v956, %v1187
    %v1189 = vpop.f32.mrf.mxu0
    %v1190 = vadd.f32 %v956, %v1189
    %1191 = vmatmul.bf16.gmra.mxu0 %v950
    %v1192 = vpop.f32.mrf.mxu0
    %v1193 = vadd.f32 %v956, %v1192
    %v1194 = vpop.f32.mrf.mxu0
    %v1195 = vadd.f32 %v956, %v1194
    %1196 = vdwg.mxu0
    %v1197 = vmax.f32 %v1131, 0.0
    %v1198 = vmax.f32 %v1150, 0.0
    %v1199 = vmax.f32 %v1169, 0.0
    %v1200 = vmax.f32 %v1188, 0.0
    %v1201 = vmax.f32 %v1133, 0.0
    %v1202 = vmax.f32 %v1152, 0.0
    %v1203 = vmax.f32 %v1171, 0.0
    %v1204 = vmax.f32 %v1190, 0.0
    %v1205 = vmax.f32 %v1136, 0.0
    %v1206 = vmax.f32 %v1155, 0.0
    %v1207 = vmax.f32 %v1174, 0.0
    %v1208 = vmax.f32 %v1193, 0.0
    %v1209 = vmax.f32 %v1138, 0.0
    %v1210 = vmax.f32 %v1157, 0.0
    %v1211 = vmax.f32 %v1176, 0.0
    %v1212 = vmax.f32 %v1195, 0.0
    %v1213 = vld [vmem:[#allocation6] sm:$0xf]
    %v1214 = vld [vmem:[#allocation6 + $0x4] sm:$0xf]
    %v1215 = vld [vmem:[#allocation6 + $0x8] sm:$0xf]
    %v1216 = vld [vmem:[#allocation6 + $0xc] sm:$0xf]
    %v1217 = vld [vmem:[#allocation6 + $0x10] sm:$0xf]
    %v1218 = vld [vmem:[#allocation6 + $0x14] sm:$0xf]
    %v1219 = vld [vmem:[#allocation6 + $0x18] sm:$0xf]
    %v1220 = vld [vmem:[#allocation6 + $0x1c] sm:$0xf]
    %v1221 = vld [vmem:[#allocation6 + $0x20] sm:$0xf]
    %v1222 = vld [vmem:[#allocation6 + $0x24] sm:$0xf]
    %v1223 = vld [vmem:[#allocation6 + $0x28] sm:$0xf]
    %v1224 = vld [vmem:[#allocation6 + $0x2c] sm:$0xf]
    %v1225 = vld [vmem:[#allocation6 + $0x30] sm:$0xf]
    %v1226 = vld [vmem:[#allocation6 + $0x34] sm:$0xf]
    %v1227 = vld [vmem:[#allocation6 + $0x38] sm:$0xf]
    %v1228 = vld [vmem:[#allocation6 + $0x3c] sm:$0xf]
    %v1229 = vld [vmem:[#allocation6 + $0x40] sm:$0xf]
    %v1230 = vld [vmem:[#allocation6 + $0x44] sm:$0xf]
    %v1231 = vld [vmem:[#allocation6 + $0x48] sm:$0xf]
    %v1232 = vld [vmem:[#allocation6 + $0x4c] sm:$0xf]
    %v1233 = vld [vmem:[#allocation6 + $0x50] sm:$0xf]
    %v1234 = vld [vmem:[#allocation6 + $0x54] sm:$0xf]
    %v1235 = vld [vmem:[#allocation6 + $0x58] sm:$0xf]
    %v1236 = vld [vmem:[#allocation6 + $0x5c] sm:$0xf]
    %v1237 = vld [vmem:[#allocation6 + $0x60] sm:$0xf]
    %v1238 = vld [vmem:[#allocation6 + $0x64] sm:$0xf]
    %v1239 = vld [vmem:[#allocation6 + $0x68] sm:$0xf]
    %v1240 = vld [vmem:[#allocation6 + $0x6c] sm:$0xf]
    %v1241 = vld [vmem:[#allocation6 + $0x70] sm:$0xf]
    %v1242 = vld [vmem:[#allocation6 + $0x74] sm:$0xf]
    %v1243 = vld [vmem:[#allocation6 + $0x78] sm:$0xf]
    %v1244 = vld [vmem:[#allocation6 + $0x7c] sm:$0xf]
    %v1245 = vld [vmem:[#allocation6 + $0x80] sm:$0xf]
    %v1246 = vld [vmem:[#allocation6 + $0x84] sm:$0xf]
    %v1247 = vld [vmem:[#allocation6 + $0x88] sm:$0xf]
    %v1248 = vld [vmem:[#allocation6 + $0x8c] sm:$0xf]
    %v1249 = vld [vmem:[#allocation6 + $0x90] sm:$0xf]
    %v1250 = vld [vmem:[#allocation6 + $0x94] sm:$0xf]
    %v1251 = vld [vmem:[#allocation6 + $0x98] sm:$0xf]
    %v1252 = vld [vmem:[#allocation6 + $0x9c] sm:$0xf]
    %v1253 = vld [vmem:[#allocation6 + $0xa0] sm:$0xf]
    %v1254 = vld [vmem:[#allocation6 + $0xa4] sm:$0xf]
    %v1255 = vld [vmem:[#allocation6 + $0xa8] sm:$0xf]
    %v1256 = vld [vmem:[#allocation6 + $0xac] sm:$0xf]
    %v1257 = vld [vmem:[#allocation6 + $0xb0] sm:$0xf]
    %v1258 = vld [vmem:[#allocation6 + $0xb4] sm:$0xf]
    %v1259 = vld [vmem:[#allocation6 + $0xb8] sm:$0xf]
    %v1260 = vld [vmem:[#allocation6 + $0xbc] sm:$0xf]
    %v1261 = vld [vmem:[#allocation6 + $0xc0] sm:$0xf]
    %v1262 = vld [vmem:[#allocation6 + $0xc4] sm:$0xf]
    %v1263 = vld [vmem:[#allocation6 + $0xc8] sm:$0xf]
    %v1264 = vld [vmem:[#allocation6 + $0xcc] sm:$0xf]
    %v1265 = vld [vmem:[#allocation6 + $0xd0] sm:$0xf]
    %v1266 = vld [vmem:[#allocation6 + $0xd4] sm:$0xf]
    %v1267 = vld [vmem:[#allocation6 + $0xd8] sm:$0xf]
    %v1268 = vld [vmem:[#allocation6 + $0xdc] sm:$0xf]
    %v1269 = vld [vmem:[#allocation6 + $0xe0] sm:$0xf]
    %v1270 = vld [vmem:[#allocation6 + $0xe4] sm:$0xf]
    %v1271 = vld [vmem:[#allocation6 + $0xe8] sm:$0xf]
    %v1272 = vld [vmem:[#allocation6 + $0xec] sm:$0xf]
    %v1273 = vld [vmem:[#allocation6 + $0xf0] sm:$0xf]
    %v1274 = vld [vmem:[#allocation6 + $0xf4] sm:$0xf]
    %v1275 = vld [vmem:[#allocation6 + $0xf8] sm:$0xf]
    %v1276 = vld [vmem:[#allocation6 + $0xfc] sm:$0xf]
    %v1277 = vpack.c.bf16 %v1201, %v1197
    %v1278 = vpack.c.bf16 %v1202, %v1198
    %v1279 = vpack.c.bf16 %v1203, %v1199
    %v1280 = vpack.c.bf16 %v1204, %v1200
    %v1281 = vpack.c.bf16 %v1209, %v1205
    %v1282 = vpack.c.bf16 %v1210, %v1206
    %v1283 = vpack.c.bf16 %v1211, %v1207
    %v1284 = vpack.c.bf16 %v1212, %v1208
    %v1349 = vunpack.c.l.b16 %v1213
    %v1350 = vunpack.c.l.b16 %v1214
    %v1351 = vunpack.c.l.b16 %v1215
    %v1352 = vunpack.c.l.b16 %v1216
    %v1353 = vunpack.c.l.b16 %v1217
    %v1354 = vunpack.c.l.b16 %v1218
    %v1355 = vunpack.c.l.b16 %v1219
    %v1356 = vunpack.c.l.b16 %v1220
    %v1357 = vunpack.c.l.b16 %v1221
    %v1358 = vunpack.c.l.b16 %v1222
    %v1359 = vunpack.c.l.b16 %v1223
    %v1360 = vunpack.c.l.b16 %v1224
    %v1361 = vunpack.c.l.b16 %v1225
    %v1362 = vunpack.c.l.b16 %v1226
    %v1363 = vunpack.c.l.b16 %v1227
    %v1364 = vunpack.c.l.b16 %v1228
    %v1365 = vunpack.c.l.b16 %v1229
    %v1366 = vunpack.c.l.b16 %v1230
    %v1367 = vunpack.c.l.b16 %v1231
    %v1368 = vunpack.c.l.b16 %v1232
    %v1369 = vunpack.c.l.b16 %v1233
    %v1370 = vunpack.c.l.b16 %v1234
    %v1371 = vunpack.c.l.b16 %v1235
    %v1372 = vunpack.c.l.b16 %v1236
    %v1373 = vunpack.c.l.b16 %v1237
    %v1374 = vunpack.c.l.b16 %v1238
    %v1375 = vunpack.c.l.b16 %v1239
    %v1376 = vunpack.c.l.b16 %v1240
    %v1377 = vunpack.c.l.b16 %v1241
    %v1378 = vunpack.c.l.b16 %v1242
    %v1379 = vunpack.c.l.b16 %v1243
    %v1380 = vunpack.c.l.b16 %v1244
    %v1381 = vunpack.c.l.b16 %v1245
    %v1382 = vunpack.c.l.b16 %v1246
    %v1383 = vunpack.c.l.b16 %v1247
    %v1384 = vunpack.c.l.b16 %v1248
    %v1385 = vunpack.c.l.b16 %v1249
    %v1386 = vunpack.c.l.b16 %v1250
    %v1387 = vunpack.c.l.b16 %v1251
    %v1388 = vunpack.c.l.b16 %v1252
    %v1389 = vunpack.c.l.b16 %v1253
    %v1390 = vunpack.c.l.b16 %v1254
    %v1391 = vunpack.c.l.b16 %v1255
    %v1392 = vunpack.c.l.b16 %v1256
    %v1393 = vunpack.c.l.b16 %v1257
    %v1394 = vunpack.c.l.b16 %v1258
    %v1395 = vunpack.c.l.b16 %v1259
    %v1396 = vunpack.c.l.b16 %v1260
    %v1397 = vunpack.c.l.b16 %v1261
    %v1398 = vunpack.c.l.b16 %v1262
    %v1399 = vunpack.c.l.b16 %v1263
    %v1400 = vunpack.c.l.b16 %v1264
    %v1401 = vunpack.c.l.b16 %v1265
    %v1402 = vunpack.c.l.b16 %v1266
    %v1403 = vunpack.c.l.b16 %v1267
    %v1404 = vunpack.c.l.b16 %v1268
    %v1405 = vunpack.c.l.b16 %v1269
    %v1406 = vunpack.c.l.b16 %v1270
    %v1407 = vunpack.c.l.b16 %v1271
    %v1408 = vunpack.c.l.b16 %v1272
    %v1409 = vunpack.c.l.b16 %v1273
    %v1410 = vunpack.c.l.b16 %v1274
    %v1411 = vunpack.c.l.b16 %v1275
    %v1412 = vunpack.c.l.b16 %v1276
    %v1413 = vpack.c.b16 %v1350, %v1349
    %v1414 = vpack.c.b16 %v1352, %v1351
    %v1415 = vpack.c.b16 %v1354, %v1353
    %v1416 = vpack.c.b16 %v1356, %v1355
    %v1417 = vpack.c.b16 %v1358, %v1357
    %v1418 = vpack.c.b16 %v1360, %v1359
    %v1419 = vpack.c.b16 %v1362, %v1361
    %v1420 = vpack.c.b16 %v1364, %v1363
    %v1421 = vpack.c.b16 %v1366, %v1365
    %v1422 = vpack.c.b16 %v1368, %v1367
    %v1423 = vpack.c.b16 %v1370, %v1369
    %v1424 = vpack.c.b16 %v1372, %v1371
    %v1425 = vpack.c.b16 %v1374, %v1373
    %v1426 = vpack.c.b16 %v1376, %v1375
    %v1427 = vpack.c.b16 %v1378, %v1377
    %v1428 = vpack.c.b16 %v1380, %v1379
    %v1429 = vpack.c.b16 %v1382, %v1381
    %v1430 = vpack.c.b16 %v1384, %v1383
    %v1431 = vpack.c.b16 %v1386, %v1385
    %v1432 = vpack.c.b16 %v1388, %v1387
    %v1433 = vpack.c.b16 %v1390, %v1389
    %v1434 = vpack.c.b16 %v1392, %v1391
    %v1435 = vpack.c.b16 %v1394, %v1393
    %v1436 = vpack.c.b16 %v1396, %v1395
    %v1437 = vpack.c.b16 %v1398, %v1397
    %v1438 = vpack.c.b16 %v1400, %v1399
    %v1439 = vpack.c.b16 %v1402, %v1401
    %v1440 = vpack.c.b16 %v1404, %v1403
    %v1441 = vpack.c.b16 %v1406, %v1405
    %v1442 = vpack.c.b16 %v1408, %v1407
    %v1443 = vpack.c.b16 %v1410, %v1409
    %v1444 = vpack.c.b16 %v1412, %v1411
    %1477 = vmatpush.bf16.msra.mxu0 %v1420
    %1478 = vmatpush.bf16.msra.mxu0 %v1419
    %1479 = vmatpush.bf16.msra.mxu0 %v1418
    %1480 = vmatpush.bf16.msra.mxu0 %v1417
    %1481 = vmatpush.bf16.msra.mxu0 %v1416
    %1482 = vmatpush.bf16.msra.mxu0 %v1415
    %1483 = vmatpush.bf16.msra.mxu0 %v1414
    %1484 = vmatpush.bf16.msra.mxu0 %v1413
    %1485 = vmatmul.bf16.gmra.mxu0 %v1277
    %v1486 = vpop.f32.mrf.mxu0
    %v1487 = vadd.f32 0.0, %v1486
    %v1488 = vpop.f32.mrf.mxu0
    %v1489 = vadd.f32 0.0, %v1488
    %1490 = vmatmul.bf16.gmra.mxu0 %v1281
    %v1491 = vpop.f32.mrf.mxu0
    %v1492 = vadd.f32 0.0, %v1491
    %v1493 = vpop.f32.mrf.mxu0
    %v1494 = vadd.f32 0.0, %v1493
    %1495 = vdwg.mxu0
    %1496 = vmatpush.bf16.msra.mxu0 %v1428
    %1497 = vmatpush.bf16.msra.mxu0 %v1427
    %1498 = vmatpush.bf16.msra.mxu0 %v1426
    %1499 = vmatpush.bf16.msra.mxu0 %v1425
    %1500 = vmatpush.bf16.msra.mxu0 %v1424
    %1501 = vmatpush.bf16.msra.mxu0 %v1423
    %1502 = vmatpush.bf16.msra.mxu0 %v1422
    %1503 = vmatpush.bf16.msra.mxu0 %v1421
    %1504 = vmatmul.bf16.gmra.mxu0 %v1278
    %v1505 = vpop.f32.mrf.mxu0
    %v1506 = vadd.f32 %v1487, %v1505
    %v1507 = vpop.f32.mrf.mxu0
    %v1508 = vadd.f32 %v1489, %v1507
    %1509 = vmatmul.bf16.gmra.mxu0 %v1282
    %v1510 = vpop.f32.mrf.mxu0
    %v1511 = vadd.f32 %v1492, %v1510
    %v1512 = vpop.f32.mrf.mxu0
    %v1513 = vadd.f32 %v1494, %v1512
    %1514 = vdwg.mxu0
    %1515 = vmatpush.bf16.msra.mxu0 %v1436
    %1516 = vmatpush.bf16.msra.mxu0 %v1435
    %1517 = vmatpush.bf16.msra.mxu0 %v1434
    %1518 = vmatpush.bf16.msra.mxu0 %v1433
    %1519 = vmatpush.bf16.msra.mxu0 %v1432
    %1520 = vmatpush.bf16.msra.mxu0 %v1431
    %1521 = vmatpush.bf16.msra.mxu0 %v1430
    %1522 = vmatpush.bf16.msra.mxu0 %v1429
    %1523 = vmatmul.bf16.gmra.mxu0 %v1279
    %v1524 = vpop.f32.mrf.mxu0
    %v1525 = vadd.f32 %v1506, %v1524
    %v1526 = vpop.f32.mrf.mxu0
    %v1527 = vadd.f32 %v1508, %v1526
    %1528 = vmatmul.bf16.gmra.mxu0 %v1283
    %v1529 = vpop.f32.mrf.mxu0
    %v1530 = vadd.f32 %v1511, %v1529
    %v1531 = vpop.f32.mrf.mxu0
    %v1532 = vadd.f32 %v1513, %v1531
    %1533 = vdwg.mxu0
    %1534 = vmatpush.bf16.msra.mxu0 %v1444
    %1535 = vmatpush.bf16.msra.mxu0 %v1443
    %1536 = vmatpush.bf16.msra.mxu0 %v1442
    %1537 = vmatpush.bf16.msra.mxu0 %v1441
    %1538 = vmatpush.bf16.msra.mxu0 %v1440
    %1539 = vmatpush.bf16.msra.mxu0 %v1439
    %1540 = vmatpush.bf16.msra.mxu0 %v1438
    %1541 = vmatpush.bf16.msra.mxu0 %v1437
    %1542 = vmatmul.bf16.gmra.mxu0 %v1280
    %v1543 = vpop.f32.mrf.mxu0
    %v1544 = vadd.f32 %v1525, %v1543
    %v1545 = vpop.f32.mrf.mxu0
    %v1546 = vadd.f32 %v1527, %v1545
    %1547 = vmatmul.bf16.gmra.mxu0 %v1284
    %v1548 = vpop.f32.mrf.mxu0
    %v1549 = vadd.f32 %v1530, %v1548
    %v1550 = vpop.f32.mrf.mxu0
    %v1551 = vadd.f32 %v1532, %v1550
    %1552 = vdwg.mxu0
    %v1553 = vadd.f32 %v817, %v1544
    %v1554 = vadd.f32 %v818, %v1546
    %v1555 = vadd.f32 %v819, %v1549
    %v1556 = vadd.f32 %v820, %v1551
    %v1557 = vld [vmem:[%s14] sm:$0x1]
    %v1559 = vperm.slane %v1557, 0
    %v1561 = vadd.f32 %v1553, %v1559
    %v1562 = vadd.f32 %v1554, %v1559
    %v1563 = vadd.f32 %v1555, %v1559
    %v1564 = vadd.f32 %v1556, %v1559
    %s1565 = scalar_lea.vmem %s3, 1
    %v1566 = vld [vmem:[%s1565] sm:$0x1]
    %s1567 = scalar_lea.vmem %s4, 1
    %v1568 = vld [vmem:[%s1567] sm:$0x1]
    %1569 = vadd.xlane.f32.xlu0 %v1561
    %v1570 = vpop.xlane.xlu0 %1569
    %1571 = vadd.xlane.f32.xlu0 %v1562
    %v1572 = vpop.xlane.xlu0 %1571
    %1573 = vadd.xlane.f32.xlu0 %v1563
    %v1574 = vpop.xlane.xlu0 %1573
    %1575 = vadd.xlane.f32.xlu0 %v1564
    %v1576 = vpop.xlane.xlu0 %1575
    %v1577 = vmul.f32 %v1570, %v130
    %v1578 = vmul.f32 %v1572, %v130
    %v1579 = vmul.f32 %v1574, %v130
    %v1580 = vmul.f32 %v1576, %v130
    %v1581 = vsub.f32 %v1561, %v1577
    %v1582 = vsub.f32 %v1562, %v1578
    %v1583 = vsub.f32 %v1563, %v1579
    %v1584 = vsub.f32 %v1564, %v1580
    %v1585 = vmul.f32 %v1581, %v1581
    %v1586 = vmul.f32 %v1582, %v1582
    %v1587 = vmul.f32 %v1583, %v1583
    %v1588 = vmul.f32 %v1584, %v1584
    %1589 = vadd.xlane.f32.xlu0 %v1585
    %v1590 = vpop.xlane.xlu0 %1589
    %1591 = vadd.xlane.f32.xlu0 %v1586
    %v1592 = vpop.xlane.xlu0 %1591
    %1593 = vadd.xlane.f32.xlu0 %v1587
    %v1594 = vpop.xlane.xlu0 %1593
    %1595 = vadd.xlane.f32.xlu0 %v1588
    %v1596 = vpop.xlane.xlu0 %1595
    %v1597 = vmul.f32 %v1590, %v130
    %v1598 = vmul.f32 %v1592, %v130
    %v1599 = vmul.f32 %v1594, %v130
    %v1600 = vmul.f32 %v1596, %v130
    %v1601 = vadd.f32 %v1597, 1e-05
    %v1602 = vadd.f32 %v1598, 1e-05
    %v1603 = vadd.f32 %v1599, 1e-05
    %v1604 = vadd.f32 %v1600, 1e-05
    %v1605 = vrsqrt.pop %v1601
    %v1606 = vmul.f32 %v1605, %v1601
    %v1607 = vmul.f32 %v1606, %v1605
    %v1608 = vmul.f32 0.5, %v1607
    %v1609 = vsub.f32 1.5, %v1608
    %v1610 = vmul.f32 %v1605, %v1609
    %vm1611 = vweird.f32 %v1601
    %vm1612 = vweird.f32 %v1605
    %vm1613 = vmor %vm1611, %vm1612
    %v1614 = vsel %vm1613, %v1605, %v1610
    %v1615 = vrsqrt.pop %v1602
    %v1616 = vmul.f32 %v1615, %v1602
    %v1617 = vmul.f32 %v1616, %v1615
    %v1618 = vmul.f32 0.5, %v1617
    %v1619 = vsub.f32 1.5, %v1618
    %v1620 = vmul.f32 %v1615, %v1619
    %vm1621 = vweird.f32 %v1602
    %vm1622 = vweird.f32 %v1615
    %vm1623 = vmor %vm1621, %vm1622
    %v1624 = vsel %vm1623, %v1615, %v1620
    %v1625 = vrsqrt.pop %v1603
    %v1626 = vmul.f32 %v1625, %v1603
    %v1627 = vmul.f32 %v1626, %v1625
    %v1628 = vmul.f32 0.5, %v1627
    %v1629 = vsub.f32 1.5, %v1628
    %v1630 = vmul.f32 %v1625, %v1629
    %vm1631 = vweird.f32 %v1603
    %vm1632 = vweird.f32 %v1625
    %vm1633 = vmor %vm1631, %vm1632
    %v1634 = vsel %vm1633, %v1625, %v1630
    %v1635 = vrsqrt.pop %v1604
    %v1636 = vmul.f32 %v1635, %v1604
    %v1637 = vmul.f32 %v1636, %v1635
    %v1638 = vmul.f32 0.5, %v1637
    %v1639 = vsub.f32 1.5, %v1638
    %v1640 = vmul.f32 %v1635, %v1639
    %vm1641 = vweird.f32 %v1604
    %vm1642 = vweird.f32 %v1635
    %vm1643 = vmor %vm1641, %vm1642
    %v1644 = vsel %vm1643, %v1635, %v1640
    %v1645 = vmul.f32 %v1581, %v1614
    %v1646 = vmul.f32 %v1582, %v1624
    %v1647 = vmul.f32 %v1583, %v1634
    %v1648 = vmul.f32 %v1584, %v1644
    %v1650 = vperm.slane %v1566, 0
    %v1652 = vmul.f32 %v1645, %v1650
    %v1653 = vmul.f32 %v1646, %v1650
    %v1654 = vmul.f32 %v1647, %v1650
    %v1655 = vmul.f32 %v1648, %v1650
    %v1657 = vperm.slane %v1568, 0
    %v1659 = vadd.f32 %v1652, %v1657
    %v1660 = vadd.f32 %v1653, %v1657
    %v1661 = vadd.f32 %v1654, %v1657
    %v1662 = vadd.f32 %v1655, %v1657
    %s1663 = scalar_lea.vmem [#allocation2], 192
    %v1664 = vld [vmem:[%s1663] sm:$0xff]
    %v1665 = vld [vmem:[%s1663 + $0x8] sm:$0xf]
    %v1666 = vld [vmem:[%s1663 + $0xc] sm:$0xff]
    %v1667 = vld [vmem:[%s1663 + $0x14] sm:$0xf]
    %v1668 = vld [vmem:[%s1663 + $0x18] sm:$0xff]
    %v1669 = vld [vmem:[%s1663 + $0x20] sm:$0xf]
    %v1670 = vld [vmem:[%s1663 + $0x24] sm:$0xff]
    %v1671 = vld [vmem:[%s1663 + $0x2c] sm:$0xf]
    %v1672 = vld [vmem:[%s1663 + $0x30] sm:$0xff]
    %v1673 = vld [vmem:[%s1663 + $0x38] sm:$0xf]
    %v1674 = vld [vmem:[%s1663 + $0x3c] sm:$0xff]
    %v1675 = vld [vmem:[%s1663 + $0x44] sm:$0xf]
    %v1676 = vld [vmem:[%s1663 + $0x48] sm:$0xff]
    %v1677 = vld [vmem:[%s1663 + $0x50] sm:$0xf]
    %v1678 = vld [vmem:[%s1663 + $0x54] sm:$0xff]
    %v1679 = vld [vmem:[%s1663 + $0x5c] sm:$0xf]
    %v1680 = vld [vmem:[%s1663 + $0x60] sm:$0xff]
    %v1681 = vld [vmem:[%s1663 + $0x68] sm:$0xf]
    %v1682 = vld [vmem:[%s1663 + $0x6c] sm:$0xff]
    %v1683 = vld [vmem:[%s1663 + $0x74] sm:$0xf]
    %v1684 = vld [vmem:[%s1663 + $0x78] sm:$0xff]
    %v1685 = vld [vmem:[%s1663 + $0x80] sm:$0xf]
    %v1686 = vld [vmem:[%s1663 + $0x84] sm:$0xff]
    %v1687 = vld [vmem:[%s1663 + $0x8c] sm:$0xf]
    %v1688 = vld [vmem:[%s1663 + $0x90] sm:$0xff]
    %v1689 = vld [vmem:[%s1663 + $0x98] sm:$0xf]
    %v1690 = vld [vmem:[%s1663 + $0x9c] sm:$0xff]
    %v1691 = vld [vmem:[%s1663 + $0xa4] sm:$0xf]
    %v1692 = vld [vmem:[%s1663 + $0xa8] sm:$0xff]
    %v1693 = vld [vmem:[%s1663 + $0xb0] sm:$0xf]
    %v1694 = vld [vmem:[%s1663 + $0xb4] sm:$0xff]
    %v1695 = vld [vmem:[%s1663 + $0xbc] sm:$0xf]
    %v1696 = vpack.c.bf16 %v1660, %v1659
    %v1697 = vpack.c.bf16 %v1662, %v1661
    %s1698 = scalar_lea.vmem %s6, 3
    %v1699 = vld [vmem:[%s1698] sm:$0x7]
    %v1701 = vperm.slane %v1699, 0
    %v1702 = vperm.slane %v1699, 1
    %v1703 = vperm.slane %v1699, 2
    %v1739 = vunpack.c.l.b16 %v1664
    %v1740 = vunpack.c.h.b16 %v1664
    %v1741 = vunpack.c.l.b16 %v1665
    %v1742 = vunpack.c.l.b16 %v1666
    %v1743 = vunpack.c.h.b16 %v1666
    %v1744 = vunpack.c.l.b16 %v1667
    %v1745 = vunpack.c.l.b16 %v1668
    %v1746 = vunpack.c.h.b16 %v1668
    %v1747 = vunpack.c.l.b16 %v1669
    %v1748 = vunpack.c.l.b16 %v1670
    %v1749 = vunpack.c.h.b16 %v1670
    %v1750 = vunpack.c.l.b16 %v1671
    %v1751 = vunpack.c.l.b16 %v1672
    %v1752 = vunpack.c.h.b16 %v1672
    %v1753 = vunpack.c.l.b16 %v1673
    %v1754 = vunpack.c.l.b16 %v1674
    %v1755 = vunpack.c.h.b16 %v1674
    %v1756 = vunpack.c.l.b16 %v1675
    %v1757 = vunpack.c.l.b16 %v1676
    %v1758 = vunpack.c.h.b16 %v1676
    %v1759 = vunpack.c.l.b16 %v1677
    %v1760 = vunpack.c.l.b16 %v1678
    %v1761 = vunpack.c.h.b16 %v1678
    %v1762 = vunpack.c.l.b16 %v1679
    %v1763 = vunpack.c.l.b16 %v1680
    %v1764 = vunpack.c.h.b16 %v1680
    %v1765 = vunpack.c.l.b16 %v1681
    %v1766 = vunpack.c.l.b16 %v1682
    %v1767 = vunpack.c.h.b16 %v1682
    %v1768 = vunpack.c.l.b16 %v1683
    %v1769 = vunpack.c.l.b16 %v1684
    %v1770 = vunpack.c.h.b16 %v1684
    %v1771 = vunpack.c.l.b16 %v1685
    %v1772 = vunpack.c.l.b16 %v1686
    %v1773 = vunpack.c.h.b16 %v1686
    %v1774 = vunpack.c.l.b16 %v1687
    %v1775 = vunpack.c.l.b16 %v1688
    %v1776 = vunpack.c.h.b16 %v1688
    %v1777 = vunpack.c.l.b16 %v1689
    %v1778 = vunpack.c.l.b16 %v1690
    %v1779 = vunpack.c.h.b16 %v1690
    %v1780 = vunpack.c.l.b16 %v1691
    %v1781 = vunpack.c.l.b16 %v1692
    %v1782 = vunpack.c.h.b16 %v1692
    %v1783 = vunpack.c.l.b16 %v1693
    %v1784 = vunpack.c.l.b16 %v1694
    %v1785 = vunpack.c.h.b16 %v1694
    %v1786 = vunpack.c.l.b16 %v1695
    %v1787 = vpack.c.b16 %v1742, %v1739
    %v1788 = vpack.c.b16 %v1743, %v1740
    %v1789 = vpack.c.b16 %v1744, %v1741
    %v1790 = vpack.c.b16 %v1748, %v1745
    %v1791 = vpack.c.b16 %v1749, %v1746
    %v1792 = vpack.c.b16 %v1750, %v1747
    %v1793 = vpack.c.b16 %v1754, %v1751
    %v1794 = vpack.c.b16 %v1755, %v1752
    %v1795 = vpack.c.b16 %v1756, %v1753
    %v1796 = vpack.c.b16 %v1760, %v1757
    %v1797 = vpack.c.b16 %v1761, %v1758
    %v1798 = vpack.c.b16 %v1762, %v1759
    %v1799 = vpack.c.b16 %v1766, %v1763
    %v1800 = vpack.c.b16 %v1767, %v1764
    %v1801 = vpack.c.b16 %v1768, %v1765
    %v1802 = vpack.c.b16 %v1772, %v1769
    %v1803 = vpack.c.b16 %v1773, %v1770
    %v1804 = vpack.c.b16 %v1774, %v1771
    %v1805 = vpack.c.b16 %v1778, %v1775
    %v1806 = vpack.c.b16 %v1779, %v1776
    %v1807 = vpack.c.b16 %v1780, %v1777
    %v1808 = vpack.c.b16 %v1784, %v1781
    %v1809 = vpack.c.b16 %v1785, %v1782
    %v1810 = vpack.c.b16 %v1786, %v1783
    %1835 = vmatpush.bf16.msra.mxu0 %v1808
    %1836 = vmatpush.bf16.msra.mxu0 %v1805
    %1837 = vmatpush.bf16.msra.mxu0 %v1802
    %1838 = vmatpush.bf16.msra.mxu0 %v1799
    %1839 = vmatpush.bf16.msra.mxu0 %v1796
    %1840 = vmatpush.bf16.msra.mxu0 %v1793
    %1841 = vmatpush.bf16.msra.mxu0 %v1790
    %1842 = vmatpush.bf16.msra.mxu0 %v1787
    %1843 = vmatmul.bf16.gmra.mxu0 %v1696
    %v1844 = vpop.f32.mrf.mxu0
    %v1845 = vadd.f32 %v1701, %v1844
    %v1846 = vpop.f32.mrf.mxu0
    %v1847 = vadd.f32 %v1701, %v1846
    %1848 = vmatmul.bf16.gmra.mxu0 %v1697
    %v1849 = vpop.f32.mrf.mxu0
    %v1850 = vadd.f32 %v1701, %v1849
    %v1851 = vpop.f32.mrf.mxu0
    %v1852 = vadd.f32 %v1701, %v1851
    %1853 = vdwg.mxu0
    %1854 = vmatpush.bf16.msra.mxu0 %v1809
    %1855 = vmatpush.bf16.msra.mxu0 %v1806
    %1856 = vmatpush.bf16.msra.mxu0 %v1803
    %1857 = vmatpush.bf16.msra.mxu0 %v1800
    %1858 = vmatpush.bf16.msra.mxu0 %v1797
    %1859 = vmatpush.bf16.msra.mxu0 %v1794
    %1860 = vmatpush.bf16.msra.mxu0 %v1791
    %1861 = vmatpush.bf16.msra.mxu0 %v1788
    %1862 = vmatmul.bf16.gmra.mxu0 %v1696
    %v1863 = vpop.f32.mrf.mxu0
    %v1864 = vadd.f32 %v1702, %v1863
    %v1865 = vpop.f32.mrf.mxu0
    %v1866 = vadd.f32 %v1702, %v1865
    %1867 = vmatmul.bf16.gmra.mxu0 %v1697
    %v1868 = vpop.f32.mrf.mxu0
    %v1869 = vadd.f32 %v1702, %v1868
    %v1870 = vpop.f32.mrf.mxu0
    %v1871 = vadd.f32 %v1702, %v1870
    %1872 = vdwg.mxu0
    %1873 = vmatpush.bf16.msra.mxu0 %v1810
    %1874 = vmatpush.bf16.msra.mxu0 %v1807
    %1875 = vmatpush.bf16.msra.mxu0 %v1804
    %1876 = vmatpush.bf16.msra.mxu0 %v1801
    %1877 = vmatpush.bf16.msra.mxu0 %v1798
    %1878 = vmatpush.bf16.msra.mxu0 %v1795
    %1879 = vmatpush.bf16.msra.mxu0 %v1792
    %1880 = vmatpush.bf16.msra.mxu0 %v1789
    %1881 = vmatmul.bf16.gmra.mxu0 %v1696
    %v1882 = vpop.f32.mrf.mxu0
    %v1883 = vadd.f32 %v1703, %v1882
    %v1884 = vpop.f32.mrf.mxu0
    %v1885 = vadd.f32 %v1703, %v1884
    %1886 = vmatmul.bf16.gmra.mxu0 %v1697
    %v1887 = vpop.f32.mrf.mxu0
    %v1888 = vadd.f32 %v1703, %v1887
    %v1889 = vpop.f32.mrf.mxu0
    %v1890 = vadd.f32 %v1703, %v1889
    %1891 = vdwg.mxu0
    %v1892 = vpack.c.bf16 %v1845, %v1845
    %v1893 = vpack.c.bf16 %v1847, %v1847
    %v1894 = vpack.c.bf16 %v1850, %v1850
    %v1895 = vpack.c.bf16 %v1852, %v1852
    %v1896 = vpack.c.bf16 %v1864, %v1864
    %v1897 = vpack.c.bf16 %v1866, %v1866
    %v1898 = vpack.c.bf16 %v1869, %v1869
    %v1899 = vpack.c.bf16 %v1871, %v1871
    %v1902 = vunpack.c.l.b16 %v1892
    %v1903 = vunpack.c.l.b16 %v1893
    %v1904 = vpack.c.b16 %v1903, %v1902
    %v1908 = vunpack.c.l.b16 %v1896
    %v1909 = vunpack.c.l.b16 %v1897
    %v1910 = vpack.c.b16 %v1909, %v1908
    %1912 = vmatpush.bf16.xpose.msra.mxu0 0
    %1913 = vmatpush.bf16.xpose.msra.mxu0 0
    %1914 = vmatpush.bf16.xpose.msra.mxu0 0
    %1915 = vmatpush.bf16.xpose.msra.mxu0 0
    %1916 = vmatpush.bf16.xpose.msra.mxu0 0
    %1917 = vmatpush.bf16.xpose.msra.mxu0 0
    %1918 = vmatpush.bf16.xpose.msra.mxu0 0
    %1919 = vmatpush.bf16.xpose.msra.mxu0 %v1910
    %1920 = vmatmul.bf16.gmra.mxu0 %v1904
    %v1921 = vpop.f32.mrf.mxu0
    %v1922 = vadd.f32 0.0, %v1921
    %v1923 = vpop.f32.mrf.mxu0
    %v1924 = vadd.f32 0.0, %v1923
    %1925 = vdwg.mxu0
    %v1928 = vunpack.c.l.b16 %v1894
    %v1929 = vunpack.c.l.b16 %v1895
    %v1930 = vpack.c.b16 %v1929, %v1928
    %v1934 = vunpack.c.l.b16 %v1898
    %v1935 = vunpack.c.l.b16 %v1899
    %v1936 = vpack.c.b16 %v1935, %v1934
    %1938 = vmatpush.bf16.xpose.msra.mxu0 0
    %1939 = vmatpush.bf16.xpose.msra.mxu0 0
    %1940 = vmatpush.bf16.xpose.msra.mxu0 0
    %1941 = vmatpush.bf16.xpose.msra.mxu0 0
    %1942 = vmatpush.bf16.xpose.msra.mxu0 0
    %1943 = vmatpush.bf16.xpose.msra.mxu0 0
    %1944 = vmatpush.bf16.xpose.msra.mxu0 0
    %1945 = vmatpush.bf16.xpose.msra.mxu0 %v1936
    %1946 = vmatmul.bf16.gmra.mxu0 %v1930
    %v1947 = vpop.f32.mrf.mxu0
    %v1948 = vadd.f32 0.0, %v1947
    %v1949 = vpop.f32.mrf.mxu0
    %v1950 = vadd.f32 0.0, %v1949
    %1951 = vdwg.mxu0
    %v1952 = vmul.f32 %v1922, 0.088388346
    %v1953 = vmul.f32 %v1924, 0.088388346
    %v1954 = vmul.f32 %v1948, 0.088388346
    %v1955 = vmul.f32 %v1950, 0.088388346
    %v1956 = vsel %vm222, %v1952, -3.4028235e+38
    %v1957 = vsel %vm223, %v1953, -3.4028235e+38
    %v1958 = vsel %vm222, %v1954, -3.4028235e+38
    %v1959 = vsel %vm223, %v1955, -3.4028235e+38
    %v1960 = vsel %vm615, %v1956, -inf
    %1961 = vmax.xlane.f32.xlu0 %v1960
    %v1962 = vpop.xlane.xlu0 %1961
    %v1963 = vsel %vm615, %v1957, -inf
    %1964 = vmax.xlane.f32.xlu0 %v1963
    %v1965 = vpop.xlane.xlu0 %1964
    %v1966 = vsel %vm615, %v1958, -inf
    %1967 = vmax.xlane.f32.xlu0 %v1966
    %v1968 = vpop.xlane.xlu0 %1967
    %v1969 = vsel %vm615, %v1959, -inf
    %1970 = vmax.xlane.f32.xlu0 %v1969
    %v1971 = vpop.xlane.xlu0 %1970
    %v1972 = vsub.f32 %v1956, %v1962
    %v1973 = vsub.f32 %v1957, %v1965
    %v1974 = vsub.f32 %v1958, %v1968
    %v1975 = vsub.f32 %v1959, %v1971
    %v1976 = vmul.f32 %v1972, 1.442695
    %v1977 = vpow.pop %v1976
    %v1978 = vmul.f32 %v1973, 1.442695
    %v1979 = vpow.pop %v1978
    %v1980 = vmul.f32 %v1974, 1.442695
    %v1981 = vpow.pop %v1980
    %v1982 = vmul.f32 %v1975, 1.442695
    %v1983 = vpow.pop %v1982
    %v1984 = vsel %vm615, %v1977, 0.0
    %1985 = vadd.xlane.f32.xlu0 %v1984
    %v1986 = vpop.xlane.xlu0 %1985
    %v1987 = vsel %vm615, %v1979, 0.0
    %1988 = vadd.xlane.f32.xlu0 %v1987
    %v1989 = vpop.xlane.xlu0 %1988
    %v1990 = vsel %vm615, %v1981, 0.0
    %1991 = vadd.xlane.f32.xlu0 %v1990
    %v1992 = vpop.xlane.xlu0 %1991
    %v1993 = vsel %vm615, %v1983, 0.0
    %1994 = vadd.xlane.f32.xlu0 %v1993
    %v1995 = vpop.xlane.xlu0 %1994
    %v1996 = vrcp.pop %v1986
    %v1997 = vrcp.pop %v1989
    %v1998 = vrcp.pop %v1992
    %v1999 = vrcp.pop %v1995
    %v2000 = vmul.f32 %v1977, %v1996
    %v2001 = vmul.f32 %v1979, %v1997
    %v2002 = vmul.f32 %v1981, %v1998
    %v2003 = vmul.f32 %v1983, %v1999
    %v2004 = vpack.c.bf16 %v2000, %v2000
    %v2005 = vpack.c.bf16 %v2001, %v2001
    %v2006 = vpack.c.bf16 %v2002, %v2002
    %v2007 = vpack.c.bf16 %v2003, %v2003
    %v2008 = vpack.c.bf16 %v1883, %v1883
    %v2009 = vpack.c.bf16 %v1885, %v1885
    %v2010 = vpack.c.bf16 %v1888, %v1888
    %v2011 = vpack.c.bf16 %v1890, %v1890
    %v2014 = vunpack.c.l.b16 %v2004
    %v2015 = vunpack.c.l.b16 %v2005
    %v2016 = vpack.c.b16 %v2015, %v2014
    %v2019 = vunpack.c.l.b16 %v2008
    %v2020 = vunpack.c.l.b16 %v2009
    %v2021 = vpack.c.b16 %v2020, %v2019
    %v2024 = vsel %vm615, %v2016, 0
    %2026 = vmatpush.bf16.msra.mxu0 0
    %2027 = vmatpush.bf16.msra.mxu0 0
    %2028 = vmatpush.bf16.msra.mxu0 0
    %2029 = vmatpush.bf16.msra.mxu0 0
    %2030 = vmatpush.bf16.msra.mxu0 0
    %2031 = vmatpush.bf16.msra.mxu0 0
    %2032 = vmatpush.bf16.msra.mxu0 0
    %2033 = vmatpush.bf16.msra.mxu0 %v2021
    %2034 = vmatmul.bf16.gmra.mxu0 %v2024
    %v2035 = vpop.f32.mrf.mxu0
    %v2036 = vadd.f32 0.0, %v2035
    %v2037 = vpop.f32.mrf.mxu0
    %v2038 = vadd.f32 0.0, %v2037
    %2039 = vdwg.mxu0
    %v2042 = vunpack.c.l.b16 %v2006
    %v2043 = vunpack.c.l.b16 %v2007
    %v2044 = vpack.c.b16 %v2043, %v2042
    %v2047 = vunpack.c.l.b16 %v2010
    %v2048 = vunpack.c.l.b16 %v2011
    %v2049 = vpack.c.b16 %v2048, %v2047
    %v2052 = vsel %vm615, %v2044, 0
    %2054 = vmatpush.bf16.msra.mxu0 0
    %2055 = vmatpush.bf16.msra.mxu0 0
    %2056 = vmatpush.bf16.msra.mxu0 0
    %2057 = vmatpush.bf16.msra.mxu0 0
    %2058 = vmatpush.bf16.msra.mxu0 0
    %2059 = vmatpush.bf16.msra.mxu0 0
    %2060 = vmatpush.bf16.msra.mxu0 0
    %2061 = vmatpush.bf16.msra.mxu0 %v2049
    %2062 = vmatmul.bf16.gmra.mxu0 %v2052
    %v2063 = vpop.f32.mrf.mxu0
    %v2064 = vadd.f32 0.0, %v2063
    %v2065 = vpop.f32.mrf.mxu0
    %v2066 = vadd.f32 0.0, %v2065
    %2067 = vdwg.mxu0
    %s2068 = scalar_lea.vmem %s7, 64
    %v2069 = vld [vmem:[%s2068] sm:$0xf]
    %v2070 = vld [vmem:[%s2068 + $0x4] sm:$0xf]
    %v2071 = vld [vmem:[%s2068 + $0x8] sm:$0xf]
    %v2072 = vld [vmem:[%s2068 + $0xc] sm:$0xf]
    %v2073 = vld [vmem:[%s2068 + $0x10] sm:$0xf]
    %v2074 = vld [vmem:[%s2068 + $0x14] sm:$0xf]
    %v2075 = vld [vmem:[%s2068 + $0x18] sm:$0xf]
    %v2076 = vld [vmem:[%s2068 + $0x1c] sm:$0xf]
    %v2077 = vld [vmem:[%s2068 + $0x20] sm:$0xf]
    %v2078 = vld [vmem:[%s2068 + $0x24] sm:$0xf]
    %v2079 = vld [vmem:[%s2068 + $0x28] sm:$0xf]
    %v2080 = vld [vmem:[%s2068 + $0x2c] sm:$0xf]
    %v2081 = vld [vmem:[%s2068 + $0x30] sm:$0xf]
    %v2082 = vld [vmem:[%s2068 + $0x34] sm:$0xf]
    %v2083 = vld [vmem:[%s2068 + $0x38] sm:$0xf]
    %v2084 = vld [vmem:[%s2068 + $0x3c] sm:$0xf]
    %v2085 = vpack.c.bf16 %v2038, %v2036
    %v2086 = vpack.c.bf16 %v2066, %v2064
    %v2103 = vunpack.c.l.b16 %v2069
    %v2104 = vunpack.c.l.b16 %v2070
    %v2105 = vunpack.c.l.b16 %v2071
    %v2106 = vunpack.c.l.b16 %v2072
    %v2107 = vunpack.c.l.b16 %v2073
    %v2108 = vunpack.c.l.b16 %v2074
    %v2109 = vunpack.c.l.b16 %v2075
    %v2110 = vunpack.c.l.b16 %v2076
    %v2111 = vunpack.c.l.b16 %v2077
    %v2112 = vunpack.c.l.b16 %v2078
    %v2113 = vunpack.c.l.b16 %v2079
    %v2114 = vunpack.c.l.b16 %v2080
    %v2115 = vunpack.c.l.b16 %v2081
    %v2116 = vunpack.c.l.b16 %v2082
    %v2117 = vunpack.c.l.b16 %v2083
    %v2118 = vunpack.c.l.b16 %v2084
    %v2119 = vpack.c.b16 %v2104, %v2103
    %v2120 = vpack.c.b16 %v2106, %v2105
    %v2121 = vpack.c.b16 %v2108, %v2107
    %v2122 = vpack.c.b16 %v2110, %v2109
    %v2123 = vpack.c.b16 %v2112, %v2111
    %v2124 = vpack.c.b16 %v2114, %v2113
    %v2125 = vpack.c.b16 %v2116, %v2115
    %v2126 = vpack.c.b16 %v2118, %v2117
    %2135 = vmatpush.bf16.msra.mxu0 %v2126
    %2136 = vmatpush.bf16.msra.mxu0 %v2125
    %2137 = vmatpush.bf16.msra.mxu0 %v2124
    %2138 = vmatpush.bf16.msra.mxu0 %v2123
    %2139 = vmatpush.bf16.msra.mxu0 %v2122
    %2140 = vmatpush.bf16.msra.mxu0 %v2121
    %2141 = vmatpush.bf16.msra.mxu0 %v2120
    %2142 = vmatpush.bf16.msra.mxu0 %v2119
    %2143 = vmatmul.bf16.gmra.mxu0 %v2085
    %v2144 = vpop.f32.mrf.mxu0
    %v2145 = vadd.f32 0.0, %v2144
    %v2146 = vpop.f32.mrf.mxu0
    %v2147 = vadd.f32 0.0, %v2146
    %2148 = vmatmul.bf16.gmra.mxu0 %v2086
    %v2149 = vpop.f32.mrf.mxu0
    %v2150 = vadd.f32 0.0, %v2149
    %v2151 = vpop.f32.mrf.mxu0
    %v2152 = vadd.f32 0.0, %v2151
    %2153 = vdwg.mxu0
    %v2154 = vadd.f32 %v1561, %v2145
    %v2155 = vadd.f32 %v1562, %v2147
    %v2156 = vadd.f32 %v1563, %v2150
    %v2157 = vadd.f32 %v1564, %v2152
    %s2158 = scalar_lea.vmem %s8, 1
    %v2159 = vld [vmem:[%s2158] sm:$0x1]
    %v2161 = vperm.slane %v2159, 0
    %v2163 = vadd.f32 %v2154, %v2161
    %v2164 = vadd.f32 %v2155, %v2161
    %v2165 = vadd.f32 %v2156, %v2161
    %v2166 = vadd.f32 %v2157, %v2161
    %s2167 = scalar_lea.vmem %s9, 1
    %v2168 = vld [vmem:[%s2167] sm:$0x1]
    %s2169 = scalar_lea.vmem %s10, 1
    %v2170 = vld [vmem:[%s2169] sm:$0x1]
    %2171 = vadd.xlane.f32.xlu0 %v2163
    %v2172 = vpop.xlane.xlu0 %2171
    %2173 = vadd.xlane.f32.xlu0 %v2164
    %v2174 = vpop.xlane.xlu0 %2173
    %2175 = vadd.xlane.f32.xlu0 %v2165
    %v2176 = vpop.xlane.xlu0 %2175
    %2177 = vadd.xlane.f32.xlu0 %v2166
    %v2178 = vpop.xlane.xlu0 %2177
    %v2179 = vmul.f32 %v2172, %v130
    %v2180 = vmul.f32 %v2174, %v130
    %v2181 = vmul.f32 %v2176, %v130
    %v2182 = vmul.f32 %v2178, %v130
    %v2183 = vsub.f32 %v2163, %v2179
    %v2184 = vsub.f32 %v2164, %v2180
    %v2185 = vsub.f32 %v2165, %v2181
    %v2186 = vsub.f32 %v2166, %v2182
    %v2187 = vmul.f32 %v2183, %v2183
    %v2188 = vmul.f32 %v2184, %v2184
    %v2189 = vmul.f32 %v2185, %v2185
    %v2190 = vmul.f32 %v2186, %v2186
    %2191 = vadd.xlane.f32.xlu0 %v2187
    %v2192 = vpop.xlane.xlu0 %2191
    %2193 = vadd.xlane.f32.xlu0 %v2188
    %v2194 = vpop.xlane.xlu0 %2193
    %2195 = vadd.xlane.f32.xlu0 %v2189
    %v2196 = vpop.xlane.xlu0 %2195
    %2197 = vadd.xlane.f32.xlu0 %v2190
    %v2198 = vpop.xlane.xlu0 %2197
    %v2199 = vmul.f32 %v2192, %v130
    %v2200 = vmul.f32 %v2194, %v130
    %v2201 = vmul.f32 %v2196, %v130
    %v2202 = vmul.f32 %v2198, %v130
    %v2203 = vadd.f32 %v2199, 1e-05
    %v2204 = vadd.f32 %v2200, 1e-05
    %v2205 = vadd.f32 %v2201, 1e-05
    %v2206 = vadd.f32 %v2202, 1e-05
    %v2207 = vrsqrt.pop %v2203
    %v2208 = vmul.f32 %v2207, %v2203
    %v2209 = vmul.f32 %v2208, %v2207
    %v2210 = vmul.f32 0.5, %v2209
    %v2211 = vsub.f32 1.5, %v2210
    %v2212 = vmul.f32 %v2207, %v2211
    %vm2213 = vweird.f32 %v2203
    %vm2214 = vweird.f32 %v2207
    %vm2215 = vmor %vm2213, %vm2214
    %v2216 = vsel %vm2215, %v2207, %v2212
    %v2217 = vrsqrt.pop %v2204
    %v2218 = vmul.f32 %v2217, %v2204
    %v2219 = vmul.f32 %v2218, %v2217
    %v2220 = vmul.f32 0.5, %v2219
    %v2221 = vsub.f32 1.5, %v2220
    %v2222 = vmul.f32 %v2217, %v2221
    %vm2223 = vweird.f32 %v2204
    %vm2224 = vweird.f32 %v2217
    %vm2225 = vmor %vm2223, %vm2224
    %v2226 = vsel %vm2225, %v2217, %v2222
    %v2227 = vrsqrt.pop %v2205
    %v2228 = vmul.f32 %v2227, %v2205
    %v2229 = vmul.f32 %v2228, %v2227
    %v2230 = vmul.f32 0.5, %v2229
    %v2231 = vsub.f32 1.5, %v2230
    %v2232 = vmul.f32 %v2227, %v2231
    %vm2233 = vweird.f32 %v2205
    %vm2234 = vweird.f32 %v2227
    %vm2235 = vmor %vm2233, %vm2234
    %v2236 = vsel %vm2235, %v2227, %v2232
    %v2237 = vrsqrt.pop %v2206
    %v2238 = vmul.f32 %v2237, %v2206
    %v2239 = vmul.f32 %v2238, %v2237
    %v2240 = vmul.f32 0.5, %v2239
    %v2241 = vsub.f32 1.5, %v2240
    %v2242 = vmul.f32 %v2237, %v2241
    %vm2243 = vweird.f32 %v2206
    %vm2244 = vweird.f32 %v2237
    %vm2245 = vmor %vm2243, %vm2244
    %v2246 = vsel %vm2245, %v2237, %v2242
    %v2247 = vmul.f32 %v2183, %v2216
    %v2248 = vmul.f32 %v2184, %v2226
    %v2249 = vmul.f32 %v2185, %v2236
    %v2250 = vmul.f32 %v2186, %v2246
    %v2252 = vperm.slane %v2168, 0
    %v2254 = vmul.f32 %v2247, %v2252
    %v2255 = vmul.f32 %v2248, %v2252
    %v2256 = vmul.f32 %v2249, %v2252
    %v2257 = vmul.f32 %v2250, %v2252
    %v2259 = vperm.slane %v2170, 0
    %v2261 = vadd.f32 %v2254, %v2259
    %v2262 = vadd.f32 %v2255, %v2259
    %v2263 = vadd.f32 %v2256, %v2259
    %v2264 = vadd.f32 %v2257, %v2259
    %s2265 = scalar_lea.vmem [#allocation4], 256
    %v2266 = vld [vmem:[%s2265] sm:$0xff]
    %v2267 = vld [vmem:[%s2265 + $0x8] sm:$0xff]
    %v2268 = vld [vmem:[%s2265 + $0x10] sm:$0xff]
    %v2269 = vld [vmem:[%s2265 + $0x18] sm:$0xff]
    %v2270 = vld [vmem:[%s2265 + $0x20] sm:$0xff]
    %v2271 = vld [vmem:[%s2265 + $0x28] sm:$0xff]
    %v2272 = vld [vmem:[%s2265 + $0x30] sm:$0xff]
    %v2273 = vld [vmem:[%s2265 + $0x38] sm:$0xff]
    %v2274 = vld [vmem:[%s2265 + $0x40] sm:$0xff]
    %v2275 = vld [vmem:[%s2265 + $0x48] sm:$0xff]
    %v2276 = vld [vmem:[%s2265 + $0x50] sm:$0xff]
    %v2277 = vld [vmem:[%s2265 + $0x58] sm:$0xff]
    %v2278 = vld [vmem:[%s2265 + $0x60] sm:$0xff]
    %v2279 = vld [vmem:[%s2265 + $0x68] sm:$0xff]
    %v2280 = vld [vmem:[%s2265 + $0x70] sm:$0xff]
    %v2281 = vld [vmem:[%s2265 + $0x78] sm:$0xff]
    %v2282 = vld [vmem:[%s2265 + $0x80] sm:$0xff]
    %v2283 = vld [vmem:[%s2265 + $0x88] sm:$0xff]
    %v2284 = vld [vmem:[%s2265 + $0x90] sm:$0xff]
    %v2285 = vld [vmem:[%s2265 + $0x98] sm:$0xff]
    %v2286 = vld [vmem:[%s2265 + $0xa0] sm:$0xff]
    %v2287 = vld [vmem:[%s2265 + $0xa8] sm:$0xff]
    %v2288 = vld [vmem:[%s2265 + $0xb0] sm:$0xff]
    %v2289 = vld [vmem:[%s2265 + $0xb8] sm:$0xff]
    %v2290 = vld [vmem:[%s2265 + $0xc0] sm:$0xff]
    %v2291 = vld [vmem:[%s2265 + $0xc8] sm:$0xff]
    %v2292 = vld [vmem:[%s2265 + $0xd0] sm:$0xff]
    %v2293 = vld [vmem:[%s2265 + $0xd8] sm:$0xff]
    %v2294 = vld [vmem:[%s2265 + $0xe0] sm:$0xff]
    %v2295 = vld [vmem:[%s2265 + $0xe8] sm:$0xff]
    %v2296 = vld [vmem:[%s2265 + $0xf0] sm:$0xff]
    %v2297 = vld [vmem:[%s2265 + $0xf8] sm:$0xff]
    %v2298 = vpack.c.bf16 %v2262, %v2261
    %v2299 = vpack.c.bf16 %v2264, %v2263
    %s2300 = scalar_lea.vmem %s12, 4
    %v2301 = vld [vmem:[%s2300] sm:$0xf]
    %v2303 = vperm.slane %v2301, 0
    %v2304 = vperm.slane %v2301, 1
    %v2305 = vperm.slane %v2301, 2
    %v2306 = vperm.slane %v2301, 3
    %v2343 = vunpack.c.l.b16 %v2266
    %v2344 = vunpack.c.h.b16 %v2266
    %v2345 = vunpack.c.l.b16 %v2267
    %v2346 = vunpack.c.h.b16 %v2267
    %v2347 = vunpack.c.l.b16 %v2268
    %v2348 = vunpack.c.h.b16 %v2268
    %v2349 = vunpack.c.l.b16 %v2269
    %v2350 = vunpack.c.h.b16 %v2269
    %v2351 = vunpack.c.l.b16 %v2270
    %v2352 = vunpack.c.h.b16 %v2270
    %v2353 = vunpack.c.l.b16 %v2271
    %v2354 = vunpack.c.h.b16 %v2271
    %v2355 = vunpack.c.l.b16 %v2272
    %v2356 = vunpack.c.h.b16 %v2272
    %v2357 = vunpack.c.l.b16 %v2273
    %v2358 = vunpack.c.h.b16 %v2273
    %v2359 = vunpack.c.l.b16 %v2274
    %v2360 = vunpack.c.h.b16 %v2274
    %v2361 = vunpack.c.l.b16 %v2275
    %v2362 = vunpack.c.h.b16 %v2275
    %v2363 = vunpack.c.l.b16 %v2276
    %v2364 = vunpack.c.h.b16 %v2276
    %v2365 = vunpack.c.l.b16 %v2277
    %v2366 = vunpack.c.h.b16 %v2277
    %v2367 = vunpack.c.l.b16 %v2278
    %v2368 = vunpack.c.h.b16 %v2278
    %v2369 = vunpack.c.l.b16 %v2279
    %v2370 = vunpack.c.h.b16 %v2279
    %v2371 = vunpack.c.l.b16 %v2280
    %v2372 = vunpack.c.h.b16 %v2280
    %v2373 = vunpack.c.l.b16 %v2281
    %v2374 = vunpack.c.h.b16 %v2281
    %v2375 = vunpack.c.l.b16 %v2282
    %v2376 = vunpack.c.h.b16 %v2282
    %v2377 = vunpack.c.l.b16 %v2283
    %v2378 = vunpack.c.h.b16 %v2283
    %v2379 = vunpack.c.l.b16 %v2284
    %v2380 = vunpack.c.h.b16 %v2284
    %v2381 = vunpack.c.l.b16 %v2285
    %v2382 = vunpack.c.h.b16 %v2285
    %v2383 = vunpack.c.l.b16 %v2286
    %v2384 = vunpack.c.h.b16 %v2286
    %v2385 = vunpack.c.l.b16 %v2287
    %v2386 = vunpack.c.h.b16 %v2287
    %v2387 = vunpack.c.l.b16 %v2288
    %v2388 = vunpack.c.h.b16 %v2288
    %v2389 = vunpack.c.l.b16 %v2289
    %v2390 = vunpack.c.h.b16 %v2289
    %v2391 = vunpack.c.l.b16 %v2290
    %v2392 = vunpack.c.h.b16 %v2290
    %v2393 = vunpack.c.l.b16 %v2291
    %v2394 = vunpack.c.h.b16 %v2291
    %v2395 = vunpack.c.l.b16 %v2292
    %v2396 = vunpack.c.h.b16 %v2292
    %v2397 = vunpack.c.l.b16 %v2293
    %v2398 = vunpack.c.h.b16 %v2293
    %v2399 = vunpack.c.l.b16 %v2294
    %v2400 = vunpack.c.h.b16 %v2294
    %v2401 = vunpack.c.l.b16 %v2295
    %v2402 = vunpack.c.h.b16 %v2295
    %v2403 = vunpack.c.l.b16 %v2296
    %v2404 = vunpack.c.h.b16 %v2296
    %v2405 = vunpack.c.l.b16 %v2297
    %v2406 = vunpack.c.h.b16 %v2297
    %v2407 = vpack.c.b16 %v2347, %v2343
    %v2408 = vpack.c.b16 %v2348, %v2344
    %v2409 = vpack.c.b16 %v2349, %v2345
    %v2410 = vpack.c.b16 %v2350, %v2346
    %v2411 = vpack.c.b16 %v2355, %v2351
    %v2412 = vpack.c.b16 %v2356, %v2352
    %v2413 = vpack.c.b16 %v2357, %v2353
    %v2414 = vpack.c.b16 %v2358, %v2354
    %v2415 = vpack.c.b16 %v2363, %v2359
    %v2416 = vpack.c.b16 %v2364, %v2360
    %v2417 = vpack.c.b16 %v2365, %v2361
    %v2418 = vpack.c.b16 %v2366, %v2362
    %v2419 = vpack.c.b16 %v2371, %v2367
    %v2420 = vpack.c.b16 %v2372, %v2368
    %v2421 = vpack.c.b16 %v2373, %v2369
    %v2422 = vpack.c.b16 %v2374, %v2370
    %v2423 = vpack.c.b16 %v2379, %v2375
    %v2424 = vpack.c.b16 %v2380, %v2376
    %v2425 = vpack.c.b16 %v2381, %v2377
    %v2426 = vpack.c.b16 %v2382, %v2378
    %v2427 = vpack.c.b16 %v2387, %v2383
    %v2428 = vpack.c.b16 %v2388, %v2384
    %v2429 = vpack.c.b16 %v2389, %v2385
    %v2430 = vpack.c.b16 %v2390, %v2386
    %v2431 = vpack.c.b16 %v2395, %v2391
    %v2432 = vpack.c.b16 %v2396, %v2392
    %v2433 = vpack.c.b16 %v2397, %v2393
    %v2434 = vpack.c.b16 %v2398, %v2394
    %v2435 = vpack.c.b16 %v2403, %v2399
    %v2436 = vpack.c.b16 %v2404, %v2400
    %v2437 = vpack.c.b16 %v2405, %v2401
    %v2438 = vpack.c.b16 %v2406, %v2402
    %2471 = vmatpush.bf16.msra.mxu0 %v2435
    %2472 = vmatpush.bf16.msra.mxu0 %v2431
    %2473 = vmatpush.bf16.msra.mxu0 %v2427
    %2474 = vmatpush.bf16.msra.mxu0 %v2423
    %2475 = vmatpush.bf16.msra.mxu0 %v2419
    %2476 = vmatpush.bf16.msra.mxu0 %v2415
    %2477 = vmatpush.bf16.msra.mxu0 %v2411
    %2478 = vmatpush.bf16.msra.mxu0 %v2407
    %2479 = vmatmul.bf16.gmra.mxu0 %v2298
    %v2480 = vpop.f32.mrf.mxu0
    %v2481 = vadd.f32 %v2303, %v2480
    %v2482 = vpop.f32.mrf.mxu0
    %v2483 = vadd.f32 %v2303, %v2482
    %2484 = vmatmul.bf16.gmra.mxu0 %v2299
    %v2485 = vpop.f32.mrf.mxu0
    %v2486 = vadd.f32 %v2303, %v2485
    %v2487 = vpop.f32.mrf.mxu0
    %v2488 = vadd.f32 %v2303, %v2487
    %2489 = vdwg.mxu0
    %2490 = vmatpush.bf16.msra.mxu0 %v2436
    %2491 = vmatpush.bf16.msra.mxu0 %v2432
    %2492 = vmatpush.bf16.msra.mxu0 %v2428
    %2493 = vmatpush.bf16.msra.mxu0 %v2424
    %2494 = vmatpush.bf16.msra.mxu0 %v2420
    %2495 = vmatpush.bf16.msra.mxu0 %v2416
    %2496 = vmatpush.bf16.msra.mxu0 %v2412
    %2497 = vmatpush.bf16.msra.mxu0 %v2408
    %2498 = vmatmul.bf16.gmra.mxu0 %v2298
    %v2499 = vpop.f32.mrf.mxu0
    %v2500 = vadd.f32 %v2304, %v2499
    %v2501 = vpop.f32.mrf.mxu0
    %v2502 = vadd.f32 %v2304, %v2501
    %2503 = vmatmul.bf16.gmra.mxu0 %v2299
    %v2504 = vpop.f32.mrf.mxu0
    %v2505 = vadd.f32 %v2304, %v2504
    %v2506 = vpop.f32.mrf.mxu0
    %v2507 = vadd.f32 %v2304, %v2506
    %2508 = vdwg.mxu0
    %2509 = vmatpush.bf16.msra.mxu0 %v2437
    %2510 = vmatpush.bf16.msra.mxu0 %v2433
    %2511 = vmatpush.bf16.msra.mxu0 %v2429
    %2512 = vmatpush.bf16.msra.mxu0 %v2425
    %2513 = vmatpush.bf16.msra.mxu0 %v2421
    %2514 = vmatpush.bf16.msra.mxu0 %v2417
    %2515 = vmatpush.bf16.msra.mxu0 %v2413
    %2516 = vmatpush.bf16.msra.mxu0 %v2409
    %2517 = vmatmul.bf16.gmra.mxu0 %v2298
    %v2518 = vpop.f32.mrf.mxu0
    %v2519 = vadd.f32 %v2305, %v2518
    %v2520 = vpop.f32.mrf.mxu0
    %v2521 = vadd.f32 %v2305, %v2520
    %2522 = vmatmul.bf16.gmra.mxu0 %v2299
    %v2523 = vpop.f32.mrf.mxu0
    %v2524 = vadd.f32 %v2305, %v2523
    %v2525 = vpop.f32.mrf.mxu0
    %v2526 = vadd.f32 %v2305, %v2525
    %2527 = vdwg.mxu0
    %2528 = vmatpush.bf16.msra.mxu0 %v2438
    %2529 = vmatpush.bf16.msra.mxu0 %v2434
    %2530 = vmatpush.bf16.msra.mxu0 %v2430
    %2531 = vmatpush.bf16.msra.mxu0 %v2426
    %2532 = vmatpush.bf16.msra.mxu0 %v2422
    %2533 = vmatpush.bf16.msra.mxu0 %v2418
    %2534 = vmatpush.bf16.msra.mxu0 %v2414
    %2535 = vmatpush.bf16.msra.mxu0 %v2410
    %2536 = vmatmul.bf16.gmra.mxu0 %v2298
    %v2537 = vpop.f32.mrf.mxu0
    %v2538 = vadd.f32 %v2306, %v2537
    %v2539 = vpop.f32.mrf.mxu0
    %v2540 = vadd.f32 %v2306, %v2539
    %2541 = vmatmul.bf16.gmra.mxu0 %v2299
    %v2542 = vpop.f32.mrf.mxu0
    %v2543 = vadd.f32 %v2306, %v2542
    %v2544 = vpop.f32.mrf.mxu0
    %v2545 = vadd.f32 %v2306, %v2544
    %2546 = vdwg.mxu0
    %v2547 = vmax.f32 %v2481, 0.0
    %v2548 = vmax.f32 %v2500, 0.0
    %v2549 = vmax.f32 %v2519, 0.0
    %v2550 = vmax.f32 %v2538, 0.0
    %v2551 = vmax.f32 %v2483, 0.0
    %v2552 = vmax.f32 %v2502, 0.0
    %v2553 = vmax.f32 %v2521, 0.0
    %v2554 = vmax.f32 %v2540, 0.0
    %v2555 = vmax.f32 %v2486, 0.0
    %v2556 = vmax.f32 %v2505, 0.0
    %v2557 = vmax.f32 %v2524, 0.0
    %v2558 = vmax.f32 %v2543, 0.0
    %v2559 = vmax.f32 %v2488, 0.0
    %v2560 = vmax.f32 %v2507, 0.0
    %v2561 = vmax.f32 %v2526, 0.0
    %v2562 = vmax.f32 %v2545, 0.0
    %s2563 = scalar_lea.vmem [#allocation6], 256
    %v2564 = vld [vmem:[%s2563] sm:$0xf]
    %v2565 = vld [vmem:[%s2563 + $0x4] sm:$0xf]
    %v2566 = vld [vmem:[%s2563 + $0x8] sm:$0xf]
    %v2567 = vld [vmem:[%s2563 + $0xc] sm:$0xf]
    %v2568 = vld [vmem:[%s2563 + $0x10] sm:$0xf]
    %v2569 = vld [vmem:[%s2563 + $0x14] sm:$0xf]
    %v2570 = vld [vmem:[%s2563 + $0x18] sm:$0xf]
    %v2571 = vld [vmem:[%s2563 + $0x1c] sm:$0xf]
    %v2572 = vld [vmem:[%s2563 + $0x20] sm:$0xf]
    %v2573 = vld [vmem:[%s2563 + $0x24] sm:$0xf]
    %v2574 = vld [vmem:[%s2563 + $0x28] sm:$0xf]
    %v2575 = vld [vmem:[%s2563 + $0x2c] sm:$0xf]
    %v2576 = vld [vmem:[%s2563 + $0x30] sm:$0xf]
    %v2577 = vld [vmem:[%s2563 + $0x34] sm:$0xf]
    %v2578 = vld [vmem:[%s2563 + $0x38] sm:$0xf]
    %v2579 = vld [vmem:[%s2563 + $0x3c] sm:$0xf]
    %v2580 = vld [vmem:[%s2563 + $0x40] sm:$0xf]
    %v2581 = vld [vmem:[%s2563 + $0x44] sm:$0xf]
    %v2582 = vld [vmem:[%s2563 + $0x48] sm:$0xf]
    %v2583 = vld [vmem:[%s2563 + $0x4c] sm:$0xf]
    %v2584 = vld [vmem:[%s2563 + $0x50] sm:$0xf]
    %v2585 = vld [vmem:[%s2563 + $0x54] sm:$0xf]
    %v2586 = vld [vmem:[%s2563 + $0x58] sm:$0xf]
    %v2587 = vld [vmem:[%s2563 + $0x5c] sm:$0xf]
    %v2588 = vld [vmem:[%s2563 + $0x60] sm:$0xf]
    %v2589 = vld [vmem:[%s2563 + $0x64] sm:$0xf]
    %v2590 = vld [vmem:[%s2563 + $0x68] sm:$0xf]
    %v2591 = vld [vmem:[%s2563 + $0x6c] sm:$0xf]
    %v2592 = vld [vmem:[%s2563 + $0x70] sm:$0xf]
    %v2593 = vld [vmem:[%s2563 + $0x74] sm:$0xf]
    %v2594 = vld [vmem:[%s2563 + $0x78] sm:$0xf]
    %v2595 = vld [vmem:[%s2563 + $0x7c] sm:$0xf]
    %v2596 = vld [vmem:[%s2563 + $0x80] sm:$0xf]
    %v2597 = vld [vmem:[%s2563 + $0x84] sm:$0xf]
    %v2598 = vld [vmem:[%s2563 + $0x88] sm:$0xf]
    %v2599 = vld [vmem:[%s2563 + $0x8c] sm:$0xf]
    %v2600 = vld [vmem:[%s2563 + $0x90] sm:$0xf]
    %v2601 = vld [vmem:[%s2563 + $0x94] sm:$0xf]
    %v2602 = vld [vmem:[%s2563 + $0x98] sm:$0xf]
    %v2603 = vld [vmem:[%s2563 + $0x9c] sm:$0xf]
    %v2604 = vld [vmem:[%s2563 + $0xa0] sm:$0xf]
    %v2605 = vld [vmem:[%s2563 + $0xa4] sm:$0xf]
    %v2606 = vld [vmem:[%s2563 + $0xa8] sm:$0xf]
    %v2607 = vld [vmem:[%s2563 + $0xac] sm:$0xf]
    %v2608 = vld [vmem:[%s2563 + $0xb0] sm:$0xf]
    %v2609 = vld [vmem:[%s2563 + $0xb4] sm:$0xf]
    %v2610 = vld [vmem:[%s2563 + $0xb8] sm:$0xf]
    %v2611 = vld [vmem:[%s2563 + $0xbc] sm:$0xf]
    %v2612 = vld [vmem:[%s2563 + $0xc0] sm:$0xf]
    %v2613 = vld [vmem:[%s2563 + $0xc4] sm:$0xf]
    %v2614 = vld [vmem:[%s2563 + $0xc8] sm:$0xf]
    %v2615 = vld [vmem:[%s2563 + $0xcc] sm:$0xf]
    %v2616 = vld [vmem:[%s2563 + $0xd0] sm:$0xf]
    %v2617 = vld [vmem:[%s2563 + $0xd4] sm:$0xf]
    %v2618 = vld [vmem:[%s2563 + $0xd8] sm:$0xf]
    %v2619 = vld [vmem:[%s2563 + $0xdc] sm:$0xf]
    %v2620 = vld [vmem:[%s2563 + $0xe0] sm:$0xf]
    %v2621 = vld [vmem:[%s2563 + $0xe4] sm:$0xf]
    %v2622 = vld [vmem:[%s2563 + $0xe8] sm:$0xf]
    %v2623 = vld [vmem:[%s2563 + $0xec] sm:$0xf]
    %v2624 = vld [vmem:[%s2563 + $0xf0] sm:$0xf]
    %v2625 = vld [vmem:[%s2563 + $0xf4] sm:$0xf]
    %v2626 = vld [vmem:[%s2563 + $0xf8] sm:$0xf]
    %v2627 = vld [vmem:[%s2563 + $0xfc] sm:$0xf]
    %v2628 = vpack.c.bf16 %v2551, %v2547
    %v2629 = vpack.c.bf16 %v2552, %v2548
    %v2630 = vpack.c.bf16 %v2553, %v2549
    %v2631 = vpack.c.bf16 %v2554, %v2550
    %v2632 = vpack.c.bf16 %v2559, %v2555
    %v2633 = vpack.c.bf16 %v2560, %v2556
    %v2634 = vpack.c.bf16 %v2561, %v2557
    %v2635 = vpack.c.bf16 %v2562, %v2558
    %v2700 = vunpack.c.l.b16 %v2564
    %v2701 = vunpack.c.l.b16 %v2565
    %v2702 = vunpack.c.l.b16 %v2566
    %v2703 = vunpack.c.l.b16 %v2567
    %v2704 = vunpack.c.l.b16 %v2568
    %v2705 = vunpack.c.l.b16 %v2569
    %v2706 = vunpack.c.l.b16 %v2570
    %v2707 = vunpack.c.l.b16 %v2571
    %v2708 = vunpack.c.l.b16 %v2572
    %v2709 = vunpack.c.l.b16 %v2573
    %v2710 = vunpack.c.l.b16 %v2574
    %v2711 = vunpack.c.l.b16 %v2575
    %v2712 = vunpack.c.l.b16 %v2576
    %v2713 = vunpack.c.l.b16 %v2577
    %v2714 = vunpack.c.l.b16 %v2578
    %v2715 = vunpack.c.l.b16 %v2579
    %v2716 = vunpack.c.l.b16 %v2580
    %v2717 = vunpack.c.l.b16 %v2581
    %v2718 = vunpack.c.l.b16 %v2582
    %v2719 = vunpack.c.l.b16 %v2583
    %v2720 = vunpack.c.l.b16 %v2584
    %v2721 = vunpack.c.l.b16 %v2585
    %v2722 = vunpack.c.l.b16 %v2586
    %v2723 = vunpack.c.l.b16 %v2587
    %v2724 = vunpack.c.l.b16 %v2588
    %v2725 = vunpack.c.l.b16 %v2589
    %v2726 = vunpack.c.l.b16 %v2590
    %v2727 = vunpack.c.l.b16 %v2591
    %v2728 = vunpack.c.l.b16 %v2592
    %v2729 = vunpack.c.l.b16 %v2593
    %v2730 = vunpack.c.l.b16 %v2594
    %v2731 = vunpack.c.l.b16 %v2595
    %v2732 = vunpack.c.l.b16 %v2596
    %v2733 = vunpack.c.l.b16 %v2597
    %v2734 = vunpack.c.l.b16 %v2598
    %v2735 = vunpack.c.l.b16 %v2599
    %v2736 = vunpack.c.l.b16 %v2600
    %v2737 = vunpack.c.l.b16 %v2601
    %v2738 = vunpack.c.l.b16 %v2602
    %v2739 = vunpack.c.l.b16 %v2603
    %v2740 = vunpack.c.l.b16 %v2604
    %v2741 = vunpack.c.l.b16 %v2605
    %v2742 = vunpack.c.l.b16 %v2606
    %v2743 = vunpack.c.l.b16 %v2607
    %v2744 = vunpack.c.l.b16 %v2608
    %v2745 = vunpack.c.l.b16 %v2609
    %v2746 = vunpack.c.l.b16 %v2610
    %v2747 = vunpack.c.l.b16 %v2611
    %v2748 = vunpack.c.l.b16 %v2612
    %v2749 = vunpack.c.l.b16 %v2613
    %v2750 = vunpack.c.l.b16 %v2614
    %v2751 = vunpack.c.l.b16 %v2615
    %v2752 = vunpack.c.l.b16 %v2616
    %v2753 = vunpack.c.l.b16 %v2617
    %v2754 = vunpack.c.l.b16 %v2618
    %v2755 = vunpack.c.l.b16 %v2619
    %v2756 = vunpack.c.l.b16 %v2620
    %v2757 = vunpack.c.l.b16 %v2621
    %v2758 = vunpack.c.l.b16 %v2622
    %v2759 = vunpack.c.l.b16 %v2623
    %v2760 = vunpack.c.l.b16 %v2624
    %v2761 = vunpack.c.l.b16 %v2625
    %v2762 = vunpack.c.l.b16 %v2626
    %v2763 = vunpack.c.l.b16 %v2627
    %v2764 = vpack.c.b16 %v2701, %v2700
    %v2765 = vpack.c.b16 %v2703, %v2702
    %v2766 = vpack.c.b16 %v2705, %v2704
    %v2767 = vpack.c.b16 %v2707, %v2706
    %v2768 = vpack.c.b16 %v2709, %v2708
    %v2769 = vpack.c.b16 %v2711, %v2710
    %v2770 = vpack.c.b16 %v2713, %v2712
    %v2771 = vpack.c.b16 %v2715, %v2714
    %v2772 = vpack.c.b16 %v2717, %v2716
    %v2773 = vpack.c.b16 %v2719, %v2718
    %v2774 = vpack.c.b16 %v2721, %v2720
    %v2775 = vpack.c.b16 %v2723, %v2722
    %v2776 = vpack.c.b16 %v2725, %v2724
    %v2777 = vpack.c.b16 %v2727, %v2726
    %v2778 = vpack.c.b16 %v2729, %v2728
    %v2779 = vpack.c.b16 %v2731, %v2730
    %v2780 = vpack.c.b16 %v2733, %v2732
    %v2781 = vpack.c.b16 %v2735, %v2734
    %v2782 = vpack.c.b16 %v2737, %v2736
    %v2783 = vpack.c.b16 %v2739, %v2738
    %v2784 = vpack.c.b16 %v2741, %v2740
    %v2785 = vpack.c.b16 %v2743, %v2742
    %v2786 = vpack.c.b16 %v2745, %v2744
    %v2787 = vpack.c.b16 %v2747, %v2746
    %v2788 = vpack.c.b16 %v2749, %v2748
    %v2789 = vpack.c.b16 %v2751, %v2750
    %v2790 = vpack.c.b16 %v2753, %v2752
    %v2791 = vpack.c.b16 %v2755, %v2754
    %v2792 = vpack.c.b16 %v2757, %v2756
    %v2793 = vpack.c.b16 %v2759, %v2758
    %v2794 = vpack.c.b16 %v2761, %v2760
    %v2795 = vpack.c.b16 %v2763, %v2762
    %2828 = vmatpush.bf16.msra.mxu0 %v2771
    %2829 = vmatpush.bf16.msra.mxu0 %v2770
    %2830 = vmatpush.bf16.msra.mxu0 %v2769
    %2831 = vmatpush.bf16.msra.mxu0 %v2768
    %2832 = vmatpush.bf16.msra.mxu0 %v2767
    %2833 = vmatpush.bf16.msra.mxu0 %v2766
    %2834 = vmatpush.bf16.msra.mxu0 %v2765
    %2835 = vmatpush.bf16.msra.mxu0 %v2764
    %2836 = vmatmul.bf16.gmra.mxu0 %v2628
    %v2837 = vpop.f32.mrf.mxu0
    %v2838 = vadd.f32 0.0, %v2837
    %v2839 = vpop.f32.mrf.mxu0
    %v2840 = vadd.f32 0.0, %v2839
    %2841 = vmatmul.bf16.gmra.mxu0 %v2632
    %v2842 = vpop.f32.mrf.mxu0
    %v2843 = vadd.f32 0.0, %v2842
    %v2844 = vpop.f32.mrf.mxu0
    %v2845 = vadd.f32 0.0, %v2844
    %2846 = vdwg.mxu0
    %2847 = vmatpush.bf16.msra.mxu0 %v2779
    %2848 = vmatpush.bf16.msra.mxu0 %v2778
    %2849 = vmatpush.bf16.msra.mxu0 %v2777
    %2850 = vmatpush.bf16.msra.mxu0 %v2776
    %2851 = vmatpush.bf16.msra.mxu0 %v2775
    %2852 = vmatpush.bf16.msra.mxu0 %v2774
    %2853 = vmatpush.bf16.msra.mxu0 %v2773
    %2854 = vmatpush.bf16.msra.mxu0 %v2772
    %2855 = vmatmul.bf16.gmra.mxu0 %v2629
    %v2856 = vpop.f32.mrf.mxu0
    %v2857 = vadd.f32 %v2838, %v2856
    %v2858 = vpop.f32.mrf.mxu0
    %v2859 = vadd.f32 %v2840, %v2858
    %2860 = vmatmul.bf16.gmra.mxu0 %v2633
    %v2861 = vpop.f32.mrf.mxu0
    %v2862 = vadd.f32 %v2843, %v2861
    %v2863 = vpop.f32.mrf.mxu0
    %v2864 = vadd.f32 %v2845, %v2863
    %2865 = vdwg.mxu0
    %2866 = vmatpush.bf16.msra.mxu0 %v2787
    %2867 = vmatpush.bf16.msra.mxu0 %v2786
    %2868 = vmatpush.bf16.msra.mxu0 %v2785
    %2869 = vmatpush.bf16.msra.mxu0 %v2784
    %2870 = vmatpush.bf16.msra.mxu0 %v2783
    %2871 = vmatpush.bf16.msra.mxu0 %v2782
    %2872 = vmatpush.bf16.msra.mxu0 %v2781
    %2873 = vmatpush.bf16.msra.mxu0 %v2780
    %2874 = vmatmul.bf16.gmra.mxu0 %v2630
    %v2875 = vpop.f32.mrf.mxu0
    %v2876 = vadd.f32 %v2857, %v2875
    %v2877 = vpop.f32.mrf.mxu0
    %v2878 = vadd.f32 %v2859, %v2877
    %2879 = vmatmul.bf16.gmra.mxu0 %v2634
    %v2880 = vpop.f32.mrf.mxu0
    %v2881 = vadd.f32 %v2862, %v2880
    %v2882 = vpop.f32.mrf.mxu0
    %v2883 = vadd.f32 %v2864, %v2882
    %2884 = vdwg.mxu0
    %2885 = vmatpush.bf16.msra.mxu0 %v2795
    %2886 = vmatpush.bf16.msra.mxu0 %v2794
    %2887 = vmatpush.bf16.msra.mxu0 %v2793
    %2888 = vmatpush.bf16.msra.mxu0 %v2792
    %2889 = vmatpush.bf16.msra.mxu0 %v2791
    %2890 = vmatpush.bf16.msra.mxu0 %v2790
    %2891 = vmatpush.bf16.msra.mxu0 %v2789
    %2892 = vmatpush.bf16.msra.mxu0 %v2788
    %2893 = vmatmul.bf16.gmra.mxu0 %v2631
    %v2894 = vpop.f32.mrf.mxu0
    %v2895 = vadd.f32 %v2876, %v2894
    %v2896 = vpop.f32.mrf.mxu0
    %v2897 = vadd.f32 %v2878, %v2896
    %2898 = vmatmul.bf16.gmra.mxu0 %v2635
    %v2899 = vpop.f32.mrf.mxu0
    %v2900 = vadd.f32 %v2881, %v2899
    %v2901 = vpop.f32.mrf.mxu0
    %v2902 = vadd.f32 %v2883, %v2901
    %2903 = vdwg.mxu0
    %v2904 = vadd.f32 %v2163, %v2895
    %v2905 = vadd.f32 %v2164, %v2897
    %v2906 = vadd.f32 %v2165, %v2900
    %v2907 = vadd.f32 %v2166, %v2902
    %s2908 = scalar_lea.vmem %s14, 1
    %v2909 = vld [vmem:[%s2908] sm:$0x1]
    %v2911 = vperm.slane %v2909, 0
    %v2913 = vadd.f32 %v2904, %v2911
    %v2914 = vadd.f32 %v2905, %v2911
    %v2915 = vadd.f32 %v2906, %v2911
    %v2916 = vadd.f32 %v2907, %v2911
    %s2917 = scalar_lea.vmem %s3, 2
    %v2918 = vld [vmem:[%s2917] sm:$0x1]
    %s2919 = scalar_lea.vmem %s4, 2
    %v2920 = vld [vmem:[%s2919] sm:$0x1]
    %2921 = vadd.xlane.f32.xlu0 %v2913
    %v2922 = vpop.xlane.xlu0 %2921
    %2923 = vadd.xlane.f32.xlu0 %v2914
    %v2924 = vpop.xlane.xlu0 %2923
    %2925 = vadd.xlane.f32.xlu0 %v2915
    %v2926 = vpop.xlane.xlu0 %2925
    %2927 = vadd.xlane.f32.xlu0 %v2916
    %v2928 = vpop.xlane.xlu0 %2927
    %v2929 = vmul.f32 %v2922, %v130
    %v2930 = vmul.f32 %v2924, %v130
    %v2931 = vmul.f32 %v2926, %v130
    %v2932 = vmul.f32 %v2928, %v130
    %v2933 = vsub.f32 %v2913, %v2929
    %v2934 = vsub.f32 %v2914, %v2930
    %v2935 = vsub.f32 %v2915, %v2931
    %v2936 = vsub.f32 %v2916, %v2932
    %v2937 = vmul.f32 %v2933, %v2933
    %v2938 = vmul.f32 %v2934, %v2934
    %v2939 = vmul.f32 %v2935, %v2935
    %v2940 = vmul.f32 %v2936, %v2936
    %2941 = vadd.xlane.f32.xlu0 %v2937
    %v2942 = vpop.xlane.xlu0 %2941
    %2943 = vadd.xlane.f32.xlu0 %v2938
    %v2944 = vpop.xlane.xlu0 %2943
    %2945 = vadd.xlane.f32.xlu0 %v2939
    %v2946 = vpop.xlane.xlu0 %2945
    %2947 = vadd.xlane.f32.xlu0 %v2940
    %v2948 = vpop.xlane.xlu0 %2947
    %v2949 = vmul.f32 %v2942, %v130
    %v2950 = vmul.f32 %v2944, %v130
    %v2951 = vmul.f32 %v2946, %v130
    %v2952 = vmul.f32 %v2948, %v130
    %v2953 = vadd.f32 %v2949, 1e-05
    %v2954 = vadd.f32 %v2950, 1e-05
    %v2955 = vadd.f32 %v2951, 1e-05
    %v2956 = vadd.f32 %v2952, 1e-05
    %v2957 = vrsqrt.pop %v2953
    %v2958 = vmul.f32 %v2957, %v2953
    %v2959 = vmul.f32 %v2958, %v2957
    %v2960 = vmul.f32 0.5, %v2959
    %v2961 = vsub.f32 1.5, %v2960
    %v2962 = vmul.f32 %v2957, %v2961
    %vm2963 = vweird.f32 %v2953
    %vm2964 = vweird.f32 %v2957
    %vm2965 = vmor %vm2963, %vm2964
    %v2966 = vsel %vm2965, %v2957, %v2962
    %v2967 = vrsqrt.pop %v2954
    %v2968 = vmul.f32 %v2967, %v2954
    %v2969 = vmul.f32 %v2968, %v2967
    %v2970 = vmul.f32 0.5, %v2969
    %v2971 = vsub.f32 1.5, %v2970
    %v2972 = vmul.f32 %v2967, %v2971
    %vm2973 = vweird.f32 %v2954
    %vm2974 = vweird.f32 %v2967
    %vm2975 = vmor %vm2973, %vm2974
    %v2976 = vsel %vm2975, %v2967, %v2972
    %v2977 = vrsqrt.pop %v2955
    %v2978 = vmul.f32 %v2977, %v2955
    %v2979 = vmul.f32 %v2978, %v2977
    %v2980 = vmul.f32 0.5, %v2979
    %v2981 = vsub.f32 1.5, %v2980
    %v2982 = vmul.f32 %v2977, %v2981
    %vm2983 = vweird.f32 %v2955
    %vm2984 = vweird.f32 %v2977
    %vm2985 = vmor %vm2983, %vm2984
    %v2986 = vsel %vm2985, %v2977, %v2982
    %v2987 = vrsqrt.pop %v2956
    %v2988 = vmul.f32 %v2987, %v2956
    %v2989 = vmul.f32 %v2988, %v2987
    %v2990 = vmul.f32 0.5, %v2989
    %v2991 = vsub.f32 1.5, %v2990
    %v2992 = vmul.f32 %v2987, %v2991
    %vm2993 = vweird.f32 %v2956
    %vm2994 = vweird.f32 %v2987
    %vm2995 = vmor %vm2993, %vm2994
    %v2996 = vsel %vm2995, %v2987, %v2992
    %v2997 = vmul.f32 %v2933, %v2966
    %v2998 = vmul.f32 %v2934, %v2976
    %v2999 = vmul.f32 %v2935, %v2986
    %v3000 = vmul.f32 %v2936, %v2996
    %v3002 = vperm.slane %v2918, 0
    %v3004 = vmul.f32 %v2997, %v3002
    %v3005 = vmul.f32 %v2998, %v3002
    %v3006 = vmul.f32 %v2999, %v3002
    %v3007 = vmul.f32 %v3000, %v3002
    %v3009 = vperm.slane %v2920, 0
    %v3011 = vadd.f32 %v3004, %v3009
    %v3012 = vadd.f32 %v3005, %v3009
    %v3013 = vadd.f32 %v3006, %v3009
    %v3014 = vadd.f32 %v3007, %v3009
    %s3015 = scalar_lea.vmem [#allocation2], 384
    %v3016 = vld [vmem:[%s3015] sm:$0xff]
    %v3017 = vld [vmem:[%s3015 + $0x8] sm:$0xf]
    %v3018 = vld [vmem:[%s3015 + $0xc] sm:$0xff]
    %v3019 = vld [vmem:[%s3015 + $0x14] sm:$0xf]
    %v3020 = vld [vmem:[%s3015 + $0x18] sm:$0xff]
    %v3021 = vld [vmem:[%s3015 + $0x20] sm:$0xf]
    %v3022 = vld [vmem:[%s3015 + $0x24] sm:$0xff]
    %v3023 = vld [vmem:[%s3015 + $0x2c] sm:$0xf]
    %v3024 = vld [vmem:[%s3015 + $0x30] sm:$0xff]
    %v3025 = vld [vmem:[%s3015 + $0x38] sm:$0xf]
    %v3026 = vld [vmem:[%s3015 + $0x3c] sm:$0xff]
    %v3027 = vld [vmem:[%s3015 + $0x44] sm:$0xf]
    %v3028 = vld [vmem:[%s3015 + $0x48] sm:$0xff]
    %v3029 = vld [vmem:[%s3015 + $0x50] sm:$0xf]
    %v3030 = vld [vmem:[%s3015 + $0x54] sm:$0xff]
    %v3031 = vld [vmem:[%s3015 + $0x5c] sm:$0xf]
    %v3032 = vld [vmem:[%s3015 + $0x60] sm:$0xff]
    %v3033 = vld [vmem:[%s3015 + $0x68] sm:$0xf]
    %v3034 = vld [vmem:[%s3015 + $0x6c] sm:$0xff]
    %v3035 = vld [vmem:[%s3015 + $0x74] sm:$0xf]
    %v3036 = vld [vmem:[%s3015 + $0x78] sm:$0xff]
    %v3037 = vld [vmem:[%s3015 + $0x80] sm:$0xf]
    %v3038 = vld [vmem:[%s3015 + $0x84] sm:$0xff]
    %v3039 = vld [vmem:[%s3015 + $0x8c] sm:$0xf]
    %v3040 = vld [vmem:[%s3015 + $0x90] sm:$0xff]
    %v3041 = vld [vmem:[%s3015 + $0x98] sm:$0xf]
    %v3042 = vld [vmem:[%s3015 + $0x9c] sm:$0xff]
    %v3043 = vld [vmem:[%s3015 + $0xa4] sm:$0xf]
    %v3044 = vld [vmem:[%s3015 + $0xa8] sm:$0xff]
    %v3045 = vld [vmem:[%s3015 + $0xb0] sm:$0xf]
    %v3046 = vld [vmem:[%s3015 + $0xb4] sm:$0xff]
    %v3047 = vld [vmem:[%s3015 + $0xbc] sm:$0xf]
    %v3048 = vpack.c.bf16 %v3012, %v3011
    %v3049 = vpack.c.bf16 %v3014, %v3013
    %s3050 = scalar_lea.vmem %s6, 6
    %v3051 = vld [vmem:[%s3050] sm:$0x7]
    %v3053 = vperm.slane %v3051, 0
    %v3054 = vperm.slane %v3051, 1
    %v3055 = vperm.slane %v3051, 2
    %v3091 = vunpack.c.l.b16 %v3016
    %v3092 = vunpack.c.h.b16 %v3016
    %v3093 = vunpack.c.l.b16 %v3017
    %v3094 = vunpack.c.l.b16 %v3018
    %v3095 = vunpack.c.h.b16 %v3018
    %v3096 = vunpack.c.l.b16 %v3019
    %v3097 = vunpack.c.l.b16 %v3020
    %v3098 = vunpack.c.h.b16 %v3020
    %v3099 = vunpack.c.l.b16 %v3021
    %v3100 = vunpack.c.l.b16 %v3022
    %v3101 = vunpack.c.h.b16 %v3022
    %v3102 = vunpack.c.l.b16 %v3023
    %v3103 = vunpack.c.l.b16 %v3024
    %v3104 = vunpack.c.h.b16 %v3024
    %v3105 = vunpack.c.l.b16 %v3025
    %v3106 = vunpack.c.l.b16 %v3026
    %v3107 = vunpack.c.h.b16 %v3026
    %v3108 = vunpack.c.l.b16 %v3027
    %v3109 = vunpack.c.l.b16 %v3028
    %v3110 = vunpack.c.h.b16 %v3028
    %v3111 = vunpack.c.l.b16 %v3029
    %v3112 = vunpack.c.l.b16 %v3030
    %v3113 = vunpack.c.h.b16 %v3030
    %v3114 = vunpack.c.l.b16 %v3031
    %v3115 = vunpack.c.l.b16 %v3032
    %v3116 = vunpack.c.h.b16 %v3032
    %v3117 = vunpack.c.l.b16 %v3033
    %v3118 = vunpack.c.l.b16 %v3034
    %v3119 = vunpack.c.h.b16 %v3034
    %v3120 = vunpack.c.l.b16 %v3035
    %v3121 = vunpack.c.l.b16 %v3036
    %v3122 = vunpack.c.h.b16 %v3036
    %v3123 = vunpack.c.l.b16 %v3037
    %v3124 = vunpack.c.l.b16 %v3038
    %v3125 = vunpack.c.h.b16 %v3038
    %v3126 = vunpack.c.l.b16 %v3039
    %v3127 = vunpack.c.l.b16 %v3040
    %v3128 = vunpack.c.h.b16 %v3040
    %v3129 = vunpack.c.l.b16 %v3041
    %v3130 = vunpack.c.l.b16 %v3042
    %v3131 = vunpack.c.h.b16 %v3042
    %v3132 = vunpack.c.l.b16 %v3043
    %v3133 = vunpack.c.l.b16 %v3044
    %v3134 = vunpack.c.h.b16 %v3044
    %v3135 = vunpack.c.l.b16 %v3045
    %v3136 = vunpack.c.l.b16 %v3046
    %v3137 = vunpack.c.h.b16 %v3046
    %v3138 = vunpack.c.l.b16 %v3047
    %v3139 = vpack.c.b16 %v3094, %v3091
    %v3140 = vpack.c.b16 %v3095, %v3092
    %v3141 = vpack.c.b16 %v3096, %v3093
    %v3142 = vpack.c.b16 %v3100, %v3097
    %v3143 = vpack.c.b16 %v3101, %v3098
    %v3144 = vpack.c.b16 %v3102, %v3099
    %v3145 = vpack.c.b16 %v3106, %v3103
    %v3146 = vpack.c.b16 %v3107, %v3104
    %v3147 = vpack.c.b16 %v3108, %v3105
    %v3148 = vpack.c.b16 %v3112, %v3109
    %v3149 = vpack.c.b16 %v3113, %v3110
    %v3150 = vpack.c.b16 %v3114, %v3111
    %v3151 = vpack.c.b16 %v3118, %v3115
    %v3152 = vpack.c.b16 %v3119, %v3116
    %v3153 = vpack.c.b16 %v3120, %v3117
    %v3154 = vpack.c.b16 %v3124, %v3121
    %v3155 = vpack.c.b16 %v3125, %v3122
    %v3156 = vpack.c.b16 %v3126, %v3123
    %v3157 = vpack.c.b16 %v3130, %v3127
    %v3158 = vpack.c.b16 %v3131, %v3128
    %v3159 = vpack.c.b16 %v3132, %v3129
    %v3160 = vpack.c.b16 %v3136, %v3133
    %v3161 = vpack.c.b16 %v3137, %v3134
    %v3162 = vpack.c.b16 %v3138, %v3135
    %3187 = vmatpush.bf16.msra.mxu0 %v3160
    %3188 = vmatpush.bf16.msra.mxu0 %v3157
    %3189 = vmatpush.bf16.msra.mxu0 %v3154
    %3190 = vmatpush.bf16.msra.mxu0 %v3151
    %3191 = vmatpush.bf16.msra.mxu0 %v3148
    %3192 = vmatpush.bf16.msra.mxu0 %v3145
    %3193 = vmatpush.bf16.msra.mxu0 %v3142
    %3194 = vmatpush.bf16.msra.mxu0 %v3139
    %3195 = vmatmul.bf16.gmra.mxu0 %v3048
    %v3196 = vpop.f32.mrf.mxu0
    %v3197 = vadd.f32 %v3053, %v3196
    %v3198 = vpop.f32.mrf.mxu0
    %v3199 = vadd.f32 %v3053, %v3198
    %3200 = vmatmul.bf16.gmra.mxu0 %v3049
    %v3201 = vpop.f32.mrf.mxu0
    %v3202 = vadd.f32 %v3053, %v3201
    %v3203 = vpop.f32.mrf.mxu0
    %v3204 = vadd.f32 %v3053, %v3203
    %3205 = vdwg.mxu0
    %3206 = vmatpush.bf16.msra.mxu0 %v3161
    %3207 = vmatpush.bf16.msra.mxu0 %v3158
    %3208 = vmatpush.bf16.msra.mxu0 %v3155
    %3209 = vmatpush.bf16.msra.mxu0 %v3152
    %3210 = vmatpush.bf16.msra.mxu0 %v3149
    %3211 = vmatpush.bf16.msra.mxu0 %v3146
    %3212 = vmatpush.bf16.msra.mxu0 %v3143
    %3213 = vmatpush.bf16.msra.mxu0 %v3140
    %3214 = vmatmul.bf16.gmra.mxu0 %v3048
    %v3215 = vpop.f32.mrf.mxu0
    %v3216 = vadd.f32 %v3054, %v3215
    %v3217 = vpop.f32.mrf.mxu0
    %v3218 = vadd.f32 %v3054, %v3217
    %3219 = vmatmul.bf16.gmra.mxu0 %v3049
    %v3220 = vpop.f32.mrf.mxu0
    %v3221 = vadd.f32 %v3054, %v3220
    %v3222 = vpop.f32.mrf.mxu0
    %v3223 = vadd.f32 %v3054, %v3222
    %3224 = vdwg.mxu0
    %3225 = vmatpush.bf16.msra.mxu0 %v3162
    %3226 = vmatpush.bf16.msra.mxu0 %v3159
    %3227 = vmatpush.bf16.msra.mxu0 %v3156
    %3228 = vmatpush.bf16.msra.mxu0 %v3153
    %3229 = vmatpush.bf16.msra.mxu0 %v3150
    %3230 = vmatpush.bf16.msra.mxu0 %v3147
    %3231 = vmatpush.bf16.msra.mxu0 %v3144
    %3232 = vmatpush.bf16.msra.mxu0 %v3141
    %3233 = vmatmul.bf16.gmra.mxu0 %v3048
    %v3234 = vpop.f32.mrf.mxu0
    %v3235 = vadd.f32 %v3055, %v3234
    %v3236 = vpop.f32.mrf.mxu0
    %v3237 = vadd.f32 %v3055, %v3236
    %3238 = vmatmul.bf16.gmra.mxu0 %v3049
    %v3239 = vpop.f32.mrf.mxu0
    %v3240 = vadd.f32 %v3055, %v3239
    %v3241 = vpop.f32.mrf.mxu0
    %v3242 = vadd.f32 %v3055, %v3241
    %3243 = vdwg.mxu0
    %v3244 = vpack.c.bf16 %v3197, %v3197
    %v3245 = vpack.c.bf16 %v3199, %v3199
    %v3246 = vpack.c.bf16 %v3202, %v3202
    %v3247 = vpack.c.bf16 %v3204, %v3204
    %v3248 = vpack.c.bf16 %v3216, %v3216
    %v3249 = vpack.c.bf16 %v3218, %v3218
    %v3250 = vpack.c.bf16 %v3221, %v3221
    %v3251 = vpack.c.bf16 %v3223, %v3223
    %v3254 = vunpack.c.l.b16 %v3244
    %v3255 = vunpack.c.l.b16 %v3245
    %v3256 = vpack.c.b16 %v3255, %v3254
    %v3260 = vunpack.c.l.b16 %v3248
    %v3261 = vunpack.c.l.b16 %v3249
    %v3262 = vpack.c.b16 %v3261, %v3260
    %3264 = vmatpush.bf16.xpose.msra.mxu0 0
    %3265 = vmatpush.bf16.xpose.msra.mxu0 0
    %3266 = vmatpush.bf16.xpose.msra.mxu0 0
    %3267 = vmatpush.bf16.xpose.msra.mxu0 0
    %3268 = vmatpush.bf16.xpose.msra.mxu0 0
    %3269 = vmatpush.bf16.xpose.msra.mxu0 0
    %3270 = vmatpush.bf16.xpose.msra.mxu0 0
    %3271 = vmatpush.bf16.xpose.msra.mxu0 %v3262
    %3272 = vmatmul.bf16.gmra.mxu0 %v3256
    %v3273 = vpop.f32.mrf.mxu0
    %v3274 = vadd.f32 0.0, %v3273
    %v3275 = vpop.f32.mrf.mxu0
    %v3276 = vadd.f32 0.0, %v3275
    %3277 = vdwg.mxu0
    %v3280 = vunpack.c.l.b16 %v3246
    %v3281 = vunpack.c.l.b16 %v3247
    %v3282 = vpack.c.b16 %v3281, %v3280
    %v3286 = vunpack.c.l.b16 %v3250
    %v3287 = vunpack.c.l.b16 %v3251
    %v3288 = vpack.c.b16 %v3287, %v3286
    %3290 = vmatpush.bf16.xpose.msra.mxu0 0
    %3291 = vmatpush.bf16.xpose.msra.mxu0 0
    %3292 = vmatpush.bf16.xpose.msra.mxu0 0
    %3293 = vmatpush.bf16.xpose.msra.mxu0 0
    %3294 = vmatpush.bf16.xpose.msra.mxu0 0
    %3295 = vmatpush.bf16.xpose.msra.mxu0 0
    %3296 = vmatpush.bf16.xpose.msra.mxu0 0
    %3297 = vmatpush.bf16.xpose.msra.mxu0 %v3288
    %3298 = vmatmul.bf16.gmra.mxu0 %v3282
    %v3299 = vpop.f32.mrf.mxu0
    %v3300 = vadd.f32 0.0, %v3299
    %v3301 = vpop.f32.mrf.mxu0
    %v3302 = vadd.f32 0.0, %v3301
    %3303 = vdwg.mxu0
    %v3304 = vmul.f32 %v3274, 0.088388346
    %v3305 = vmul.f32 %v3276, 0.088388346
    %v3306 = vmul.f32 %v3300, 0.088388346
    %v3307 = vmul.f32 %v3302, 0.088388346
    %v3308 = vsel %vm222, %v3304, -3.4028235e+38
    %v3309 = vsel %vm223, %v3305, -3.4028235e+38
    %v3310 = vsel %vm222, %v3306, -3.4028235e+38
    %v3311 = vsel %vm223, %v3307, -3.4028235e+38
    %v3312 = vsel %vm615, %v3308, -inf
    %3313 = vmax.xlane.f32.xlu0 %v3312
    %v3314 = vpop.xlane.xlu0 %3313
    %v3315 = vsel %vm615, %v3309, -inf
    %3316 = vmax.xlane.f32.xlu0 %v3315
    %v3317 = vpop.xlane.xlu0 %3316
    %v3318 = vsel %vm615, %v3310, -inf
    %3319 = vmax.xlane.f32.xlu0 %v3318
    %v3320 = vpop.xlane.xlu0 %3319
    %v3321 = vsel %vm615, %v3311, -inf
    %3322 = vmax.xlane.f32.xlu0 %v3321
    %v3323 = vpop.xlane.xlu0 %3322
    %v3324 = vsub.f32 %v3308, %v3314
    %v3325 = vsub.f32 %v3309, %v3317
    %v3326 = vsub.f32 %v3310, %v3320
    %v3327 = vsub.f32 %v3311, %v3323
    %v3328 = vmul.f32 %v3324, 1.442695
    %v3329 = vpow.pop %v3328
    %v3330 = vmul.f32 %v3325, 1.442695
    %v3331 = vpow.pop %v3330
    %v3332 = vmul.f32 %v3326, 1.442695
    %v3333 = vpow.pop %v3332
    %v3334 = vmul.f32 %v3327, 1.442695
    %v3335 = vpow.pop %v3334
    %v3336 = vsel %vm615, %v3329, 0.0
    %3337 = vadd.xlane.f32.xlu0 %v3336
    %v3338 = vpop.xlane.xlu0 %3337
    %v3339 = vsel %vm615, %v3331, 0.0
    %3340 = vadd.xlane.f32.xlu0 %v3339
    %v3341 = vpop.xlane.xlu0 %3340
    %v3342 = vsel %vm615, %v3333, 0.0
    %3343 = vadd.xlane.f32.xlu0 %v3342
    %v3344 = vpop.xlane.xlu0 %3343
    %v3345 = vsel %vm615, %v3335, 0.0
    %3346 = vadd.xlane.f32.xlu0 %v3345
    %v3347 = vpop.xlane.xlu0 %3346
    %v3348 = vrcp.pop %v3338
    %v3349 = vrcp.pop %v3341
    %v3350 = vrcp.pop %v3344
    %v3351 = vrcp.pop %v3347
    %v3352 = vmul.f32 %v3329, %v3348
    %v3353 = vmul.f32 %v3331, %v3349
    %v3354 = vmul.f32 %v3333, %v3350
    %v3355 = vmul.f32 %v3335, %v3351
    %v3356 = vpack.c.bf16 %v3352, %v3352
    %v3357 = vpack.c.bf16 %v3353, %v3353
    %v3358 = vpack.c.bf16 %v3354, %v3354
    %v3359 = vpack.c.bf16 %v3355, %v3355
    %v3360 = vpack.c.bf16 %v3235, %v3235
    %v3361 = vpack.c.bf16 %v3237, %v3237
    %v3362 = vpack.c.bf16 %v3240, %v3240
    %v3363 = vpack.c.bf16 %v3242, %v3242
    %v3366 = vunpack.c.l.b16 %v3356
    %v3367 = vunpack.c.l.b16 %v3357
    %v3368 = vpack.c.b16 %v3367, %v3366
    %v3371 = vunpack.c.l.b16 %v3360
    %v3372 = vunpack.c.l.b16 %v3361
    %v3373 = vpack.c.b16 %v3372, %v3371
    %v3376 = vsel %vm615, %v3368, 0
    %3378 = vmatpush.bf16.msra.mxu0 0
    %3379 = vmatpush.bf16.msra.mxu0 0
    %3380 = vmatpush.bf16.msra.mxu0 0
    %3381 = vmatpush.bf16.msra.mxu0 0
    %3382 = vmatpush.bf16.msra.mxu0 0
    %3383 = vmatpush.bf16.msra.mxu0 0
    %3384 = vmatpush.bf16.msra.mxu0 0
    %3385 = vmatpush.bf16.msra.mxu0 %v3373
    %3386 = vmatmul.bf16.gmra.mxu0 %v3376
    %v3387 = vpop.f32.mrf.mxu0
    %v3388 = vadd.f32 0.0, %v3387
    %v3389 = vpop.f32.mrf.mxu0
    %v3390 = vadd.f32 0.0, %v3389
    %3391 = vdwg.mxu0
    %v3394 = vunpack.c.l.b16 %v3358
    %v3395 = vunpack.c.l.b16 %v3359
    %v3396 = vpack.c.b16 %v3395, %v3394
    %v3399 = vunpack.c.l.b16 %v3362
    %v3400 = vunpack.c.l.b16 %v3363
    %v3401 = vpack.c.b16 %v3400, %v3399
    %v3404 = vsel %vm615, %v3396, 0
    %3406 = vmatpush.bf16.msra.mxu0 0
    %3407 = vmatpush.bf16.msra.mxu0 0
    %3408 = vmatpush.bf16.msra.mxu0 0
    %3409 = vmatpush.bf16.msra.mxu0 0
    %3410 = vmatpush.bf16.msra.mxu0 0
    %3411 = vmatpush.bf16.msra.mxu0 0
    %3412 = vmatpush.bf16.msra.mxu0 0
    %3413 = vmatpush.bf16.msra.mxu0 %v3401
    %3414 = vmatmul.bf16.gmra.mxu0 %v3404
    %v3415 = vpop.f32.mrf.mxu0
    %v3416 = vadd.f32 0.0, %v3415
    %v3417 = vpop.f32.mrf.mxu0
    %v3418 = vadd.f32 0.0, %v3417
    %3419 = vdwg.mxu0
    %s3420 = scalar_lea.vmem %s7, 128
    %v3421 = vld [vmem:[%s3420] sm:$0xf]
    %v3422 = vld [vmem:[%s3420 + $0x4] sm:$0xf]
    %v3423 = vld [vmem:[%s3420 + $0x8] sm:$0xf]
    %v3424 = vld [vmem:[%s3420 + $0xc] sm:$0xf]
    %v3425 = vld [vmem:[%s3420 + $0x10] sm:$0xf]
    %v3426 = vld [vmem:[%s3420 + $0x14] sm:$0xf]
    %v3427 = vld [vmem:[%s3420 + $0x18] sm:$0xf]
    %v3428 = vld [vmem:[%s3420 + $0x1c] sm:$0xf]
    %v3429 = vld [vmem:[%s3420 + $0x20] sm:$0xf]
    %v3430 = vld [vmem:[%s3420 + $0x24] sm:$0xf]
    %v3431 = vld [vmem:[%s3420 + $0x28] sm:$0xf]
    %v3432 = vld [vmem:[%s3420 + $0x2c] sm:$0xf]
    %v3433 = vld [vmem:[%s3420 + $0x30] sm:$0xf]
    %v3434 = vld [vmem:[%s3420 + $0x34] sm:$0xf]
    %v3435 = vld [vmem:[%s3420 + $0x38] sm:$0xf]
    %v3436 = vld [vmem:[%s3420 + $0x3c] sm:$0xf]
    %v3437 = vpack.c.bf16 %v3390, %v3388
    %v3438 = vpack.c.bf16 %v3418, %v3416
    %v3455 = vunpack.c.l.b16 %v3421
    %v3456 = vunpack.c.l.b16 %v3422
    %v3457 = vunpack.c.l.b16 %v3423
    %v3458 = vunpack.c.l.b16 %v3424
    %v3459 = vunpack.c.l.b16 %v3425
    %v3460 = vunpack.c.l.b16 %v3426
    %v3461 = vunpack.c.l.b16 %v3427
    %v3462 = vunpack.c.l.b16 %v3428
    %v3463 = vunpack.c.l.b16 %v3429
    %v3464 = vunpack.c.l.b16 %v3430
    %v3465 = vunpack.c.l.b16 %v3431
    %v3466 = vunpack.c.l.b16 %v3432
    %v3467 = vunpack.c.l.b16 %v3433
    %v3468 = vunpack.c.l.b16 %v3434
    %v3469 = vunpack.c.l.b16 %v3435
    %v3470 = vunpack.c.l.b16 %v3436
    %v3471 = vpack.c.b16 %v3456, %v3455
    %v3472 = vpack.c.b16 %v3458, %v3457
    %v3473 = vpack.c.b16 %v3460, %v3459
    %v3474 = vpack.c.b16 %v3462, %v3461
    %v3475 = vpack.c.b16 %v3464, %v3463
    %v3476 = vpack.c.b16 %v3466, %v3465
    %v3477 = vpack.c.b16 %v3468, %v3467
    %v3478 = vpack.c.b16 %v3470, %v3469
    %3487 = vmatpush.bf16.msra.mxu0 %v3478
    %3488 = vmatpush.bf16.msra.mxu0 %v3477
    %3489 = vmatpush.bf16.msra.mxu0 %v3476
    %3490 = vmatpush.bf16.msra.mxu0 %v3475
    %3491 = vmatpush.bf16.msra.mxu0 %v3474
    %3492 = vmatpush.bf16.msra.mxu0 %v3473
    %3493 = vmatpush.bf16.msra.mxu0 %v3472
    %3494 = vmatpush.bf16.msra.mxu0 %v3471
    %3495 = vmatmul.bf16.gmra.mxu0 %v3437
    %v3496 = vpop.f32.mrf.mxu0
    %v3497 = vadd.f32 0.0, %v3496
    %v3498 = vpop.f32.mrf.mxu0
    %v3499 = vadd.f32 0.0, %v3498
    %3500 = vmatmul.bf16.gmra.mxu0 %v3438
    %v3501 = vpop.f32.mrf.mxu0
    %v3502 = vadd.f32 0.0, %v3501
    %v3503 = vpop.f32.mrf.mxu0
    %v3504 = vadd.f32 0.0, %v3503
    %3505 = vdwg.mxu0
    %v3506 = vadd.f32 %v2913, %v3497
    %v3507 = vadd.f32 %v2914, %v3499
    %v3508 = vadd.f32 %v2915, %v3502
    %v3509 = vadd.f32 %v2916, %v3504
    %s3510 = scalar_lea.vmem %s8, 2
    %v3511 = vld [vmem:[%s3510] sm:$0x1]
    %v3513 = vperm.slane %v3511, 0
    %v3515 = vadd.f32 %v3506, %v3513
    %v3516 = vadd.f32 %v3507, %v3513
    %v3517 = vadd.f32 %v3508, %v3513
    %v3518 = vadd.f32 %v3509, %v3513
    %s3519 = scalar_lea.vmem %s9, 2
    %v3520 = vld [vmem:[%s3519] sm:$0x1]
    %s3521 = scalar_lea.vmem %s10, 2
    %v3522 = vld [vmem:[%s3521] sm:$0x1]
    %3523 = vadd.xlane.f32.xlu0 %v3515
    %v3524 = vpop.xlane.xlu0 %3523
    %3525 = vadd.xlane.f32.xlu0 %v3516
    %v3526 = vpop.xlane.xlu0 %3525
    %3527 = vadd.xlane.f32.xlu0 %v3517
    %v3528 = vpop.xlane.xlu0 %3527
    %3529 = vadd.xlane.f32.xlu0 %v3518
    %v3530 = vpop.xlane.xlu0 %3529
    %v3531 = vmul.f32 %v3524, %v130
    %v3532 = vmul.f32 %v3526, %v130
    %v3533 = vmul.f32 %v3528, %v130
    %v3534 = vmul.f32 %v3530, %v130
    %v3535 = vsub.f32 %v3515, %v3531
    %v3536 = vsub.f32 %v3516, %v3532
    %v3537 = vsub.f32 %v3517, %v3533
    %v3538 = vsub.f32 %v3518, %v3534
    %v3539 = vmul.f32 %v3535, %v3535
    %v3540 = vmul.f32 %v3536, %v3536
    %v3541 = vmul.f32 %v3537, %v3537
    %v3542 = vmul.f32 %v3538, %v3538
    %3543 = vadd.xlane.f32.xlu0 %v3539
    %v3544 = vpop.xlane.xlu0 %3543
    %3545 = vadd.xlane.f32.xlu0 %v3540
    %v3546 = vpop.xlane.xlu0 %3545
    %3547 = vadd.xlane.f32.xlu0 %v3541
    %v3548 = vpop.xlane.xlu0 %3547
    %3549 = vadd.xlane.f32.xlu0 %v3542
    %v3550 = vpop.xlane.xlu0 %3549
    %v3551 = vmul.f32 %v3544, %v130
    %v3552 = vmul.f32 %v3546, %v130
    %v3553 = vmul.f32 %v3548, %v130
    %v3554 = vmul.f32 %v3550, %v130
    %v3555 = vadd.f32 %v3551, 1e-05
    %v3556 = vadd.f32 %v3552, 1e-05
    %v3557 = vadd.f32 %v3553, 1e-05
    %v3558 = vadd.f32 %v3554, 1e-05
    %v3559 = vrsqrt.pop %v3555
    %v3560 = vmul.f32 %v3559, %v3555
    %v3561 = vmul.f32 %v3560, %v3559
    %v3562 = vmul.f32 0.5, %v3561
    %v3563 = vsub.f32 1.5, %v3562
    %v3564 = vmul.f32 %v3559, %v3563
    %vm3565 = vweird.f32 %v3555
    %vm3566 = vweird.f32 %v3559
    %vm3567 = vmor %vm3565, %vm3566
    %v3568 = vsel %vm3567, %v3559, %v3564
    %v3569 = vrsqrt.pop %v3556
    %v3570 = vmul.f32 %v3569, %v3556
    %v3571 = vmul.f32 %v3570, %v3569
    %v3572 = vmul.f32 0.5, %v3571
    %v3573 = vsub.f32 1.5, %v3572
    %v3574 = vmul.f32 %v3569, %v3573
    %vm3575 = vweird.f32 %v3556
    %vm3576 = vweird.f32 %v3569
    %vm3577 = vmor %vm3575, %vm3576
    %v3578 = vsel %vm3577, %v3569, %v3574
    %v3579 = vrsqrt.pop %v3557
    %v3580 = vmul.f32 %v3579, %v3557
    %v3581 = vmul.f32 %v3580, %v3579
    %v3582 = vmul.f32 0.5, %v3581
    %v3583 = vsub.f32 1.5, %v3582
    %v3584 = vmul.f32 %v3579, %v3583
    %vm3585 = vweird.f32 %v3557
    %vm3586 = vweird.f32 %v3579
    %vm3587 = vmor %vm3585, %vm3586
    %v3588 = vsel %vm3587, %v3579, %v3584
    %v3589 = vrsqrt.pop %v3558
    %v3590 = vmul.f32 %v3589, %v3558
    %v3591 = vmul.f32 %v3590, %v3589
    %v3592 = vmul.f32 0.5, %v3591
    %v3593 = vsub.f32 1.5, %v3592
    %v3594 = vmul.f32 %v3589, %v3593
    %vm3595 = vweird.f32 %v3558
    %vm3596 = vweird.f32 %v3589
    %vm3597 = vmor %vm3595, %vm3596
    %v3598 = vsel %vm3597, %v3589, %v3594
    %v3599 = vmul.f32 %v3535, %v3568
    %v3600 = vmul.f32 %v3536, %v3578
    %v3601 = vmul.f32 %v3537, %v3588
    %v3602 = vmul.f32 %v3538, %v3598
    %v3604 = vperm.slane %v3520, 0
    %v3606 = vmul.f32 %v3599, %v3604
    %v3607 = vmul.f32 %v3600, %v3604
    %v3608 = vmul.f32 %v3601, %v3604
    %v3609 = vmul.f32 %v3602, %v3604
    %v3611 = vperm.slane %v3522, 0
    %v3613 = vadd.f32 %v3606, %v3611
    %v3614 = vadd.f32 %v3607, %v3611
    %v3615 = vadd.f32 %v3608, %v3611
    %v3616 = vadd.f32 %v3609, %v3611
    %s3617 = scalar_lea.vmem [#allocation4], 512
    %v3618 = vld [vmem:[%s3617] sm:$0xff]
    %v3619 = vld [vmem:[%s3617 + $0x8] sm:$0xff]
    %v3620 = vld [vmem:[%s3617 + $0x10] sm:$0xff]
    %v3621 = vld [vmem:[%s3617 + $0x18] sm:$0xff]
    %v3622 = vld [vmem:[%s3617 + $0x20] sm:$0xff]
    %v3623 = vld [vmem:[%s3617 + $0x28] sm:$0xff]
    %v3624 = vld [vmem:[%s3617 + $0x30] sm:$0xff]
    %v3625 = vld [vmem:[%s3617 + $0x38] sm:$0xff]
    %v3626 = vld [vmem:[%s3617 + $0x40] sm:$0xff]
    %v3627 = vld [vmem:[%s3617 + $0x48] sm:$0xff]
    %v3628 = vld [vmem:[%s3617 + $0x50] sm:$0xff]
    %v3629 = vld [vmem:[%s3617 + $0x58] sm:$0xff]
    %v3630 = vld [vmem:[%s3617 + $0x60] sm:$0xff]
    %v3631 = vld [vmem:[%s3617 + $0x68] sm:$0xff]
    %v3632 = vld [vmem:[%s3617 + $0x70] sm:$0xff]
    %v3633 = vld [vmem:[%s3617 + $0x78] sm:$0xff]
    %v3634 = vld [vmem:[%s3617 + $0x80] sm:$0xff]
    %v3635 = vld [vmem:[%s3617 + $0x88] sm:$0xff]
    %v3636 = vld [vmem:[%s3617 + $0x90] sm:$0xff]
    %v3637 = vld [vmem:[%s3617 + $0x98] sm:$0xff]
    %v3638 = vld [vmem:[%s3617 + $0xa0] sm:$0xff]
    %v3639 = vld [vmem:[%s3617 + $0xa8] sm:$0xff]
    %v3640 = vld [vmem:[%s3617 + $0xb0] sm:$0xff]
    %v3641 = vld [vmem:[%s3617 + $0xb8] sm:$0xff]
    %v3642 = vld [vmem:[%s3617 + $0xc0] sm:$0xff]
    %v3643 = vld [vmem:[%s3617 + $0xc8] sm:$0xff]
    %v3644 = vld [vmem:[%s3617 + $0xd0] sm:$0xff]
    %v3645 = vld [vmem:[%s3617 + $0xd8] sm:$0xff]
    %v3646 = vld [vmem:[%s3617 + $0xe0] sm:$0xff]
    %v3647 = vld [vmem:[%s3617 + $0xe8] sm:$0xff]
    %v3648 = vld [vmem:[%s3617 + $0xf0] sm:$0xff]
    %v3649 = vld [vmem:[%s3617 + $0xf8] sm:$0xff]
    %v3650 = vpack.c.bf16 %v3614, %v3613
    %v3651 = vpack.c.bf16 %v3616, %v3615
    %s3652 = scalar_lea.vmem %s12, 8
    %v3653 = vld [vmem:[%s3652] sm:$0xf]
    %v3655 = vperm.slane %v3653, 0
    %v3656 = vperm.slane %v3653, 1
    %v3657 = vperm.slane %v3653, 2
    %v3658 = vperm.slane %v3653, 3
    %v3695 = vunpack.c.l.b16 %v3618
    %v3696 = vunpack.c.h.b16 %v3618
    %v3697 = vunpack.c.l.b16 %v3619
    %v3698 = vunpack.c.h.b16 %v3619
    %v3699 = vunpack.c.l.b16 %v3620
    %v3700 = vunpack.c.h.b16 %v3620
    %v3701 = vunpack.c.l.b16 %v3621
    %v3702 = vunpack.c.h.b16 %v3621
    %v3703 = vunpack.c.l.b16 %v3622
    %v3704 = vunpack.c.h.b16 %v3622
    %v3705 = vunpack.c.l.b16 %v3623
    %v3706 = vunpack.c.h.b16 %v3623
    %v3707 = vunpack.c.l.b16 %v3624
    %v3708 = vunpack.c.h.b16 %v3624
    %v3709 = vunpack.c.l.b16 %v3625
    %v3710 = vunpack.c.h.b16 %v3625
    %v3711 = vunpack.c.l.b16 %v3626
    %v3712 = vunpack.c.h.b16 %v3626
    %v3713 = vunpack.c.l.b16 %v3627
    %v3714 = vunpack.c.h.b16 %v3627
    %v3715 = vunpack.c.l.b16 %v3628
    %v3716 = vunpack.c.h.b16 %v3628
    %v3717 = vunpack.c.l.b16 %v3629
    %v3718 = vunpack.c.h.b16 %v3629
    %v3719 = vunpack.c.l.b16 %v3630
    %v3720 = vunpack.c.h.b16 %v3630
    %v3721 = vunpack.c.l.b16 %v3631
    %v3722 = vunpack.c.h.b16 %v3631
    %v3723 = vunpack.c.l.b16 %v3632
    %v3724 = vunpack.c.h.b16 %v3632
    %v3725 = vunpack.c.l.b16 %v3633
    %v3726 = vunpack.c.h.b16 %v3633
    %v3727 = vunpack.c.l.b16 %v3634
    %v3728 = vunpack.c.h.b16 %v3634
    %v3729 = vunpack.c.l.b16 %v3635
    %v3730 = vunpack.c.h.b16 %v3635
    %v3731 = vunpack.c.l.b16 %v3636
    %v3732 = vunpack.c.h.b16 %v3636
    %v3733 = vunpack.c.l.b16 %v3637
    %v3734 = vunpack.c.h.b16 %v3637
    %v3735 = vunpack.c.l.b16 %v3638
    %v3736 = vunpack.c.h.b16 %v3638
    %v3737 = vunpack.c.l.b16 %v3639
    %v3738 = vunpack.c.h.b16 %v3639
    %v3739 = vunpack.c.l.b16 %v3640
    %v3740 = vunpack.c.h.b16 %v3640
    %v3741 = vunpack.c.l.b16 %v3641
    %v3742 = vunpack.c.h.b16 %v3641
    %v3743 = vunpack.c.l.b16 %v3642
    %v3744 = vunpack.c.h.b16 %v3642
    %v3745 = vunpack.c.l.b16 %v3643
    %v3746 = vunpack.c.h.b16 %v3643
    %v3747 = vunpack.c.l.b16 %v3644
    %v3748 = vunpack.c.h.b16 %v3644
    %v3749 = vunpack.c.l.b16 %v3645
    %v3750 = vunpack.c.h.b16 %v3645
    %v3751 = vunpack.c.l.b16 %v3646
    %v3752 = vunpack.c.h.b16 %v3646
    %v3753 = vunpack.c.l.b16 %v3647
    %v3754 = vunpack.c.h.b16 %v3647
    %v3755 = vunpack.c.l.b16 %v3648
    %v3756 = vunpack.c.h.b16 %v3648
    %v3757 = vunpack.c.l.b16 %v3649
    %v3758 = vunpack.c.h.b16 %v3649
    %v3759 = vpack.c.b16 %v3699, %v3695
    %v3760 = vpack.c.b16 %v3700, %v3696
    %v3761 = vpack.c.b16 %v3701, %v3697
    %v3762 = vpack.c.b16 %v3702, %v3698
    %v3763 = vpack.c.b16 %v3707, %v3703
    %v3764 = vpack.c.b16 %v3708, %v3704
    %v3765 = vpack.c.b16 %v3709, %v3705
    %v3766 = vpack.c.b16 %v3710, %v3706
    %v3767 = vpack.c.b16 %v3715, %v3711
    %v3768 = vpack.c.b16 %v3716, %v3712
    %v3769 = vpack.c.b16 %v3717, %v3713
    %v3770 = vpack.c.b16 %v3718, %v3714
    %v3771 = vpack.c.b16 %v3723, %v3719
    %v3772 = vpack.c.b16 %v3724, %v3720
    %v3773 = vpack.c.b16 %v3725, %v3721
    %v3774 = vpack.c.b16 %v3726, %v3722
    %v3775 = vpack.c.b16 %v3731, %v3727
    %v3776 = vpack.c.b16 %v3732, %v3728
    %v3777 = vpack.c.b16 %v3733, %v3729
    %v3778 = vpack.c.b16 %v3734, %v3730
    %v3779 = vpack.c.b16 %v3739, %v3735
    %v3780 = vpack.c.b16 %v3740, %v3736
    %v3781 = vpack.c.b16 %v3741, %v3737
    %v3782 = vpack.c.b16 %v3742, %v3738
    %v3783 = vpack.c.b16 %v3747, %v3743
    %v3784 = vpack.c.b16 %v3748, %v3744
    %v3785 = vpack.c.b16 %v3749, %v3745
    %v3786 = vpack.c.b16 %v3750, %v3746
    %v3787 = vpack.c.b16 %v3755, %v3751
    %v3788 = vpack.c.b16 %v3756, %v3752
    %v3789 = vpack.c.b16 %v3757, %v3753
    %v3790 = vpack.c.b16 %v3758, %v3754
    %3823 = vmatpush.bf16.msra.mxu0 %v3787
    %3824 = vmatpush.bf16.msra.mxu0 %v3783
    %3825 = vmatpush.bf16.msra.mxu0 %v3779
    %3826 = vmatpush.bf16.msra.mxu0 %v3775
    %3827 = vmatpush.bf16.msra.mxu0 %v3771
    %3828 = vmatpush.bf16.msra.mxu0 %v3767
    %3829 = vmatpush.bf16.msra.mxu0 %v3763
    %3830 = vmatpush.bf16.msra.mxu0 %v3759
    %3831 = vmatmul.bf16.gmra.mxu0 %v3650
    %v3832 = vpop.f32.mrf.mxu0
    %v3833 = vadd.f32 %v3655, %v3832
    %v3834 = vpop.f32.mrf.mxu0
    %v3835 = vadd.f32 %v3655, %v3834
    %3836 = vmatmul.bf16.gmra.mxu0 %v3651
    %v3837 = vpop.f32.mrf.mxu0
    %v3838 = vadd.f32 %v3655, %v3837
    %v3839 = vpop.f32.mrf.mxu0
    %v3840 = vadd.f32 %v3655, %v3839
    %3841 = vdwg.mxu0
    %3842 = vmatpush.bf16.msra.mxu0 %v3788
    %3843 = vmatpush.bf16.msra.mxu0 %v3784
    %3844 = vmatpush.bf16.msra.mxu0 %v3780
    %3845 = vmatpush.bf16.msra.mxu0 %v3776
    %3846 = vmatpush.bf16.msra.mxu0 %v3772
    %3847 = vmatpush.bf16.msra.mxu0 %v3768
    %3848 = vmatpush.bf16.msra.mxu0 %v3764
    %3849 = vmatpush.bf16.msra.mxu0 %v3760
    %3850 = vmatmul.bf16.gmra.mxu0 %v3650
    %v3851 = vpop.f32.mrf.mxu0
    %v3852 = vadd.f32 %v3656, %v3851
    %v3853 = vpop.f32.mrf.mxu0
    %v3854 = vadd.f32 %v3656, %v3853
    %3855 = vmatmul.bf16.gmra.mxu0 %v3651
    %v3856 = vpop.f32.mrf.mxu0
    %v3857 = vadd.f32 %v3656, %v3856
    %v3858 = vpop.f32.mrf.mxu0
    %v3859 = vadd.f32 %v3656, %v3858
    %3860 = vdwg.mxu0
    %3861 = vmatpush.bf16.msra.mxu0 %v3789
    %3862 = vmatpush.bf16.msra.mxu0 %v3785
    %3863 = vmatpush.bf16.msra.mxu0 %v3781
    %3864 = vmatpush.bf16.msra.mxu0 %v3777
    %3865 = vmatpush.bf16.msra.mxu0 %v3773
    %3866 = vmatpush.bf16.msra.mxu0 %v3769
    %3867 = vmatpush.bf16.msra.mxu0 %v3765
    %3868 = vmatpush.bf16.msra.mxu0 %v3761
    %3869 = vmatmul.bf16.gmra.mxu0 %v3650
    %v3870 = vpop.f32.mrf.mxu0
    %v3871 = vadd.f32 %v3657, %v3870
    %v3872 = vpop.f32.mrf.mxu0
    %v3873 = vadd.f32 %v3657, %v3872
    %3874 = vmatmul.bf16.gmra.mxu0 %v3651
    %v3875 = vpop.f32.mrf.mxu0
    %v3876 = vadd.f32 %v3657, %v3875
    %v3877 = vpop.f32.mrf.mxu0
    %v3878 = vadd.f32 %v3657, %v3877
    %3879 = vdwg.mxu0
    %3880 = vmatpush.bf16.msra.mxu0 %v3790
    %3881 = vmatpush.bf16.msra.mxu0 %v3786
    %3882 = vmatpush.bf16.msra.mxu0 %v3782
    %3883 = vmatpush.bf16.msra.mxu0 %v3778
    %3884 = vmatpush.bf16.msra.mxu0 %v3774
    %3885 = vmatpush.bf16.msra.mxu0 %v3770
    %3886 = vmatpush.bf16.msra.mxu0 %v3766
    %3887 = vmatpush.bf16.msra.mxu0 %v3762
    %3888 = vmatmul.bf16.gmra.mxu0 %v3650
    %v3889 = vpop.f32.mrf.mxu0
    %v3890 = vadd.f32 %v3658, %v3889
    %v3891 = vpop.f32.mrf.mxu0
    %v3892 = vadd.f32 %v3658, %v3891
    %3893 = vmatmul.bf16.gmra.mxu0 %v3651
    %v3894 = vpop.f32.mrf.mxu0
    %v3895 = vadd.f32 %v3658, %v3894
    %v3896 = vpop.f32.mrf.mxu0
    %v3897 = vadd.f32 %v3658, %v3896
    %3898 = vdwg.mxu0
    %v3899 = vmax.f32 %v3833, 0.0
    %v3900 = vmax.f32 %v3852, 0.0
    %v3901 = vmax.f32 %v3871, 0.0
    %v3902 = vmax.f32 %v3890, 0.0
    %v3903 = vmax.f32 %v3835, 0.0
    %v3904 = vmax.f32 %v3854, 0.0
    %v3905 = vmax.f32 %v3873, 0.0
    %v3906 = vmax.f32 %v3892, 0.0
    %v3907 = vmax.f32 %v3838, 0.0
    %v3908 = vmax.f32 %v3857, 0.0
    %v3909 = vmax.f32 %v3876, 0.0
    %v3910 = vmax.f32 %v3895, 0.0
    %v3911 = vmax.f32 %v3840, 0.0
    %v3912 = vmax.f32 %v3859, 0.0
    %v3913 = vmax.f32 %v3878, 0.0
    %v3914 = vmax.f32 %v3897, 0.0
    %s3915 = scalar_lea.vmem [#allocation6], 512
    %v3916 = vld [vmem:[%s3915] sm:$0xf]
    %v3917 = vld [vmem:[%s3915 + $0x4] sm:$0xf]
    %v3918 = vld [vmem:[%s3915 + $0x8] sm:$0xf]
    %v3919 = vld [vmem:[%s3915 + $0xc] sm:$0xf]
    %v3920 = vld [vmem:[%s3915 + $0x10] sm:$0xf]
    %v3921 = vld [vmem:[%s3915 + $0x14] sm:$0xf]
    %v3922 = vld [vmem:[%s3915 + $0x18] sm:$0xf]
    %v3923 = vld [vmem:[%s3915 + $0x1c] sm:$0xf]
    %v3924 = vld [vmem:[%s3915 + $0x20] sm:$0xf]
    %v3925 = vld [vmem:[%s3915 + $0x24] sm:$0xf]
    %v3926 = vld [vmem:[%s3915 + $0x28] sm:$0xf]
    %v3927 = vld [vmem:[%s3915 + $0x2c] sm:$0xf]
    %v3928 = vld [vmem:[%s3915 + $0x30] sm:$0xf]
    %v3929 = vld [vmem:[%s3915 + $0x34] sm:$0xf]
    %v3930 = vld [vmem:[%s3915 + $0x38] sm:$0xf]
    %v3931 = vld [vmem:[%s3915 + $0x3c] sm:$0xf]
    %v3932 = vld [vmem:[%s3915 + $0x40] sm:$0xf]
    %v3933 = vld [vmem:[%s3915 + $0x44] sm:$0xf]
    %v3934 = vld [vmem:[%s3915 + $0x48] sm:$0xf]
    %v3935 = vld [vmem:[%s3915 + $0x4c] sm:$0xf]
    %v3936 = vld [vmem:[%s3915 + $0x50] sm:$0xf]
    %v3937 = vld [vmem:[%s3915 + $0x54] sm:$0xf]
    %v3938 = vld [vmem:[%s3915 + $0x58] sm:$0xf]
    %v3939 = vld [vmem:[%s3915 + $0x5c] sm:$0xf]
    %v3940 = vld [vmem:[%s3915 + $0x60] sm:$0xf]
    %v3941 = vld [vmem:[%s3915 + $0x64] sm:$0xf]
    %v3942 = vld [vmem:[%s3915 + $0x68] sm:$0xf]
    %v3943 = vld [vmem:[%s3915 + $0x6c] sm:$0xf]
    %v3944 = vld [vmem:[%s3915 + $0x70] sm:$0xf]
    %v3945 = vld [vmem:[%s3915 + $0x74] sm:$0xf]
    %v3946 = vld [vmem:[%s3915 + $0x78] sm:$0xf]
    %v3947 = vld [vmem:[%s3915 + $0x7c] sm:$0xf]
    %v3948 = vld [vmem:[%s3915 + $0x80] sm:$0xf]
    %v3949 = vld [vmem:[%s3915 + $0x84] sm:$0xf]
    %v3950 = vld [vmem:[%s3915 + $0x88] sm:$0xf]
    %v3951 = vld [vmem:[%s3915 + $0x8c] sm:$0xf]
    %v3952 = vld [vmem:[%s3915 + $0x90] sm:$0xf]
    %v3953 = vld [vmem:[%s3915 + $0x94] sm:$0xf]
    %v3954 = vld [vmem:[%s3915 + $0x98] sm:$0xf]
    %v3955 = vld [vmem:[%s3915 + $0x9c] sm:$0xf]
    %v3956 = vld [vmem:[%s3915 + $0xa0] sm:$0xf]
    %v3957 = vld [vmem:[%s3915 + $0xa4] sm:$0xf]
    %v3958 = vld [vmem:[%s3915 + $0xa8] sm:$0xf]
    %v3959 = vld [vmem:[%s3915 + $0xac] sm:$0xf]
    %v3960 = vld [vmem:[%s3915 + $0xb0] sm:$0xf]
    %v3961 = vld [vmem:[%s3915 + $0xb4] sm:$0xf]
    %v3962 = vld [vmem:[%s3915 + $0xb8] sm:$0xf]
    %v3963 = vld [vmem:[%s3915 + $0xbc] sm:$0xf]
    %v3964 = vld [vmem:[%s3915 + $0xc0] sm:$0xf]
    %v3965 = vld [vmem:[%s3915 + $0xc4] sm:$0xf]
    %v3966 = vld [vmem:[%s3915 + $0xc8] sm:$0xf]
    %v3967 = vld [vmem:[%s3915 + $0xcc] sm:$0xf]
    %v3968 = vld [vmem:[%s3915 + $0xd0] sm:$0xf]
    %v3969 = vld [vmem:[%s3915 + $0xd4] sm:$0xf]
    %v3970 = vld [vmem:[%s3915 + $0xd8] sm:$0xf]
    %v3971 = vld [vmem:[%s3915 + $0xdc] sm:$0xf]
    %v3972 = vld [vmem:[%s3915 + $0xe0] sm:$0xf]
    %v3973 = vld [vmem:[%s3915 + $0xe4] sm:$0xf]
    %v3974 = vld [vmem:[%s3915 + $0xe8] sm:$0xf]
    %v3975 = vld [vmem:[%s3915 + $0xec] sm:$0xf]
    %v3976 = vld [vmem:[%s3915 + $0xf0] sm:$0xf]
    %v3977 = vld [vmem:[%s3915 + $0xf4] sm:$0xf]
    %v3978 = vld [vmem:[%s3915 + $0xf8] sm:$0xf]
    %v3979 = vld [vmem:[%s3915 + $0xfc] sm:$0xf]
    %v3980 = vpack.c.bf16 %v3903, %v3899
    %v3981 = vpack.c.bf16 %v3904, %v3900
    %v3982 = vpack.c.bf16 %v3905, %v3901
    %v3983 = vpack.c.bf16 %v3906, %v3902
    %v3984 = vpack.c.bf16 %v3911, %v3907
    %v3985 = vpack.c.bf16 %v3912, %v3908
    %v3986 = vpack.c.bf16 %v3913, %v3909
    %v3987 = vpack.c.bf16 %v3914, %v3910
    %v4052 = vunpack.c.l.b16 %v3916
    %v4053 = vunpack.c.l.b16 %v3917
    %v4054 = vunpack.c.l.b16 %v3918
    %v4055 = vunpack.c.l.b16 %v3919
    %v4056 = vunpack.c.l.b16 %v3920
    %v4057 = vunpack.c.l.b16 %v3921
    %v4058 = vunpack.c.l.b16 %v3922
    %v4059 = vunpack.c.l.b16 %v3923
    %v4060 = vunpack.c.l.b16 %v3924
    %v4061 = vunpack.c.l.b16 %v3925
    %v4062 = vunpack.c.l.b16 %v3926
    %v4063 = vunpack.c.l.b16 %v3927
    %v4064 = vunpack.c.l.b16 %v3928
    %v4065 = vunpack.c.l.b16 %v3929
    %v4066 = vunpack.c.l.b16 %v3930
    %v4067 = vunpack.c.l.b16 %v3931
    %v4068 = vunpack.c.l.b16 %v3932
    %v4069 = vunpack.c.l.b16 %v3933
    %v4070 = vunpack.c.l.b16 %v3934
    %v4071 = vunpack.c.l.b16 %v3935
    %v4072 = vunpack.c.l.b16 %v3936
    %v4073 = vunpack.c.l.b16 %v3937
    %v4074 = vunpack.c.l.b16 %v3938
    %v4075 = vunpack.c.l.b16 %v3939
    %v4076 = vunpack.c.l.b16 %v3940
    %v4077 = vunpack.c.l.b16 %v3941
    %v4078 = vunpack.c.l.b16 %v3942
    %v4079 = vunpack.c.l.b16 %v3943
    %v4080 = vunpack.c.l.b16 %v3944
    %v4081 = vunpack.c.l.b16 %v3945
    %v4082 = vunpack.c.l.b16 %v3946
    %v4083 = vunpack.c.l.b16 %v3947
    %v4084 = vunpack.c.l.b16 %v3948
    %v4085 = vunpack.c.l.b16 %v3949
    %v4086 = vunpack.c.l.b16 %v3950
    %v4087 = vunpack.c.l.b16 %v3951
    %v4088 = vunpack.c.l.b16 %v3952
    %v4089 = vunpack.c.l.b16 %v3953
    %v4090 = vunpack.c.l.b16 %v3954
    %v4091 = vunpack.c.l.b16 %v3955
    %v4092 = vunpack.c.l.b16 %v3956
    %v4093 = vunpack.c.l.b16 %v3957
    %v4094 = vunpack.c.l.b16 %v3958
    %v4095 = vunpack.c.l.b16 %v3959
    %v4096 = vunpack.c.l.b16 %v3960
    %v4097 = vunpack.c.l.b16 %v3961
    %v4098 = vunpack.c.l.b16 %v3962
    %v4099 = vunpack.c.l.b16 %v3963
    %v4100 = vunpack.c.l.b16 %v3964
    %v4101 = vunpack.c.l.b16 %v3965
    %v4102 = vunpack.c.l.b16 %v3966
    %v4103 = vunpack.c.l.b16 %v3967
    %v4104 = vunpack.c.l.b16 %v3968
    %v4105 = vunpack.c.l.b16 %v3969
    %v4106 = vunpack.c.l.b16 %v3970
    %v4107 = vunpack.c.l.b16 %v3971
    %v4108 = vunpack.c.l.b16 %v3972
    %v4109 = vunpack.c.l.b16 %v3973
    %v4110 = vunpack.c.l.b16 %v3974
    %v4111 = vunpack.c.l.b16 %v3975
    %v4112 = vunpack.c.l.b16 %v3976
    %v4113 = vunpack.c.l.b16 %v3977
    %v4114 = vunpack.c.l.b16 %v3978
    %v4115 = vunpack.c.l.b16 %v3979
    %v4116 = vpack.c.b16 %v4053, %v4052
    %v4117 = vpack.c.b16 %v4055, %v4054
    %v4118 = vpack.c.b16 %v4057, %v4056
    %v4119 = vpack.c.b16 %v4059, %v4058
    %v4120 = vpack.c.b16 %v4061, %v4060
    %v4121 = vpack.c.b16 %v4063, %v4062
    %v4122 = vpack.c.b16 %v4065, %v4064
    %v4123 = vpack.c.b16 %v4067, %v4066
    %v4124 = vpack.c.b16 %v4069, %v4068
    %v4125 = vpack.c.b16 %v4071, %v4070
    %v4126 = vpack.c.b16 %v4073, %v4072
    %v4127 = vpack.c.b16 %v4075, %v4074
    %v4128 = vpack.c.b16 %v4077, %v4076
    %v4129 = vpack.c.b16 %v4079, %v4078
    %v4130 = vpack.c.b16 %v4081, %v4080
    %v4131 = vpack.c.b16 %v4083, %v4082
    %v4132 = vpack.c.b16 %v4085, %v4084
    %v4133 = vpack.c.b16 %v4087, %v4086
    %v4134 = vpack.c.b16 %v4089, %v4088
    %v4135 = vpack.c.b16 %v4091, %v4090
    %v4136 = vpack.c.b16 %v4093, %v4092
    %v4137 = vpack.c.b16 %v4095, %v4094
    %v4138 = vpack.c.b16 %v4097, %v4096
    %v4139 = vpack.c.b16 %v4099, %v4098
    %v4140 = vpack.c.b16 %v4101, %v4100
    %v4141 = vpack.c.b16 %v4103, %v4102
    %v4142 = vpack.c.b16 %v4105, %v4104
    %v4143 = vpack.c.b16 %v4107, %v4106
    %v4144 = vpack.c.b16 %v4109, %v4108
    %v4145 = vpack.c.b16 %v4111, %v4110
    %v4146 = vpack.c.b16 %v4113, %v4112
    %v4147 = vpack.c.b16 %v4115, %v4114
    %4180 = vmatpush.bf16.msra.mxu0 %v4123
    %4181 = vmatpush.bf16.msra.mxu0 %v4122
    %4182 = vmatpush.bf16.msra.mxu0 %v4121
    %4183 = vmatpush.bf16.msra.mxu0 %v4120
    %4184 = vmatpush.bf16.msra.mxu0 %v4119
    %4185 = vmatpush.bf16.msra.mxu0 %v4118
    %4186 = vmatpush.bf16.msra.mxu0 %v4117
    %4187 = vmatpush.bf16.msra.mxu0 %v4116
    %4188 = vmatmul.bf16.gmra.mxu0 %v3980
    %v4189 = vpop.f32.mrf.mxu0
    %v4190 = vadd.f32 0.0, %v4189
    %v4191 = vpop.f32.mrf.mxu0
    %v4192 = vadd.f32 0.0, %v4191
    %4193 = vmatmul.bf16.gmra.mxu0 %v3984
    %v4194 = vpop.f32.mrf.mxu0
    %v4195 = vadd.f32 0.0, %v4194
    %v4196 = vpop.f32.mrf.mxu0
    %v4197 = vadd.f32 0.0, %v4196
    %4198 = vdwg.mxu0
    %4199 = vmatpush.bf16.msra.mxu0 %v4131
    %4200 = vmatpush.bf16.msra.mxu0 %v4130
    %4201 = vmatpush.bf16.msra.mxu0 %v4129
    %4202 = vmatpush.bf16.msra.mxu0 %v4128
    %4203 = vmatpush.bf16.msra.mxu0 %v4127
    %4204 = vmatpush.bf16.msra.mxu0 %v4126
    %4205 = vmatpush.bf16.msra.mxu0 %v4125
    %4206 = vmatpush.bf16.msra.mxu0 %v4124
    %4207 = vmatmul.bf16.gmra.mxu0 %v3981
    %v4208 = vpop.f32.mrf.mxu0
    %v4209 = vadd.f32 %v4190, %v4208
    %v4210 = vpop.f32.mrf.mxu0
    %v4211 = vadd.f32 %v4192, %v4210
    %4212 = vmatmul.bf16.gmra.mxu0 %v3985
    %v4213 = vpop.f32.mrf.mxu0
    %v4214 = vadd.f32 %v4195, %v4213
    %v4215 = vpop.f32.mrf.mxu0
    %v4216 = vadd.f32 %v4197, %v4215
    %4217 = vdwg.mxu0
    %4218 = vmatpush.bf16.msra.mxu0 %v4139
    %4219 = vmatpush.bf16.msra.mxu0 %v4138
    %4220 = vmatpush.bf16.msra.mxu0 %v4137
    %4221 = vmatpush.bf16.msra.mxu0 %v4136
    %4222 = vmatpush.bf16.msra.mxu0 %v4135
    %4223 = vmatpush.bf16.msra.mxu0 %v4134
    %4224 = vmatpush.bf16.msra.mxu0 %v4133
    %4225 = vmatpush.bf16.msra.mxu0 %v4132
    %4226 = vmatmul.bf16.gmra.mxu0 %v3982
    %v4227 = vpop.f32.mrf.mxu0
    %v4228 = vadd.f32 %v4209, %v4227
    %v4229 = vpop.f32.mrf.mxu0
    %v4230 = vadd.f32 %v4211, %v4229
    %4231 = vmatmul.bf16.gmra.mxu0 %v3986
    %v4232 = vpop.f32.mrf.mxu0
    %v4233 = vadd.f32 %v4214, %v4232
    %v4234 = vpop.f32.mrf.mxu0
    %v4235 = vadd.f32 %v4216, %v4234
    %4236 = vdwg.mxu0
    %4237 = vmatpush.bf16.msra.mxu0 %v4147
    %4238 = vmatpush.bf16.msra.mxu0 %v4146
    %4239 = vmatpush.bf16.msra.mxu0 %v4145
    %4240 = vmatpush.bf16.msra.mxu0 %v4144
    %4241 = vmatpush.bf16.msra.mxu0 %v4143
    %4242 = vmatpush.bf16.msra.mxu0 %v4142
    %4243 = vmatpush.bf16.msra.mxu0 %v4141
    %4244 = vmatpush.bf16.msra.mxu0 %v4140
    %4245 = vmatmul.bf16.gmra.mxu0 %v3983
    %v4246 = vpop.f32.mrf.mxu0
    %v4247 = vadd.f32 %v4228, %v4246
    %v4248 = vpop.f32.mrf.mxu0
    %v4249 = vadd.f32 %v4230, %v4248
    %4250 = vmatmul.bf16.gmra.mxu0 %v3987
    %v4251 = vpop.f32.mrf.mxu0
    %v4252 = vadd.f32 %v4233, %v4251
    %v4253 = vpop.f32.mrf.mxu0
    %v4254 = vadd.f32 %v4235, %v4253
    %4255 = vdwg.mxu0
    %v4256 = vadd.f32 %v3515, %v4247
    %v4257 = vadd.f32 %v3516, %v4249
    %v4258 = vadd.f32 %v3517, %v4252
    %v4259 = vadd.f32 %v3518, %v4254
    %s4260 = scalar_lea.vmem %s14, 2
    %v4261 = vld [vmem:[%s4260] sm:$0x1]
    %v4263 = vperm.slane %v4261, 0
    %v4265 = vadd.f32 %v4256, %v4263
    %v4266 = vadd.f32 %v4257, %v4263
    %v4267 = vadd.f32 %v4258, %v4263
    %v4268 = vadd.f32 %v4259, %v4263
    %v4269 = vld [vmem:[%s15] sm:$0x1]
    %v4270 = vld [vmem:[%s16] sm:$0x1]
    %4271 = vadd.xlane.f32.xlu0 %v4265
    %v4272 = vpop.xlane.xlu0 %4271
    %4273 = vadd.xlane.f32.xlu0 %v4266
    %v4274 = vpop.xlane.xlu0 %4273
    %4275 = vadd.xlane.f32.xlu0 %v4267
    %v4276 = vpop.xlane.xlu0 %4275
    %4277 = vadd.xlane.f32.xlu0 %v4268
    %v4278 = vpop.xlane.xlu0 %4277
    %v4279 = vmul.f32 %v4272, %v130
    %v4280 = vmul.f32 %v4274, %v130
    %v4281 = vmul.f32 %v4276, %v130
    %v4282 = vmul.f32 %v4278, %v130
    %v4283 = vsub.f32 %v4265, %v4279
    %v4284 = vsub.f32 %v4266, %v4280
    %v4285 = vsub.f32 %v4267, %v4281
    %v4286 = vsub.f32 %v4268, %v4282
    %v4287 = vmul.f32 %v4283, %v4283
    %v4288 = vmul.f32 %v4284, %v4284
    %v4289 = vmul.f32 %v4285, %v4285
    %v4290 = vmul.f32 %v4286, %v4286
    %4291 = vadd.xlane.f32.xlu0 %v4287
    %v4292 = vpop.xlane.xlu0 %4291
    %4293 = vadd.xlane.f32.xlu0 %v4288
    %v4294 = vpop.xlane.xlu0 %4293
    %4295 = vadd.xlane.f32.xlu0 %v4289
    %v4296 = vpop.xlane.xlu0 %4295
    %4297 = vadd.xlane.f32.xlu0 %v4290
    %v4298 = vpop.xlane.xlu0 %4297
    %v4299 = vmul.f32 %v4292, %v130
    %v4300 = vmul.f32 %v4294, %v130
    %v4301 = vmul.f32 %v4296, %v130
    %v4302 = vmul.f32 %v4298, %v130
    %v4303 = vadd.f32 %v4299, 1e-05
    %v4304 = vadd.f32 %v4300, 1e-05
    %v4305 = vadd.f32 %v4301, 1e-05
    %v4306 = vadd.f32 %v4302, 1e-05
    %v4307 = vrsqrt.pop %v4303
    %v4308 = vmul.f32 %v4307, %v4303
    %v4309 = vmul.f32 %v4308, %v4307
    %v4310 = vmul.f32 0.5, %v4309
    %v4311 = vsub.f32 1.5, %v4310
    %v4312 = vmul.f32 %v4307, %v4311
    %vm4313 = vweird.f32 %v4303
    %vm4314 = vweird.f32 %v4307
    %vm4315 = vmor %vm4313, %vm4314
    %v4316 = vsel %vm4315, %v4307, %v4312
    %v4317 = vrsqrt.pop %v4304
    %v4318 = vmul.f32 %v4317, %v4304
    %v4319 = vmul.f32 %v4318, %v4317
    %v4320 = vmul.f32 0.5, %v4319
    %v4321 = vsub.f32 1.5, %v4320
    %v4322 = vmul.f32 %v4317, %v4321
    %vm4323 = vweird.f32 %v4304
    %vm4324 = vweird.f32 %v4317
    %vm4325 = vmor %vm4323, %vm4324
    %v4326 = vsel %vm4325, %v4317, %v4322
    %v4327 = vrsqrt.pop %v4305
    %v4328 = vmul.f32 %v4327, %v4305
    %v4329 = vmul.f32 %v4328, %v4327
    %v4330 = vmul.f32 0.5, %v4329
    %v4331 = vsub.f32 1.5, %v4330
    %v4332 = vmul.f32 %v4327, %v4331
    %vm4333 = vweird.f32 %v4305
    %vm4334 = vweird.f32 %v4327
    %vm4335 = vmor %vm4333, %vm4334
    %v4336 = vsel %vm4335, %v4327, %v4332
    %v4337 = vrsqrt.pop %v4306
    %v4338 = vmul.f32 %v4337, %v4306
    %v4339 = vmul.f32 %v4338, %v4337
    %v4340 = vmul.f32 0.5, %v4339
    %v4341 = vsub.f32 1.5, %v4340
    %v4342 = vmul.f32 %v4337, %v4341
    %vm4343 = vweird.f32 %v4306
    %vm4344 = vweird.f32 %v4337
    %vm4345 = vmor %vm4343, %vm4344
    %v4346 = vsel %vm4345, %v4337, %v4342
    %v4347 = vmul.f32 %v4283, %v4316
    %v4348 = vmul.f32 %v4284, %v4326
    %v4349 = vmul.f32 %v4285, %v4336
    %v4350 = vmul.f32 %v4286, %v4346
    %v4352 = vperm.slane %v4269, 0
    %v4354 = vmul.f32 %v4347, %v4352
    %v4355 = vmul.f32 %v4348, %v4352
    %v4356 = vmul.f32 %v4349, %v4352
    %v4357 = vmul.f32 %v4350, %v4352
    %v4359 = vperm.slane %v4270, 0
    %v4361 = vadd.f32 %v4354, %v4359
    %v4362 = vadd.f32 %v4355, %v4359
    %v4363 = vadd.f32 %v4356, %v4359
    %v4364 = vadd.f32 %v4357, %v4359
    %v4365 = vld [vmem:[%s17] sm:$0xf]
    %v4366 = vld [vmem:[%s17 + $0x4] sm:$0xf]
    %v4367 = vld [vmem:[%s17 + $0x8] sm:$0xf]
    %v4368 = vld [vmem:[%s17 + $0xc] sm:$0xf]
    %v4369 = vld [vmem:[%s17 + $0x10] sm:$0xf]
    %v4370 = vld [vmem:[%s17 + $0x14] sm:$0xf]
    %v4371 = vld [vmem:[%s17 + $0x18] sm:$0xf]
    %v4372 = vld [vmem:[%s17 + $0x1c] sm:$0xf]
    %v4373 = vld [vmem:[%s17 + $0x20] sm:$0xf]
    %v4374 = vld [vmem:[%s17 + $0x24] sm:$0xf]
    %v4375 = vld [vmem:[%s17 + $0x28] sm:$0xf]
    %v4376 = vld [vmem:[%s17 + $0x2c] sm:$0xf]
    %v4377 = vld [vmem:[%s17 + $0x30] sm:$0xf]
    %v4378 = vld [vmem:[%s17 + $0x34] sm:$0xf]
    %v4379 = vld [vmem:[%s17 + $0x38] sm:$0xf]
    %v4380 = vld [vmem:[%s17 + $0x3c] sm:$0xf]
    %v4381 = vpack.c.bf16 %v4362, %v4361
    %v4382 = vpack.c.bf16 %v4364, %v4363
    %v4383 = vld [vmem:[%s18] sm:$0x1]
    %v4385 = vperm.slane %v4383, 0
    %v4403 = vunpack.c.l.b16 %v4365
    %v4404 = vunpack.c.l.b16 %v4366
    %v4405 = vunpack.c.l.b16 %v4367
    %v4406 = vunpack.c.l.b16 %v4368
    %v4407 = vunpack.c.l.b16 %v4369
    %v4408 = vunpack.c.l.b16 %v4370
    %v4409 = vunpack.c.l.b16 %v4371
    %v4410 = vunpack.c.l.b16 %v4372
    %v4411 = vunpack.c.l.b16 %v4373
    %v4412 = vunpack.c.l.b16 %v4374
    %v4413 = vunpack.c.l.b16 %v4375
    %v4414 = vunpack.c.l.b16 %v4376
    %v4415 = vunpack.c.l.b16 %v4377
    %v4416 = vunpack.c.l.b16 %v4378
    %v4417 = vunpack.c.l.b16 %v4379
    %v4418 = vunpack.c.l.b16 %v4380
    %v4419 = vpack.c.b16 %v4404, %v4403
    %v4420 = vpack.c.b16 %v4406, %v4405
    %v4421 = vpack.c.b16 %v4408, %v4407
    %v4422 = vpack.c.b16 %v4410, %v4409
    %v4423 = vpack.c.b16 %v4412, %v4411
    %v4424 = vpack.c.b16 %v4414, %v4413
    %v4425 = vpack.c.b16 %v4416, %v4415
    %v4426 = vpack.c.b16 %v4418, %v4417
    %4435 = vmatpush.bf16.msra.mxu0 %v4426
    %4436 = vmatpush.bf16.msra.mxu0 %v4425
    %4437 = vmatpush.bf16.msra.mxu0 %v4424
    %4438 = vmatpush.bf16.msra.mxu0 %v4423
    %4439 = vmatpush.bf16.msra.mxu0 %v4422
    %4440 = vmatpush.bf16.msra.mxu0 %v4421
    %4441 = vmatpush.bf16.msra.mxu0 %v4420
    %4442 = vmatpush.bf16.msra.mxu0 %v4419
    %4443 = vmatmul.bf16.gmra.mxu0 %v4381
    %v4444 = vpop.f32.mrf.mxu0
    %v4445 = vadd.f32 %v4385, %v4444
    %v4446 = vpop.f32.mrf.mxu0
    %v4447 = vadd.f32 %v4385, %v4446
    %4448 = vmatmul.bf16.gmra.mxu0 %v4382
    %v4449 = vpop.f32.mrf.mxu0
    %v4450 = vadd.f32 %v4385, %v4449
    %v4451 = vpop.f32.mrf.mxu0
    %v4452 = vadd.f32 %v4385, %v4451
    %4453 = vdwg.mxu0
    %vm4454 = vcmp.eq.s32.totalorder %v221, 0
    %v4455 = vtanh.pop %v4445
    %v4456 = vtanh.pop %v4447
    %v4457 = vtanh.pop %v4450
    %v4458 = vtanh.pop %v4452
    %vm4459 = vcmp.eq.s32.totalorder %v221, 1
    %v4460 = vsub.f32 0.0, %v4445
    %v4461 = vsub.f32 0.0, %v4447
    %v4462 = vsub.f32 0.0, %v4450
    %v4463 = vsub.f32 0.0, %v4452
    %v4464 = vmul.f32 %v4460, 1.442695
    %v4465 = vpow.pop %v4464
    %v4466 = vmul.f32 %v4461, 1.442695
    %v4467 = vpow.pop %v4466
    %v4468 = vmul.f32 %v4462, 1.442695
    %v4469 = vpow.pop %v4468
    %v4470 = vmul.f32 %v4463, 1.442695
    %v4471 = vpow.pop %v4470
    %v4472 = vadd.f32 %v4465, 1.0
    %v4473 = vadd.f32 %v4467, 1.0
    %v4474 = vadd.f32 %v4469, 1.0
    %v4475 = vadd.f32 %v4471, 1.0
    %v4476 = vrcp.pop %v4472
    %v4477 = vmul.f32 %v4472, %v4476
    %v4478 = vsub.f32 1.0, %v4477
    %v4479 = vmul.f32 %v4476, %v4478
    %v4480 = vadd.f32 %v4476, %v4479
    %vm4481 = vweird.f32 %v4472
    %vm4482 = vweird.f32 %v4476
    %vm4483 = vmor %vm4481, %vm4482
    %v4484 = vsel %vm4483, %v4476, %v4480
    %v4485 = vand.u32 2147483647, %v4472
    %vm4486 = vcmp.eq.f32.partialorder %v4485, 8.507059e+37
    %v4487 = vand.u32 %v4472, 2147483648
    %v4488 = vor.u32 1.1754944e-38, %v4487
    %v4489 = vsel %vm4486, %v4488, %v4484
    %v4490 = vmul.f32 1.0, %v4489
    %v4491 = vrcp.pop %v4473
    %v4492 = vmul.f32 %v4473, %v4491
    %v4493 = vsub.f32 1.0, %v4492
    %v4494 = vmul.f32 %v4491, %v4493
    %v4495 = vadd.f32 %v4491, %v4494
    %vm4496 = vweird.f32 %v4473
    %vm4497 = vweird.f32 %v4491
    %vm4498 = vmor %vm4496, %vm4497
    %v4499 = vsel %vm4498, %v4491, %v4495
    %v4500 = vand.u32 2147483647, %v4473
    %vm4501 = vcmp.eq.f32.partialorder %v4500, 8.507059e+37
    %v4502 = vand.u32 %v4473, 2147483648
    %v4503 = vor.u32 1.1754944e-38, %v4502
    %v4504 = vsel %vm4501, %v4503, %v4499
    %v4505 = vmul.f32 1.0, %v4504
    %v4506 = vrcp.pop %v4474
    %v4507 = vmul.f32 %v4474, %v4506
    %v4508 = vsub.f32 1.0, %v4507
    %v4509 = vmul.f32 %v4506, %v4508
    %v4510 = vadd.f32 %v4506, %v4509
    %vm4511 = vweird.f32 %v4474
    %vm4512 = vweird.f32 %v4506
    %vm4513 = vmor %vm4511, %vm4512
    %v4514 = vsel %vm4513, %v4506, %v4510
    %v4515 = vand.u32 2147483647, %v4474
    %vm4516 = vcmp.eq.f32.partialorder %v4515, 8.507059e+37
    %v4517 = vand.u32 %v4474, 2147483648
    %v4518 = vor.u32 1.1754944e-38, %v4517
    %v4519 = vsel %vm4516, %v4518, %v4514
    %v4520 = vmul.f32 1.0, %v4519
    %v4521 = vrcp.pop %v4475
    %v4522 = vmul.f32 %v4475, %v4521
    %v4523 = vsub.f32 1.0, %v4522
    %v4524 = vmul.f32 %v4521, %v4523
    %v4525 = vadd.f32 %v4521, %v4524
    %vm4526 = vweird.f32 %v4475
    %vm4527 = vweird.f32 %v4521
    %vm4528 = vmor %vm4526, %vm4527
    %v4529 = vsel %vm4528, %v4521, %v4525
    %v4530 = vand.u32 2147483647, %v4475
    %vm4531 = vcmp.eq.f32.partialorder %v4530, 8.507059e+37
    %v4532 = vand.u32 %v4475, 2147483648
    %v4533 = vor.u32 1.1754944e-38, %v4532
    %v4534 = vsel %vm4531, %v4533, %v4529
    %v4535 = vmul.f32 1.0, %v4534
    %v4536 = vsel %vm4459, %v4490, %v4445
    %v4537 = vsel %vm4459, %v4505, %v4447
    %v4538 = vsel %vm4459, %v4520, %v4450
    %v4539 = vsel %vm4459, %v4535, %v4452
    %v4540 = vsel %vm4454, %v4455, %v4536
    %v4541 = vsel %vm4454, %v4456, %v4537
    %v4542 = vsel %vm4454, %v4457, %v4538
    %v4543 = vsel %vm4454, %v4458, %v4539
    %4544 = vst [vmem:[%s19] sm:$0xff] %v4540
    %4545 = vst [vmem:[%s19 + $0x8] sm:$0xff] %v4541
    %4546 = vst [vmem:[%s19 + $0x10] sm:$0xff] %v4542
    %4547 = vst [vmem:[%s19 + $0x18] sm:$0xff] %v4543
    // Predicated region
    $region90: #{agent_transformer_forward.3} parent=1 // pred_check
      _
    $region91: #{agent_transformer_forward.3} parent=1 // pred_check_branch
      %4549 = sbr.rel (0) target = $region93
    $region92: #{agent_transformer_forward.3} parent=1 // pred_region
      _
    $region93: #{agent_transformer_forward.3} parent=1 // pred_fallthru
      _
    // Predicated region
    $region94: #{agent_transformer_forward.3} parent=1 // pred_check
      _
    $region95: #{agent_transformer_forward.3} parent=1 // pred_check_branch
      %4551 = sbr.rel (0) target = $region97
    $region96: #{agent_transformer_forward.3} parent=1 // pred_region
      _
    $region97: #{agent_transformer_forward.3} parent=1 // pred_fallthru
      _
    %4552 = vsyncpa [#allocation3], 1
    %4553 = vsyncpa [#allocation5], 1

</llo_original>
